<compile_context>
chip_gen: v7x
topology: tpu7x:2x2x1
jax: 0.10.0
libtpu: 0.0.40
codegen_flags: <defaults>
</compile_context>

<pallas_src>
import jax
import jax.numpy as jnp
from jax.experimental import pallas as pl
from jax.experimental.pallas import tpu as pltpu


# --------------------------------------------------------------------------- #
# Kernels
# --------------------------------------------------------------------------- #
def _pw_conv_cl_kernel(x_ref, w_ref, b_ref, o_ref):
    """1x1 conv as a channels-last matmul: (HW_t, Cin) @ (Cin, Cout) + bias."""
    x = x_ref[0].astype(jnp.float32)                        # (HW_t, Cin)
    w = w_ref[...].astype(jnp.float32)                      # (Cin, Cout)
    y = jnp.dot(x, w, preferred_element_type=jnp.float32)   # (HW_t, Cout)
    y = y + b_ref[...].astype(jnp.float32)                  # (1, Cout) broadcast
    o_ref[0] = y.astype(o_ref.dtype)


def _dwconv3x3_cl_kernel(xp_ref, w_ref, b_ref, o_ref):
    """Depthwise 3x3 conv, channels-last; zero-padded input supplied by wrapper.

    xp_ref: (1, H+2, W+2, C3), w_ref: (9, C3) tap-major, b_ref: (1, C3),
    o_ref: (1, H, W, C3).
    """
    Hn = o_ref.shape[1]
    Wn = o_ref.shape[2]
    acc = jnp.zeros(o_ref.shape[1:], dtype=jnp.float32)      # (H, W, C3)
    for dy in range(3):
        for dx in range(3):
            t = dy * 3 + dx
            tile = xp_ref[0, dy:dy + Hn, dx:dx + Wn, :].astype(jnp.float32)
            acc = acc + tile * w_ref[t].astype(jnp.float32)   # lane-broadcast
    acc = acc + b_ref[0].astype(jnp.float32)
    o_ref[0] = acc.astype(o_ref.dtype)


def _mdta_attention_kernel(temp_ref, q_ref, k_ref, v_ref, o_ref):
    """Transposed (channel) attention for one (batch, head) grid point.

    temp_ref: (num_heads,) f32 in SMEM; q/k/v/o: (1, 1, c_head, HW) in VMEM.
    """
    head = pl.program_id(1)
    q = q_ref[0, 0].astype(jnp.float32)                      # (c_head, HW)
    k = k_ref[0, 0].astype(jnp.float32)
    v = v_ref[0, 0].astype(jnp.float32)

    # L2 normalize along HW (matches F.normalize: x / max(||x||, 1e-12)).
    qn = q / jnp.maximum(jnp.sqrt(jnp.sum(q * q, axis=-1, keepdims=True)), 1e-12)
    kn = k / jnp.maximum(jnp.sqrt(jnp.sum(k * k, axis=-1, keepdims=True)), 1e-12)

    # attn = (qn @ kn^T) * temperature[head]   -> (c_head, c_head)
    attn = jax.lax.dot_general(qn, kn, (((1,), (1,)), ((), ())),
                               preferred_element_type=jnp.float32)
    attn = attn * temp_ref[head]

    # Softmax along the last (channel) dim.
    attn = attn - jnp.max(attn, axis=-1, keepdims=True)
    attn = jnp.exp(attn)
    attn = attn / jnp.sum(attn, axis=-1, keepdims=True)

    out = jnp.dot(attn, v, preferred_element_type=jnp.float32)   # (c_head, HW)
    o_ref[0, 0] = out.astype(o_ref.dtype)


def _pw_conv_nchw_kernel(x_ref, w_ref, b_ref, o_ref):
    """1x1 conv in NCHW: (Cout, Cin) @ (Cin, HW_t) + bias; HW lane-dense."""
    x = x_ref[0].astype(jnp.float32)                        # (Cin, HW_t)
    w = w_ref[...].astype(jnp.float32)                      # (Cout, Cin)
    y = jnp.dot(w, x, preferred_element_type=jnp.float32)   # (Cout, HW_t)
    y = y + b_ref[...].astype(jnp.float32)                  # (Cout, 1) broadcast
    o_ref[0] = y.astype(o_ref.dtype)


# --------------------------------------------------------------------------- #
# Wrapper
# --------------------------------------------------------------------------- #
def _choose_tile(n, multiple, cap):
    """Largest t <= cap with t % multiple == 0 and n % t == 0, else full n."""
    if n <= cap:
        return n
    t = (cap // multiple) * multiple
    while t >= multiple:
        if n % t == 0:
            return t
        t -= multiple
    return n


def mdta_attention(x, qkv_w, qkv_b, dw_w, dw_b, proj_w, proj_b, temperature,
                   *, num_heads):
    """x: (B, C, H, W). Weights in PyTorch Conv2d layout:
    qkv_w (3C, C, 1, 1), dw_w (3C, 1, 3, 3), proj_w (C, C, 1, 1);
    biases (3C,), (3C,), (C,) or None; temperature (num_heads, 1, 1)."""
    B, C, H, W = x.shape
    HW = H * W
    C3 = 3 * C
    assert C % num_heads == 0, "dim must be divisible by num_heads"
    c_head = C // num_heads
    dtype = x.dtype

    bqkv = (jnp.zeros((C3,), dtype) if qkv_b is None else qkv_b).astype(dtype)
    bdw = (jnp.zeros((C3,), dtype) if dw_b is None else dw_b).astype(dtype)
    bp = (jnp.zeros((C,), dtype) if proj_b is None else proj_b).astype(dtype)

    # ---- 1) qkv 1x1 conv: channels-last matmul ------------------------------
    x_cl = jnp.transpose(x, (0, 2, 3, 1)).reshape(B, HW, C)
    wqkv_t = jnp.transpose(qkv_w.reshape(C3, C), (1, 0)).astype(dtype)   # (C, 3C)

    hw_t1 = _choose_tile(HW, 8, 4096)
    qkv_cl = pl.pallas_call(
        _pw_conv_cl_kernel,
        out_shape=jax.ShapeDtypeStruct((B, HW, C3), dtype),
        grid_spec=pltpu.PrefetchScalarGridSpec(
            num_scalar_prefetch=0,
            grid=(B, HW // hw_t1),
            in_specs=[
                pl.BlockSpec((1, hw_t1, C), lambda b, t: (b, t, 0)),
                pl.BlockSpec((C, C3), lambda b, t: (0, 0)),
                pl.BlockSpec((1, C3), lambda b, t: (0, 0)),
            ],
            out_specs=pl.BlockSpec((1, hw_t1, C3), lambda b, t: (b, t, 0)),
        ),
        compiler_params=pltpu.CompilerParams(
            dimension_semantics=("parallel", "parallel")),
    )(x_cl, wqkv_t, bqkv.reshape(1, C3))

    # ---- 2) depthwise 3x3 conv (channels-last, zero padding) ----------------
    qkv_pad = jnp.pad(qkv_cl.reshape(B, H, W, C3),
                      ((0, 0), (1, 1), (1, 1), (0, 0)))
    wdw9 = jnp.transpose(dw_w.reshape(C3, 3, 3), (1, 2, 0)).reshape(9, C3)
    wdw9 = wdw9.astype(dtype)

    qkv_dw = pl.pallas_call(
        _dwconv3x3_cl_kernel,
        out_shape=jax.ShapeDtypeStruct((B, H, W, C3), dtype),
        grid_spec=pltpu.PrefetchScalarGridSpec(
            num_scalar_prefetch=0,
            grid=(B,),
            in_specs=[
                pl.BlockSpec((1, H + 2, W + 2, C3), lambda b: (b, 0, 0, 0)),
                pl.BlockSpec((9, C3), lambda b: (0, 0)),
                pl.BlockSpec((1, C3), lambda b: (0, 0)),
            ],
            out_specs=pl.BlockSpec((1, H, W, C3), lambda b: (b, 0, 0, 0)),
        ),
        compiler_params=pltpu.CompilerParams(
            dimension_semantics=("parallel",)),
    )(qkv_pad, wdw9, bdw.reshape(1, C3))

    # ---- 3) transposed attention over channels ------------------------------
    qkv_nc = jnp.transpose(qkv_dw.reshape(B, HW, C3), (0, 2, 1))   # (B, 3C, HW)
    q, k, v = jnp.split(qkv_nc, 3, axis=1)
    q = q.reshape(B, num_heads, c_head, HW)
    k = k.reshape(B, num_heads, c_head, HW)
    v = v.reshape(B, num_heads, c_head, HW)
    temp = temperature.reshape(num_heads).astype(jnp.float32)

    qkv_spec = pl.BlockSpec((1, 1, c_head, HW), lambda b, h: (b, h, 0, 0))
    attn_out = pl.pallas_call(
        _mdta_attention_kernel,
        out_shape=jax.ShapeDtypeStruct((B, num_heads, c_head, HW), dtype),
        grid_spec=pltpu.PrefetchScalarGridSpec(
            num_scalar_prefetch=0,
            grid=(B, num_heads),
            in_specs=[
                pl.BlockSpec(memory_space=pltpu.MemorySpace.SMEM),   # temperature
                qkv_spec, qkv_spec, qkv_spec,
            ],
            out_specs=pl.BlockSpec((1, 1, c_head, HW), lambda b, h: (b, h, 0, 0)),
        ),
        compiler_params=pltpu.CompilerParams(
            dimension_semantics=("parallel", "parallel")),
    )(temp, q, k, v)

    # ---- 4) project_out 1x1 conv: NCHW matmul, output stays NCHW ------------
    attn_flat = attn_out.reshape(B, C, HW)
    wp = proj_w.reshape(C, C).astype(dtype)

    hw_t2 = _choose_tile(HW, 128, 4096)
    out_flat = pl.pallas_call(
        _pw_conv_nchw_kernel,
        out_shape=jax.ShapeDtypeStruct((B, C, HW), dtype),
        grid_spec=pltpu.PrefetchScalarGridSpec(
            num_scalar_prefetch=0,
            grid=(B, HW // hw_t2),
            in_specs=[
                pl.BlockSpec((1, C, hw_t2), lambda b, t: (b, 0, t)),
                pl.BlockSpec((C, C), lambda b, t: (0, 0)),
                pl.BlockSpec((C, 1), lambda b, t: (0, 0)),
            ],
            out_specs=pl.BlockSpec((1, C, hw_t2), lambda b, t: (b, 0, t)),
        ),
        compiler_params=pltpu.CompilerParams(
            dimension_semantics=("parallel", "parallel")),
    )(attn_flat, wp, bp.reshape(C, 1))

    return out_flat.reshape(B, C, H, W)


# --------------------------------------------------------------------------- #
# Pure-JAX reference (mirrors the PyTorch module)
# --------------------------------------------------------------------------- #
def _reference(x, qkv_w, qkv_b, dw_w, dw_b, proj_w, proj_b, temperature,
               num_heads):
    PREC = jax.lax.Precision.HIGHEST
    B, C, H, W = x.shape
    C3 = 3 * C
    qkv = jnp.einsum('oc,bchw->bohw', qkv_w.reshape(C3, C), x, precision=PREC)
    qkv = qkv + qkv_b[None, :, None, None]
    qkv_pad = jnp.pad(qkv, ((0, 0), (0, 0), (1, 1), (1, 1)))
    w3 = dw_w.reshape(C3, 3, 3)
    dw = jnp.zeros_like(qkv)
    for dy in range(3):
        for dx in range(3):
            dw = dw + (qkv_pad[:, :, dy:dy + H, dx:dx + W]
                       * w3[None, :, dy, dx, None, None])
    dw = dw + dw_b[None, :, None, None]
    q, k, v = jnp.split(dw, 3, axis=1)
    ch = C // num_heads
    q = q.reshape(B, num_heads, ch, H * W)
    k = k.reshape(B, num_heads, ch, H * W)
    v = v.reshape(B, num_heads, ch, H * W)
    qn = q / jnp.maximum(jnp.linalg.norm(q, axis=-1, keepdims=True), 1e-12)
    kn = k / jnp.maximum(jnp.linalg.norm(k, axis=-1, keepdims=True), 1e-12)
    attn = jnp.einsum('bhcn,bhdn->bhcd', qn, kn, precision=PREC)
    attn = attn * temperature.reshape(num_heads)[None, :, None, None]
    attn = jax.nn.softmax(attn, axis=-1)
    out = jnp.einsum('bhcd,bhdn->bhcn', attn, v, precision=PREC)
    out = out.reshape(B, C, H, W)
    out = jnp.einsum('oc,bchw->bohw', proj_w.reshape(C, C), out, precision=PREC)
    return out + proj_b[None, :, None, None]


if __name__ == "__main__":
    key = jax.random.PRNGKey(0)
    B, C, H, W = 2, 4, 16, 16
    num_heads = 2

    ks = jax.random.split(key, 8)
    x = jax.random.normal(ks[0], (B, C, H, W), dtype=jnp.float32)
    qkv_w = jax.random.normal(ks[1], (3 * C, C, 1, 1), dtype=jnp.float32) * 0.3
    qkv_b = jax.random.normal(ks[2], (3 * C,), dtype=jnp.float32) * 0.1
    dw_w = jax.random.normal(ks[3], (3 * C, 1, 3, 3), dtype=jnp.float32) * 0.3
    dw_b = jax.random.normal(ks[4], (3 * C,), dtype=jnp.float32) * 0.1
    proj_w = jax.random.normal(ks[5], (C, C, 1, 1), dtype=jnp.float32) * 0.3
    proj_b = jax.random.normal(ks[6], (C,), dtype=jnp.float32) * 0.1
    # nn.Parameter(torch.ones(num_heads, 1, 1)); perturbed so the multiply is
    # actually exercised in the numerics check.
    temperature = 1.0 + 0.1 * jax.random.normal(ks[7], (num_heads, 1, 1),
                                                dtype=jnp.float32)

    fwd = jax.jit(mdta_attention, static_argnames=("num_heads",))
    out = fwd(x, qkv_w, qkv_b, dw_w, dw_b, proj_w, proj_b, temperature,
              num_heads=num_heads)
    out = jax.block_until_ready(out)

    ref = _reference(x, qkv_w, qkv_b, dw_w, dw_b, proj_w, proj_b, temperature,
                     num_heads)
    assert out.shape == (B, C, H, W)
    # MXU f32 matmuls may use reduced-precision passes vs the HIGHEST-precision
    # reference; tolerance sized accordingly (structural bugs would be O(0.1+)).
    assert jnp.allclose(out, ref, atol=1e-2, rtol=1e-2), (
        f"mismatch vs reference: max abs err = {jnp.max(jnp.abs(out - ref))}")
    print("KERNEL_OK")
</pallas_src>

<mosaic_0001>
module attributes {stable_mosaic.version = 11 : i64} {
  func.func @_pw_conv_cl_kernel(%arg0: i32, %arg1: i32, %arg2: memref<1x256x4xf32, #tpu.memory_space<vmem>>, %arg3: memref<4x12xf32, #tpu.memory_space<vmem>>, %arg4: memref<1x12xf32, #tpu.memory_space<vmem>>, %arg5: memref<1x256x12xf32, #tpu.memory_space<vmem>>) attributes {dimension_semantics = [#tpu.dimension_semantics<parallel>, #tpu.dimension_semantics<parallel>], iteration_bounds = array<i64: 2, 1>, scalar_prefetch = 0 : i64, scratch_operands = 0 : i64, tpu.core_type = #tpu.core_type<tc>, window_params = [{transform_indices = @transform_0, window_bounds = array<i64: 1, 256, 4>}, {pipeline_mode = #tpu.pipeline_mode<synchronous>, transform_indices = @transform_1, window_bounds = array<i64: 4, 12>}, {pipeline_mode = #tpu.pipeline_mode<synchronous>, transform_indices = @transform_2, window_bounds = array<i64: 1, 12>}, {transform_indices = @transform_3, window_bounds = array<i64: 1, 256, 12>}]} {
    %c0 = arith.constant 0 : index
    %c0_0 = arith.constant 0 : index
    %c0_1 = arith.constant 0 : index
    %0 = vector.load %arg2[%c0, %c0_0, %c0_1] : memref<1x256x4xf32, #tpu.memory_space<vmem>>, vector<1x256x4xf32>
    %1 = vector.shape_cast %0 : vector<1x256x4xf32> to vector<256x4xf32>
    %c0_2 = arith.constant 0 : index
    %c0_3 = arith.constant 0 : index
    %2 = vector.load %arg3[%c0_2, %c0_3] : memref<4x12xf32, #tpu.memory_space<vmem>>, vector<4x12xf32>
    %cst = arith.constant dense<0.000000e+00> : vector<256x12xf32>
    %3 = tpu.matmul %1, %2, %cst {dimension_numbers = #tpu.dot_dimension_numbers<[1], [0], [0], [1], [0, 0, 1, 1], [], []>} : vector<256x4xf32>, vector<4x12xf32>, vector<256x12xf32> -> vector<256x12xf32>
    %c0_4 = arith.constant 0 : index
    %c0_5 = arith.constant 0 : index
    %4 = vector.load %arg4[%c0_4, %c0_5] : memref<1x12xf32, #tpu.memory_space<vmem>>, vector<1x12xf32>
    %5 = vector.broadcast %4 : vector<1x12xf32> to vector<256x12xf32>
    %6 = arith.addf %3, %5 : vector<256x12xf32>
    %c0_6 = arith.constant 0 : index
    %c0_7 = arith.constant 0 : index
    %c0_8 = arith.constant 0 : index
    %7 = vector.load %arg5[%c0_6, %c0_7, %c0_8] : memref<1x256x12xf32, #tpu.memory_space<vmem>>, vector<1x256x12xf32>
    %8 = vector.shape_cast %7 : vector<1x256x12xf32> to vector<256x12xf32>
    %9 = vector.shape_cast %6 : vector<256x12xf32> to vector<1x256x12xf32>
    tpu.vector_store %arg5[%c0_6, %c0_7, %c0_8], %9 {strides = array<i32>} : memref<1x256x12xf32, #tpu.memory_space<vmem>>, vector<1x256x12xf32>,
    return
  }
  func.func @transform_0(%arg0: i32, %arg1: i32) -> (i32, i32, i32) {
    %c0_i32 = arith.constant 0 : i32
    %c0_i32_0 = arith.constant 0 : i32
    return %arg0, %arg1, %c0_i32 : i32, i32, i32
  }
  func.func @transform_1(%arg0: i32, %arg1: i32) -> (i32, i32) {
    %c0_i32 = arith.constant 0 : i32
    %c0_i32_0 = arith.constant 0 : i32
    %c0_i32_1 = arith.constant 0 : i32
    return %c0_i32, %c0_i32_0 : i32, i32
  }
  func.func @transform_2(%arg0: i32, %arg1: i32) -> (i32, i32) {
    %c0_i32 = arith.constant 0 : i32
    %c0_i32_0 = arith.constant 0 : i32
    %c0_i32_1 = arith.constant 0 : i32
    return %c0_i32, %c0_i32_0 : i32, i32
  }
  func.func @transform_3(%arg0: i32, %arg1: i32) -> (i32, i32, i32) {
    %c0_i32 = arith.constant 0 : i32
    %c0_i32_0 = arith.constant 0 : i32
    return %arg0, %arg1, %c0_i32 : i32, i32, i32
  }
}

module attributes {stable_mosaic.version = 11 : i64} {
  func.func @_dwconv3x3_cl_kernel(%arg0: i32, %arg1: memref<1x18x18x12xf32, #tpu.memory_space<vmem>>, %arg2: memref<9x12xf32, #tpu.memory_space<vmem>>, %arg3: memref<1x12xf32, #tpu.memory_space<vmem>>, %arg4: memref<1x16x16x12xf32, #tpu.memory_space<vmem>>) attributes {dimension_semantics = [#tpu.dimension_semantics<parallel>], iteration_bounds = array<i64: 2>, scalar_prefetch = 0 : i64, scratch_operands = 0 : i64, tpu.core_type = #tpu.core_type<tc>, window_params = [{transform_indices = @transform_0, window_bounds = array<i64: 1, 18, 18, 12>}, {pipeline_mode = #tpu.pipeline_mode<synchronous>, transform_indices = @transform_1, window_bounds = array<i64: 9, 12>}, {pipeline_mode = #tpu.pipeline_mode<synchronous>, transform_indices = @transform_2, window_bounds = array<i64: 1, 12>}, {transform_indices = @transform_3, window_bounds = array<i64: 1, 16, 16, 12>}]} {
    %cst = arith.constant 0.000000e+00 : f32
    %0 = vector.broadcast %cst : f32 to vector<16x16x12xf32>
    %c0 = arith.constant 0 : index
    %c0_0 = arith.constant 0 : index
    %c0_1 = arith.constant 0 : index
    %c0_2 = arith.constant 0 : index
    %1 = vector.load %arg1[%c0, %c0_0, %c0_1, %c0_2] : memref<1x18x18x12xf32, #tpu.memory_space<vmem>>, vector<1x16x16x12xf32>
    %2 = vector.shape_cast %1 : vector<1x16x16x12xf32> to vector<16x16x12xf32>
    %c0_3 = arith.constant 0 : index
    %c0_4 = arith.constant 0 : index
    %3 = vector.load %arg2[%c0_3, %c0_4] : memref<9x12xf32, #tpu.memory_space<vmem>>, vector<1x12xf32>
    %4 = vector.shape_cast %3 : vector<1x12xf32> to vector<12xf32>
    %5 = vector.shape_cast %4 : vector<12xf32> to vector<1x1x12xf32>
    %6 = vector.broadcast %5 : vector<1x1x12xf32> to vector<16x16x12xf32>
    %7 = arith.mulf %2, %6 : vector<16x16x12xf32>
    %8 = arith.addf %0, %7 : vector<16x16x12xf32>
    %c0_5 = arith.constant 0 : index
    %c0_6 = arith.constant 0 : index
    %c1 = arith.constant 1 : index
    %c0_7 = arith.constant 0 : index
    %9 = vector.load %arg1[%c0_5, %c0_6, %c1, %c0_7] : memref<1x18x18x12xf32, #tpu.memory_space<vmem>>, vector<1x16x16x12xf32>
    %10 = vector.shape_cast %9 : vector<1x16x16x12xf32> to vector<16x16x12xf32>
    %c1_8 = arith.constant 1 : index
    %c0_9 = arith.constant 0 : index
    %11 = vector.load %arg2[%c1_8, %c0_9] : memref<9x12xf32, #tpu.memory_space<vmem>>, vector<1x12xf32>
    %12 = vector.shape_cast %11 : vector<1x12xf32> to vector<12xf32>
    %13 = vector.shape_cast %12 : vector<12xf32> to vector<1x1x12xf32>
    %14 = vector.broadcast %13 : vector<1x1x12xf32> to vector<16x16x12xf32>
    %15 = arith.mulf %10, %14 : vector<16x16x12xf32>
    %16 = arith.addf %8, %15 : vector<16x16x12xf32>
    %c0_10 = arith.constant 0 : index
    %c0_11 = arith.constant 0 : index
    %c2 = arith.constant 2 : index
    %c0_12 = arith.constant 0 : index
    %17 = vector.load %arg1[%c0_10, %c0_11, %c2, %c0_12] : memref<1x18x18x12xf32, #tpu.memory_space<vmem>>, vector<1x16x16x12xf32>
    %18 = vector.shape_cast %17 : vector<1x16x16x12xf32> to vector<16x16x12xf32>
    %c2_13 = arith.constant 2 : index
    %c0_14 = arith.constant 0 : index
    %19 = vector.load %arg2[%c2_13, %c0_14] : memref<9x12xf32, #tpu.memory_space<vmem>>, vector<1x12xf32>
    %20 = vector.shape_cast %19 : vector<1x12xf32> to vector<12xf32>
    %21 = vector.shape_cast %20 : vector<12xf32> to vector<1x1x12xf32>
    %22 = vector.broadcast %21 : vector<1x1x12xf32> to vector<16x16x12xf32>
    %23 = arith.mulf %18, %22 : vector<16x16x12xf32>
    %24 = arith.addf %16, %23 : vector<16x16x12xf32>
    %c0_15 = arith.constant 0 : index
    %c1_16 = arith.constant 1 : index
    %c0_17 = arith.constant 0 : index
    %c0_18 = arith.constant 0 : index
    %25 = vector.load %arg1[%c0_15, %c1_16, %c0_17, %c0_18] : memref<1x18x18x12xf32, #tpu.memory_space<vmem>>, vector<1x16x16x12xf32>
    %26 = vector.shape_cast %25 : vector<1x16x16x12xf32> to vector<16x16x12xf32>
    %c3 = arith.constant 3 : index
    %c0_19 = arith.constant 0 : index
    %27 = vector.load %arg2[%c3, %c0_19] : memref<9x12xf32, #tpu.memory_space<vmem>>, vector<1x12xf32>
    %28 = vector.shape_cast %27 : vector<1x12xf32> to vector<12xf32>
    %29 = vector.shape_cast %28 : vector<12xf32> to vector<1x1x12xf32>
    %30 = vector.broadcast %29 : vector<1x1x12xf32> to vector<16x16x12xf32>
    %31 = arith.mulf %26, %30 : vector<16x16x12xf32>
    %32 = arith.addf %24, %31 : vector<16x16x12xf32>
    %c0_20 = arith.constant 0 : index
    %c1_21 = arith.constant 1 : index
    %c1_22 = arith.constant 1 : index
    %c0_23 = arith.constant 0 : index
    %33 = vector.load %arg1[%c0_20, %c1_21, %c1_22, %c0_23] : memref<1x18x18x12xf32, #tpu.memory_space<vmem>>, vector<1x16x16x12xf32>
    %34 = vector.shape_cast %33 : vector<1x16x16x12xf32> to vector<16x16x12xf32>
    %c4 = arith.constant 4 : index
    %c0_24 = arith.constant 0 : index
    %35 = vector.load %arg2[%c4, %c0_24] : memref<9x12xf32, #tpu.memory_space<vmem>>, vector<1x12xf32>
    %36 = vector.shape_cast %35 : vector<1x12xf32> to vector<12xf32>
    %37 = vector.shape_cast %36 : vector<12xf32> to vector<1x1x12xf32>
    %38 = vector.broadcast %37 : vector<1x1x12xf32> to vector<16x16x12xf32>
    %39 = arith.mulf %34, %38 : vector<16x16x12xf32>
    %40 = arith.addf %32, %39 : vector<16x16x12xf32>
    %c0_25 = arith.constant 0 : index
    %c1_26 = arith.constant 1 : index
    %c2_27 = arith.constant 2 : index
    %c0_28 = arith.constant 0 : index
    %41 = vector.load %arg1[%c0_25, %c1_26, %c2_27, %c0_28] : memref<1x18x18x12xf32, #tpu.memory_space<vmem>>, vector<1x16x16x12xf32>
    %42 = vector.shape_cast %41 : vector<1x16x16x12xf32> to vector<16x16x12xf32>
    %c5 = arith.constant 5 : index
    %c0_29 = arith.constant 0 : index
    %43 = vector.load %arg2[%c5, %c0_29] : memref<9x12xf32, #tpu.memory_space<vmem>>, vector<1x12xf32>
    %44 = vector.shape_cast %43 : vector<1x12xf32> to vector<12xf32>
    %45 = vector.shape_cast %44 : vector<12xf32> to vector<1x1x12xf32>
    %46 = vector.broadcast %45 : vector<1x1x12xf32> to vector<16x16x12xf32>
    %47 = arith.mulf %42, %46 : vector<16x16x12xf32>
    %48 = arith.addf %40, %47 : vector<16x16x12xf32>
    %c0_30 = arith.constant 0 : index
    %c2_31 = arith.constant 2 : index
    %c0_32 = arith.constant 0 : index
    %c0_33 = arith.constant 0 : index
    %49 = vector.load %arg1[%c0_30, %c2_31, %c0_32, %c0_33] : memref<1x18x18x12xf32, #tpu.memory_space<vmem>>, vector<1x16x16x12xf32>
    %50 = vector.shape_cast %49 : vector<1x16x16x12xf32> to vector<16x16x12xf32>
    %c6 = arith.constant 6 : index
    %c0_34 = arith.constant 0 : index
    %51 = vector.load %arg2[%c6, %c0_34] : memref<9x12xf32, #tpu.memory_space<vmem>>, vector<1x12xf32>
    %52 = vector.shape_cast %51 : vector<1x12xf32> to vector<12xf32>
    %53 = vector.shape_cast %52 : vector<12xf32> to vector<1x1x12xf32>
    %54 = vector.broadcast %53 : vector<1x1x12xf32> to vector<16x16x12xf32>
    %55 = arith.mulf %50, %54 : vector<16x16x12xf32>
    %56 = arith.addf %48, %55 : vector<16x16x12xf32>
    %c0_35 = arith.constant 0 : index
    %c2_36 = arith.constant 2 : index
    %c1_37 = arith.constant 1 : index
    %c0_38 = arith.constant 0 : index
    %57 = vector.load %arg1[%c0_35, %c2_36, %c1_37, %c0_38] : memref<1x18x18x12xf32, #tpu.memory_space<vmem>>, vector<1x16x16x12xf32>
    %58 = vector.shape_cast %57 : vector<1x16x16x12xf32> to vector<16x16x12xf32>
    %c7 = arith.constant 7 : index
    %c0_39 = arith.constant 0 : index
    %59 = vector.load %arg2[%c7, %c0_39] : memref<9x12xf32, #tpu.memory_space<vmem>>, vector<1x12xf32>
    %60 = vector.shape_cast %59 : vector<1x12xf32> to vector<12xf32>
    %61 = vector.shape_cast %60 : vector<12xf32> to vector<1x1x12xf32>
    %62 = vector.broadcast %61 : vector<1x1x12xf32> to vector<16x16x12xf32>
    %63 = arith.mulf %58, %62 : vector<16x16x12xf32>
    %64 = arith.addf %56, %63 : vector<16x16x12xf32>
    %c0_40 = arith.constant 0 : index
    %c2_41 = arith.constant 2 : index
    %c2_42 = arith.constant 2 : index
    %c0_43 = arith.constant 0 : index
    %65 = vector.load %arg1[%c0_40, %c2_41, %c2_42, %c0_43] : memref<1x18x18x12xf32, #tpu.memory_space<vmem>>, vector<1x16x16x12xf32>
    %66 = vector.shape_cast %65 : vector<1x16x16x12xf32> to vector<16x16x12xf32>
    %c8 = arith.constant 8 : index
    %c0_44 = arith.constant 0 : index
    %67 = vector.load %arg2[%c8, %c0_44] : memref<9x12xf32, #tpu.memory_space<vmem>>, vector<1x12xf32>
    %68 = vector.shape_cast %67 : vector<1x12xf32> to vector<12xf32>
    %69 = vector.shape_cast %68 : vector<12xf32> to vector<1x1x12xf32>
    %70 = vector.broadcast %69 : vector<1x1x12xf32> to vector<16x16x12xf32>
    %71 = arith.mulf %66, %70 : vector<16x16x12xf32>
    %72 = arith.addf %64, %71 : vector<16x16x12xf32>
    %c0_45 = arith.constant 0 : index
    %c0_46 = arith.constant 0 : index
    %73 = vector.load %arg3[%c0_45, %c0_46] : memref<1x12xf32, #tpu.memory_space<vmem>>, vector<1x12xf32>
    %74 = vector.shape_cast %73 : vector<1x12xf32> to vector<12xf32>
    %75 = vector.shape_cast %74 : vector<12xf32> to vector<1x1x12xf32>
    %76 = vector.broadcast %75 : vector<1x1x12xf32> to vector<16x16x12xf32>
    %77 = arith.addf %72, %76 : vector<16x16x12xf32>
    %c0_47 = arith.constant 0 : index
    %c0_48 = arith.constant 0 : index
    %c0_49 = arith.constant 0 : index
    %c0_50 = arith.constant 0 : index
    %78 = vector.load %arg4[%c0_47, %c0_48, %c0_49, %c0_50] : memref<1x16x16x12xf32, #tpu.memory_space<vmem>>, vector<1x16x16x12xf32>
    %79 = vector.shape_cast %78 : vector<1x16x16x12xf32> to vector<16x16x12xf32>
    %80 = vector.shape_cast %77 : vector<16x16x12xf32> to vector<1x16x16x12xf32>
    tpu.vector_store %arg4[%c0_47, %c0_48, %c0_49, %c0_50], %80 {strides = array<i32>} : memref<1x16x16x12xf32, #tpu.memory_space<vmem>>, vector<1x16x16x12xf32>,
    return
  }
  func.func @transform_0(%arg0: i32) -> (i32, i32, i32, i32) {
    %c0_i32 = arith.constant 0 : i32
    %c0_i32_0 = arith.constant 0 : i32
    %c0_i32_1 = arith.constant 0 : i32
    %c0_i32_2 = arith.constant 0 : i32
    return %arg0, %c0_i32, %c0_i32_0, %c0_i32_1 : i32, i32, i32, i32
  }
  func.func @transform_1(%arg0: i32) -> (i32, i32) {
    %c0_i32 = arith.constant 0 : i32
    %c0_i32_0 = arith.constant 0 : i32
    %c0_i32_1 = arith.constant 0 : i32
    return %c0_i32, %c0_i32_0 : i32, i32
  }
  func.func @transform_2(%arg0: i32) -> (i32, i32) {
    %c0_i32 = arith.constant 0 : i32
    %c0_i32_0 = arith.constant 0 : i32
    %c0_i32_1 = arith.constant 0 : i32
    return %c0_i32, %c0_i32_0 : i32, i32
  }
  func.func @transform_3(%arg0: i32) -> (i32, i32, i32, i32) {
    %c0_i32 = arith.constant 0 : i32
    %c0_i32_0 = arith.constant 0 : i32
    %c0_i32_1 = arith.constant 0 : i32
    %c0_i32_2 = arith.constant 0 : i32
    return %arg0, %c0_i32, %c0_i32_0, %c0_i32_1 : i32, i32, i32, i32
  }
}

module attributes {stable_mosaic.version = 11 : i64} {
  func.func @_mdta_attention_kernel(%arg0: i32, %arg1: i32, %arg2: memref<2xf32, #tpu.memory_space<smem>>, %arg3: memref<1x1x2x256xf32, #tpu.memory_space<vmem>>, %arg4: memref<1x1x2x256xf32, #tpu.memory_space<vmem>>, %arg5: memref<1x1x2x256xf32, #tpu.memory_space<vmem>>, %arg6: memref<1x1x2x256xf32, #tpu.memory_space<vmem>>) attributes {dimension_semantics = [#tpu.dimension_semantics<parallel>, #tpu.dimension_semantics<parallel>], iteration_bounds = array<i64: 2, 2>, scalar_prefetch = 0 : i64, scratch_operands = 0 : i64, tpu.core_type = #tpu.core_type<tc>, window_params = [{transform_indices = @transform_0, window_bounds = array<i64: 2>}, {transform_indices = @transform_1, window_bounds = array<i64: 1, 1, 2, 256>}, {transform_indices = @transform_2, window_bounds = array<i64: 1, 1, 2, 256>}, {transform_indices = @transform_3, window_bounds = array<i64: 1, 1, 2, 256>}, {transform_indices = @transform_4, window_bounds = array<i64: 1, 1, 2, 256>}]} {
    %c0 = arith.constant 0 : index
    %c0_0 = arith.constant 0 : index
    %c0_1 = arith.constant 0 : index
    %c0_2 = arith.constant 0 : index
    %0 = vector.load %arg3[%c0, %c0_0, %c0_1, %c0_2] : memref<1x1x2x256xf32, #tpu.memory_space<vmem>>, vector<1x1x2x256xf32>
    %1 = vector.shape_cast %0 : vector<1x1x2x256xf32> to vector<2x256xf32>
    %c0_3 = arith.constant 0 : index
    %c0_4 = arith.constant 0 : index
    %c0_5 = arith.constant 0 : index
    %c0_6 = arith.constant 0 : index
    %2 = vector.load %arg4[%c0_3, %c0_4, %c0_5, %c0_6] : memref<1x1x2x256xf32, #tpu.memory_space<vmem>>, vector<1x1x2x256xf32>
    %3 = vector.shape_cast %2 : vector<1x1x2x256xf32> to vector<2x256xf32>
    %c0_7 = arith.constant 0 : index
    %c0_8 = arith.constant 0 : index
    %c0_9 = arith.constant 0 : index
    %c0_10 = arith.constant 0 : index
    %4 = vector.load %arg5[%c0_7, %c0_8, %c0_9, %c0_10] : memref<1x1x2x256xf32, #tpu.memory_space<vmem>>, vector<1x1x2x256xf32>
    %5 = vector.shape_cast %4 : vector<1x1x2x256xf32> to vector<2x256xf32>
    %6 = arith.mulf %1, %1 : vector<2x256xf32>
    %cst = arith.constant dense<0.000000e+00> : vector<2xf32>
    %7 = vector.multi_reduction <add>, %6, %cst [1] : vector<2x256xf32> to vector<2xf32>
    %8 = vector.shape_cast %7 : vector<2xf32> to vector<2x1xf32>
    %9 = math.sqrt %8 : vector<2x1xf32>
    %cst_11 = arith.constant 9.99999996E-13 : f32
    %10 = vector.broadcast %cst_11 : f32 to vector<2x1xf32>
    %11 = arith.maximumf %9, %10 : vector<2x1xf32>
    %12 = vector.broadcast %11 : vector<2x1xf32> to vector<2x256xf32>
    %13 = arith.divf %1, %12 : vector<2x256xf32>
    %14 = arith.mulf %3, %3 : vector<2x256xf32>
    %cst_12 = arith.constant dense<0.000000e+00> : vector<2xf32>
    %15 = vector.multi_reduction <add>, %14, %cst_12 [1] : vector<2x256xf32> to vector<2xf32>
    %16 = vector.shape_cast %15 : vector<2xf32> to vector<2x1xf32>
    %17 = math.sqrt %16 : vector<2x1xf32>
    %cst_13 = arith.constant 9.99999996E-13 : f32
    %18 = vector.broadcast %cst_13 : f32 to vector<2x1xf32>
    %19 = arith.maximumf %17, %18 : vector<2x1xf32>
    %20 = vector.broadcast %19 : vector<2x1xf32> to vector<2x256xf32>
    %21 = arith.divf %3, %20 : vector<2x256xf32>
    %cst_14 = arith.constant dense<0.000000e+00> : vector<2x2xf32>
    %22 = tpu.matmul %13, %21, %cst_14 {dimension_numbers = #tpu.dot_dimension_numbers<[1], [1], [0], [0], [0, 0, 1, 0], [], []>} : vector<2x256xf32>, vector<2x256xf32>, vector<2x2xf32> -> vector<2x2xf32>
    %23 = arith.index_cast %arg1 : i32 to index
    %24 = memref.load %arg2[%23] : memref<2xf32, #tpu.memory_space<smem>>
    %25 = vector.broadcast %24 : f32 to vector<2x2xf32>
    %26 = arith.mulf %22, %25 : vector<2x2xf32>
    %cst_15 = arith.constant dense<0xFF800000> : vector<2xf32>
    %27 = vector.multi_reduction <maximumf>, %26, %cst_15 [1] : vector<2x2xf32> to vector<2xf32>
    %28 = vector.shape_cast %27 : vector<2xf32> to vector<2x1xf32>
    %29 = vector.broadcast %28 : vector<2x1xf32> to vector<2x2xf32>
    %30 = arith.subf %26, %29 : vector<2x2xf32>
    %31 = math.exp %30 : vector<2x2xf32>
    %cst_16 = arith.constant dense<0.000000e+00> : vector<2xf32>
    %32 = vector.multi_reduction <add>, %31, %cst_16 [1] : vector<2x2xf32> to vector<2xf32>
    %33 = vector.shape_cast %32 : vector<2xf32> to vector<2x1xf32>
    %34 = vector.broadcast %33 : vector<2x1xf32> to vector<2x2xf32>
    %35 = arith.divf %31, %34 : vector<2x2xf32>
    %cst_17 = arith.constant dense<0.000000e+00> : vector<2x256xf32>
    %36 = tpu.matmul %35, %5, %cst_17 {dimension_numbers = #tpu.dot_dimension_numbers<[1], [0], [0], [1], [0, 0, 1, 1], [], []>} : vector<2x2xf32>, vector<2x256xf32>, vector<2x256xf32> -> vector<2x256xf32>
    %c0_18 = arith.constant 0 : index
    %c0_19 = arith.constant 0 : index
    %c0_20 = arith.constant 0 : index
    %c0_21 = arith.constant 0 : index
    %37 = vector.load %arg6[%c0_18, %c0_19, %c0_20, %c0_21] : memref<1x1x2x256xf32, #tpu.memory_space<vmem>>, vector<1x1x2x256xf32>
    %38 = vector.shape_cast %37 : vector<1x1x2x256xf32> to vector<2x256xf32>
    %39 = vector.shape_cast %36 : vector<2x256xf32> to vector<1x1x2x256xf32>
    tpu.vector_store %arg6[%c0_18, %c0_19, %c0_20, %c0_21], %39 {strides = array<i32>} : memref<1x1x2x256xf32, #tpu.memory_space<vmem>>, vector<1x1x2x256xf32>,
    return
  }
  func.func @transform_0(%arg0: i32, %arg1: i32) -> i32 {
    %c0_i32 = arith.constant 0 : i32
    %c0_i32_0 = arith.constant 0 : i32
    return %c0_i32 : i32
  }
  func.func @transform_1(%arg0: i32, %arg1: i32) -> (i32, i32, i32, i32) {
    %c0_i32 = arith.constant 0 : i32
    %c0_i32_0 = arith.constant 0 : i32
    %c0_i32_1 = arith.constant 0 : i32
    return %arg0, %arg1, %c0_i32, %c0_i32_0 : i32, i32, i32, i32
  }
  func.func @transform_2(%arg0: i32, %arg1: i32) -> (i32, i32, i32, i32) {
    %c0_i32 = arith.constant 0 : i32
    %c0_i32_0 = arith.constant 0 : i32
    %c0_i32_1 = arith.constant 0 : i32
    return %arg0, %arg1, %c0_i32, %c0_i32_0 : i32, i32, i32, i32
  }
  func.func @transform_3(%arg0: i32, %arg1: i32) -> (i32, i32, i32, i32) {
    %c0_i32 = arith.constant 0 : i32
    %c0_i32_0 = arith.constant 0 : i32
    %c0_i32_1 = arith.constant 0 : i32
    return %arg0, %arg1, %c0_i32, %c0_i32_0 : i32, i32, i32, i32
  }
  func.func @transform_4(%arg0: i32, %arg1: i32) -> (i32, i32, i32, i32) {
    %c0_i32 = arith.constant 0 : i32
    %c0_i32_0 = arith.constant 0 : i32
    %c0_i32_1 = arith.constant 0 : i32
    return %arg0, %arg1, %c0_i32, %c0_i32_0 : i32, i32, i32, i32
  }
}

module attributes {stable_mosaic.version = 11 : i64} {
  func.func @_pw_conv_nchw_kernel(%arg0: i32, %arg1: i32, %arg2: memref<1x4x256xf32, #tpu.memory_space<vmem>>, %arg3: memref<4x4xf32, #tpu.memory_space<vmem>>, %arg4: memref<4x1xf32, #tpu.memory_space<vmem>>, %arg5: memref<1x4x256xf32, #tpu.memory_space<vmem>>) attributes {dimension_semantics = [#tpu.dimension_semantics<parallel>, #tpu.dimension_semantics<parallel>], iteration_bounds = array<i64: 2, 1>, scalar_prefetch = 0 : i64, scratch_operands = 0 : i64, tpu.core_type = #tpu.core_type<tc>, window_params = [{transform_indices = @transform_0, window_bounds = array<i64: 1, 4, 256>}, {pipeline_mode = #tpu.pipeline_mode<synchronous>, transform_indices = @transform_1, window_bounds = array<i64: 4, 4>}, {pipeline_mode = #tpu.pipeline_mode<synchronous>, transform_indices = @transform_2, window_bounds = array<i64: 4, 1>}, {transform_indices = @transform_3, window_bounds = array<i64: 1, 4, 256>}]} {
    %c0 = arith.constant 0 : index
    %c0_0 = arith.constant 0 : index
    %c0_1 = arith.constant 0 : index
    %0 = vector.load %arg2[%c0, %c0_0, %c0_1] : memref<1x4x256xf32, #tpu.memory_space<vmem>>, vector<1x4x256xf32>
    %1 = vector.shape_cast %0 : vector<1x4x256xf32> to vector<4x256xf32>
    %c0_2 = arith.constant 0 : index
    %c0_3 = arith.constant 0 : index
    %2 = vector.load %arg3[%c0_2, %c0_3] : memref<4x4xf32, #tpu.memory_space<vmem>>, vector<4x4xf32>
    %cst = arith.constant dense<0.000000e+00> : vector<4x256xf32>
    %3 = tpu.matmul %2, %1, %cst {dimension_numbers = #tpu.dot_dimension_numbers<[1], [0], [0], [1], [0, 0, 1, 1], [], []>} : vector<4x4xf32>, vector<4x256xf32>, vector<4x256xf32> -> vector<4x256xf32>
    %c0_4 = arith.constant 0 : index
    %c0_5 = arith.constant 0 : index
    %4 = vector.load %arg4[%c0_4, %c0_5] : memref<4x1xf32, #tpu.memory_space<vmem>>, vector<4x1xf32>
    %5 = vector.broadcast %4 : vector<4x1xf32> to vector<4x256xf32>
    %6 = arith.addf %3, %5 : vector<4x256xf32>
    %c0_6 = arith.constant 0 : index
    %c0_7 = arith.constant 0 : index
    %c0_8 = arith.constant 0 : index
    %7 = vector.load %arg5[%c0_6, %c0_7, %c0_8] : memref<1x4x256xf32, #tpu.memory_space<vmem>>, vector<1x4x256xf32>
    %8 = vector.shape_cast %7 : vector<1x4x256xf32> to vector<4x256xf32>
    %9 = vector.shape_cast %6 : vector<4x256xf32> to vector<1x4x256xf32>
    tpu.vector_store %arg5[%c0_6, %c0_7, %c0_8], %9 {strides = array<i32>} : memref<1x4x256xf32, #tpu.memory_space<vmem>>, vector<1x4x256xf32>,
    return
  }
  func.func @transform_0(%arg0: i32, %arg1: i32) -> (i32, i32, i32) {
    %c0_i32 = arith.constant 0 : i32
    %c0_i32_0 = arith.constant 0 : i32
    return %arg0, %c0_i32, %arg1 : i32, i32, i32
  }
  func.func @transform_1(%arg0: i32, %arg1: i32) -> (i32, i32) {
    %c0_i32 = arith.constant 0 : i32
    %c0_i32_0 = arith.constant 0 : i32
    %c0_i32_1 = arith.constant 0 : i32
    return %c0_i32, %c0_i32_0 : i32, i32
  }
  func.func @transform_2(%arg0: i32, %arg1: i32) -> (i32, i32) {
    %c0_i32 = arith.constant 0 : i32
    %c0_i32_0 = arith.constant 0 : i32
    %c0_i32_1 = arith.constant 0 : i32
    return %c0_i32, %c0_i32_0 : i32, i32
  }
  func.func @transform_3(%arg0: i32, %arg1: i32) -> (i32, i32, i32) {
    %c0_i32 = arith.constant 0 : i32
    %c0_i32_0 = arith.constant 0 : i32
    return %arg0, %c0_i32, %arg1 : i32, i32, i32
  }
}

</mosaic_0001>

<llo_original>
// kernel: mdta_attention.4
$region0: #{mdta_attention.4}
  #allocation0 [shape = 'u32[]', space=smem, size = 0x4, offset = 0x4, fixed_abs, tag = 'smem constant byte address 0x4 - core index']
  #allocation1 [shape = 'u32[144,128]{1,0:T(1,128)}', space=vmem, size = 0x12000, scoped, tag = 'internal scratch']
  %s0 = inlined_call_operand.vmem [shape: f32[2,256,4], index: 0, kind: input, shape index: {}]
  %s1 = inlined_call_operand.vmem [shape: f32[4,12], index: 1, kind: input, shape index: {}]
  %s2 = inlined_call_operand.vmem [shape: f32[1,12], index: 2, kind: input, shape index: {}]
  %s3 = inlined_call_operand.vmem [shape: f32[2,256,12], index: 3, kind: output, shape index: {}]
  %s4 = sld [smem:[#allocation0]]
  $region45: #{mdta_attention.4} parent=0
    _
  %s6 = ssub.s32 1, %s4
  %s7 = scalar_select 0, %s6, %s4
  loop: start=0, step=1, limit=4
  $region2: #{mdta_attention.4} parent=0 // loop_pre_header
    _
  $region3: #{mdta_attention.4} parent=0 // loop_header
    %s9 = sphi 0, %s13
    %p10 = scmp.ge.s32.totalorder %s9, 4
    %s16 = sphi 0, %s28
    %s17 = sphi 0, %s24
    %s18 = sphi 0, %s16
    %s19 = sphi 0, %s17
    %s20 = sphi 0, %s18
    %s21 = sphi 0, %s19
    %s33 = sphi 0, %s35
    %s36 = sphi 0, %s33
    %s37 = sphi 0, %s36
    %s53 = sphi 0, %s37
    %s57 = sphi 0, %s57
    %s59 = sphi 0, %s57
    %s60 = sphi 0, %s59
    %s74 = sphi 0, %s60
    %s78 = sphi 0, %s78
    %s80 = sphi 0, %s78
    %s81 = sphi 0, %s80
    %s95 = sphi 0, %s81
    %s103 = sphi 0, %s105
    %s106 = sphi 0, %s103
    %s107 = sphi 0, %s106
    %s123 = sphi 0, %s107
  $region4: #{mdta_attention.4} parent=0 // loop_header_branch
    %12 = sbr.rel (%p10) target = $region8
  $region5: #{mdta_attention.4} parent=0 // loop_body
    %s14 = ssub.s32 %s9, 1
    %s15 = ssub.s32 %s9, 2
    %s22 = sadd.s32 1, %s17
    %p23 = scmp.ge.s32.totalorder %s22, 1
    %s24 = scalar_select %p23, 0, %s22
    %s25 = sadd.s32 1, %s16
    %s26 = scalar_select %p23, %s25, %s16
    %p27 = scmp.ge.s32.totalorder %s26, 2
    %s28 = scalar_select %p27, 0, %s26
    %s29 = ssub.s32 %s16, %s28
    %s30 = ssub.s32 %s17, %s24
    %s31 = sor.u32 %s29, %s30
    %p32 = scmp.eq.s32.totalorder %s31, 0
    %s34 = sadd.s32 %s33, 1
    %s35 = scalar_select %p32, %s33, %s34
    %p38 = pneg %p32
    %p39 = scmp.eq.s32.totalorder %s9, 1
    %p40 = por %p38, %p39
    %p41 = scmp.ne.s32.totalorder %s33, %s36
    %p42 = scmp.eq.s32.totalorder %s9, 0
    %p43 = por %p41, %p42
    %p44 = scmp.ne.s32.totalorder %s33, %s36
    %p45 = scmp.eq.s32.totalorder %s14, 1
    %p46 = por %p44, %p45
    %p47 = scmp.ne.s32.totalorder %s36, %s37
    %p48 = scmp.eq.s32.totalorder %s14, 0
    %p49 = por %p47, %p48
    %p50 = scmp.ne.s32.totalorder %s36, %s37
    %p51 = scmp.eq.s32.totalorder %s15, 1
    %p52 = por %p50, %p51
    %p54 = scmp.ne.s32.totalorder %s37, %s53
    %p55 = scmp.eq.s32.totalorder %s15, 0
    %p56 = por %p54, %p55
    %s58 = sadd.s32 %s57, 1
    %p61 = scmp.eq.s32.totalorder %s9, 1
    %p62 = scmp.ne.s32.totalorder %s57, %s59
    %p63 = scmp.eq.s32.totalorder %s9, 0
    %p64 = por %p62, %p63
    %p65 = scmp.ne.s32.totalorder %s57, %s59
    %p66 = scmp.eq.s32.totalorder %s14, 1
    %p67 = por %p65, %p66
    %p68 = scmp.ne.s32.totalorder %s59, %s60
    %p69 = scmp.eq.s32.totalorder %s14, 0
    %p70 = por %p68, %p69
    %p71 = scmp.ne.s32.totalorder %s59, %s60
    %p72 = scmp.eq.s32.totalorder %s15, 1
    %p73 = por %p71, %p72
    %p75 = scmp.ne.s32.totalorder %s60, %s74
    %p76 = scmp.eq.s32.totalorder %s15, 0
    %p77 = por %p75, %p76
    %s79 = sadd.s32 %s78, 1
    %p82 = scmp.eq.s32.totalorder %s9, 1
    %p83 = scmp.ne.s32.totalorder %s78, %s80
    %p84 = scmp.eq.s32.totalorder %s9, 0
    %p85 = por %p83, %p84
    %p86 = scmp.ne.s32.totalorder %s78, %s80
    %p87 = scmp.eq.s32.totalorder %s14, 1
    %p88 = por %p86, %p87
    %p89 = scmp.ne.s32.totalorder %s80, %s81
    %p90 = scmp.eq.s32.totalorder %s14, 0
    %p91 = por %p89, %p90
    %p92 = scmp.ne.s32.totalorder %s80, %s81
    %p93 = scmp.eq.s32.totalorder %s15, 1
    %p94 = por %p92, %p93
    %p96 = scmp.ne.s32.totalorder %s81, %s95
    %p97 = scmp.eq.s32.totalorder %s15, 0
    %p98 = por %p96, %p97
    %s99 = ssub.s32 %s16, %s28
    %s100 = ssub.s32 %s17, %s24
    %s101 = sor.u32 %s99, %s100
    %p102 = scmp.eq.s32.totalorder %s101, 0
    %s104 = sadd.s32 %s103, 1
    %s105 = scalar_select %p102, %s103, %s104
    %p108 = pneg %p102
    %p109 = scmp.eq.s32.totalorder %s9, 1
    %p110 = por %p108, %p109
    %p111 = scmp.ne.s32.totalorder %s103, %s106
    %p112 = scmp.eq.s32.totalorder %s9, 0
    %p113 = por %p111, %p112
    %p114 = scmp.ne.s32.totalorder %s103, %s106
    %p115 = scmp.eq.s32.totalorder %s14, 1
    %p116 = por %p114, %p115
    %p117 = scmp.ne.s32.totalorder %s106, %s107
    %p118 = scmp.eq.s32.totalorder %s14, 0
    %p119 = por %p117, %p118
    %p120 = scmp.ne.s32.totalorder %s106, %s107
    %p121 = scmp.eq.s32.totalorder %s15, 1
    %p122 = por %p120, %p121
    %p124 = scmp.ne.s32.totalorder %s107, %s123
    %p125 = scmp.eq.s32.totalorder %s15, 0
    %p126 = por %p124, %p125
    %p127 = scmp.le.s32.totalorder 1, %s9
    %p128 = scmp.lt.s32.totalorder %s9, 3
    %p129 = pnand %p127, %p128
    %p130 = pneg %p129
    // Predicated region
    $region9: #{mdta_attention.4} parent=5 // pred_check
      _
    $region10: #{mdta_attention.4} parent=5 // pred_check_branch
      %132 = sbr.rel (%p129) target = $region12
    $region11: #{mdta_attention.4} parent=5 // pred_region
      %s133 = ssub.s32 %s9, 1
      // Predicated region
      $region13: #{mdta_attention.4} parent=11 // pred_check
        %p134 = pneg %p70
      $region14: #{mdta_attention.4} parent=11 // pred_check_branch
        %136 = sbr.rel (%p134) target = $region16
      $region15: #{mdta_attention.4} parent=11 // pred_region
        _
      $region16: #{mdta_attention.4} parent=11 // pred_fallthru
        _
      // Predicated region
      $region17: #{mdta_attention.4} parent=11 // pred_check
        %p137 = pneg %p91
      $region18: #{mdta_attention.4} parent=11 // pred_check_branch
        %139 = sbr.rel (%p137) target = $region20
      $region19: #{mdta_attention.4} parent=11 // pred_region
        _
      $region20: #{mdta_attention.4} parent=11 // pred_fallthru
        _
    $region12: #{mdta_attention.4} parent=5 // pred_fallthru
      _
    %p140 = scmp.lt.s32.totalorder %s9, 2
    // Predicated region
    $region21: #{mdta_attention.4} parent=5 // pred_check
      %p141 = pneg %p140
    $region22: #{mdta_attention.4} parent=5 // pred_check_branch
      %143 = sbr.rel (%p141) target = $region24
    $region23: #{mdta_attention.4} parent=5 // pred_region
      // Predicated region
      $region25: #{mdta_attention.4} parent=23 // pred_check
        %p144 = pneg %p43
      $region26: #{mdta_attention.4} parent=23 // pred_check_branch
        %146 = sbr.rel (%p144) target = $region28
      $region27: #{mdta_attention.4} parent=23 // pred_region
        %s147 = smul.u32 32, %s17
        %p148 = scmp.lt.s32.totalorder %s16, 1
        %s149 = scalar_select %p148, %s16, 1
        %p150 = scmp.lt.s32.totalorder %s147, 31
        %s151 = scalar_select %p150, %s147, 31
        %s152 = smul.addr %s149, 32
        %s153 = sadd.s32 %s151, %s152
        %s154 = smul.addr %s153, 8
        %s155 = scalar_lea.vmem %s0, %s154
        %s156 = smul.u32 32, %s17
      $region28: #{mdta_attention.4} parent=23 // pred_fallthru
        _
    $region24: #{mdta_attention.4} parent=5 // pred_fallthru
      _
    %p157 = scmp.le.s32.totalorder 1, %s9
    %p158 = scmp.lt.s32.totalorder %s9, 3
    %p159 = pnand %p157, %p158
    %p160 = pneg %p159
    // Predicated region
    $region29: #{mdta_attention.4} parent=5 // pred_check
      _
    $region30: #{mdta_attention.4} parent=5 // pred_check_branch
      %162 = sbr.rel (%p159) target = $region32
    $region31: #{mdta_attention.4} parent=5 // pred_region
      %s163 = ssub.s32 %s9, 1
      %s164 = smul.u32 32, %s19
      %p165 = scmp.lt.s32.totalorder %s18, 1
      %s166 = scalar_select %p165, %s18, 1
      %p167 = scmp.lt.s32.totalorder %s164, 31
      %s168 = scalar_select %p167, %s164, 31
      %s169 = smul.addr %s166, 32
      %s170 = sadd.s32 %s168, %s169
      %s171 = smul.addr %s170, 8
      %s172 = scalar_lea.vmem %s0, %s171
      %p173 = pneg %p49
      %p174 = pneg %p46
      %p175 = pneg %p70
      %p176 = pneg %p67
      %p177 = pneg %p91
      %p178 = pneg %p88
      %p179 = pneg %p119
      %p180 = pneg %p116
      %s181 = smul.u32 32, %s19
      %p182 = scmp.lt.s32.totalorder %s18, 1
      %s183 = scalar_select %p182, %s18, 1
      %p184 = scmp.lt.s32.totalorder %s181, 31
      %s185 = scalar_select %p184, %s181, 31
      %s186 = smul.addr %s183, 32
      %s187 = sadd.s32 %s185, %s186
      %s188 = smul.addr %s187, 8
      %s189 = scalar_lea.vmem %s3, %s188
      %s190 = smul.u32 32, %s19
      %p191 = scmp.lt.s32.totalorder %s18, 1
      %s192 = scalar_select %p191, %s18, 1
      %p193 = scmp.lt.s32.totalorder %s190, 31
      %s194 = scalar_select %p193, %s190, 31
      %s195 = smul.addr %s192, 32
      %s196 = sadd.s32 %s194, %s195
      %s197 = smul.addr %s196, 8
      %s198 = scalar_lea.vmem %s0, %s197
      %s199 = smul.u32 32, %s19
      %s200 = smul.u32 32, %s19
      %p201 = scmp.lt.s32.totalorder %s18, 1
      %s202 = scalar_select %p201, %s18, 1
      %p203 = scmp.lt.s32.totalorder %s200, 31
      %s204 = scalar_select %p203, %s200, 31
      %s205 = smul.addr %s202, 32
      %s206 = sadd.s32 %s204, %s205
      %s207 = smul.addr %s206, 8
      %s208 = scalar_lea.vmem %s3, %s207
      %s209 = smul.u32 32, %s19
      %v210 = vld [vmem:[%s198] sm:$0xff]
      %v211 = vld [vmem:[%s198 + $0x8] sm:$0xff]
      %v212 = vld [vmem:[%s198 + $0x10] sm:$0xff]
      %v213 = vld [vmem:[%s198 + $0x18] sm:$0xff]
      %v214 = vld [vmem:[%s198 + $0x20] sm:$0xff]
      %v215 = vld [vmem:[%s198 + $0x28] sm:$0xff]
      %v216 = vld [vmem:[%s198 + $0x30] sm:$0xff]
      %v217 = vld [vmem:[%s198 + $0x38] sm:$0xff]
      %v218 = vld [vmem:[%s198 + $0x40] sm:$0xff]
      %v219 = vld [vmem:[%s198 + $0x48] sm:$0xff]
      %v220 = vld [vmem:[%s198 + $0x50] sm:$0xff]
      %v221 = vld [vmem:[%s198 + $0x58] sm:$0xff]
      %v222 = vld [vmem:[%s198 + $0x60] sm:$0xff]
      %v223 = vld [vmem:[%s198 + $0x68] sm:$0xff]
      %v224 = vld [vmem:[%s198 + $0x70] sm:$0xff]
      %v225 = vld [vmem:[%s198 + $0x78] sm:$0xff]
      %v226 = vld [vmem:[%s198 + $0x80] sm:$0xff]
      %v227 = vld [vmem:[%s198 + $0x88] sm:$0xff]
      %v228 = vld [vmem:[%s198 + $0x90] sm:$0xff]
      %v229 = vld [vmem:[%s198 + $0x98] sm:$0xff]
      %v230 = vld [vmem:[%s198 + $0xa0] sm:$0xff]
      %v231 = vld [vmem:[%s198 + $0xa8] sm:$0xff]
      %v232 = vld [vmem:[%s198 + $0xb0] sm:$0xff]
      %v233 = vld [vmem:[%s198 + $0xb8] sm:$0xff]
      %v234 = vld [vmem:[%s198 + $0xc0] sm:$0xff]
      %v235 = vld [vmem:[%s198 + $0xc8] sm:$0xff]
      %v236 = vld [vmem:[%s198 + $0xd0] sm:$0xff]
      %v237 = vld [vmem:[%s198 + $0xd8] sm:$0xff]
      %v238 = vld [vmem:[%s198 + $0xe0] sm:$0xff]
      %v239 = vld [vmem:[%s198 + $0xe8] sm:$0xff]
      %v240 = vld [vmem:[%s198 + $0xf0] sm:$0xff]
      %v241 = vld [vmem:[%s198 + $0xf8] sm:$0xff]
      %v242 = vld [vmem:[%s1] sm:$0xf]
      %v243 = vld [vmem:[%s2] sm:$0x1]
      %v245 = vlaneseq
      %v246 = vshrl.u32 %v245, 7
      %v247 = vsub.s32 0, %v246
      %v248 = vrot.slane %v243, %v247
      %vm250 = vcmask 31744
      %v252 = vsel %vm250, %v210, 0
      %v255 = vsel %vm250, %v211, 0
      %v258 = vsel %vm250, %v212, 0
      %v261 = vsel %vm250, %v213, 0
      %v264 = vsel %vm250, %v214, 0
      %v267 = vsel %vm250, %v215, 0
      %v270 = vsel %vm250, %v216, 0
      %v273 = vsel %vm250, %v217, 0
      %v276 = vsel %vm250, %v218, 0
      %v279 = vsel %vm250, %v219, 0
      %v282 = vsel %vm250, %v220, 0
      %v285 = vsel %vm250, %v221, 0
      %v288 = vsel %vm250, %v222, 0
      %v291 = vsel %vm250, %v223, 0
      %v294 = vsel %vm250, %v224, 0
      %v297 = vsel %vm250, %v225, 0
      %v300 = vsel %vm250, %v226, 0
      %v303 = vsel %vm250, %v227, 0
      %v306 = vsel %vm250, %v228, 0
      %v309 = vsel %vm250, %v229, 0
      %v312 = vsel %vm250, %v230, 0
      %v315 = vsel %vm250, %v231, 0
      %v318 = vsel %vm250, %v232, 0
      %v321 = vsel %vm250, %v233, 0
      %v324 = vsel %vm250, %v234, 0
      %v327 = vsel %vm250, %v235, 0
      %v330 = vsel %vm250, %v236, 0
      %v333 = vsel %vm250, %v237, 0
      %v336 = vsel %vm250, %v238, 0
      %v339 = vsel %vm250, %v239, 0
      %v342 = vsel %vm250, %v240, 0
      %v345 = vsel %vm250, %v241, 0
      %vm347 = vcmask 1043456
      %v349 = vsel %vm347, %v242, 0
      %351 = vmatprep.subr.mxu0 0.0
      %352 = vmatpush1.msra.mxu0 %v349
      %353 = vmatprep.subr.mxu0 0.0
      %354 = vmatpush1.msra.mxu0 0.0
      %355 = vmatprep.subr.mxu0 0.0
      %356 = vmatpush1.msra.mxu0 0.0
      %357 = vmatprep.subr.mxu0 0.0
      %358 = vmatpush1.msra.mxu0 0.0
      %359 = vmatprep.subr.mxu0 0.0
      %360 = vmatpush1.msra.mxu0 0.0
      %361 = vmatprep.subr.mxu0 0.0
      %362 = vmatpush1.msra.mxu0 0.0
      %363 = vmatprep.subr.mxu0 0.0
      %364 = vmatpush1.msra.mxu0 0.0
      %365 = vmatprep.subr.mxu0 0.0
      %366 = vmatpush1.msra.mxu0 0.0
      %367 = vmatprep.subr.mxu0 0.0
      %368 = vmatpush1.msra.mxu0 0.0
      %369 = vmatprep.subr.mxu0 0.0
      %370 = vmatpush1.msra.mxu0 0.0
      %371 = vmatprep.subr.mxu0 0.0
      %372 = vmatpush1.msra.mxu0 0.0
      %373 = vmatprep.subr.mxu0 0.0
      %374 = vmatpush1.msra.mxu0 0.0
      %375 = vmatprep.subr.mxu0 0.0
      %376 = vmatpush1.msra.mxu0 0.0
      %377 = vmatprep.subr.mxu0 0.0
      %378 = vmatpush1.msra.mxu0 0.0
      %379 = vmatprep.subr.mxu0 0.0
      %380 = vmatpush1.msra.mxu0 0.0
      %381 = vmatprep.subr.mxu0 0.0
      %382 = vmatpush1.msra.mxu0 0.0
      %383 = vmatprep.subr.mxu0 0.0
      %384 = vmatpush1.msra.mxu0 0.0
      %385 = vmatprep.subr.mxu0 0.0
      %386 = vmatpush1.msra.mxu0 0.0
      %387 = vmatprep.subr.mxu0 0.0
      %388 = vmatpush1.msra.mxu0 0.0
      %389 = vmatprep.subr.mxu0 0.0
      %390 = vmatpush1.msra.mxu0 0.0
      %391 = vmatprep.subr.mxu0 0.0
      %392 = vmatpush1.msra.mxu0 0.0
      %393 = vmatprep.subr.mxu0 0.0
      %394 = vmatpush1.msra.mxu0 0.0
      %395 = vmatprep.subr.mxu0 0.0
      %396 = vmatpush1.msra.mxu0 0.0
      %397 = vmatprep.subr.mxu0 0.0
      %398 = vmatpush1.msra.mxu0 0.0
      %399 = vmatprep.subr.mxu0 0.0
      %400 = vmatpush1.msra.mxu0 0.0
      %401 = vmatprep.subr.mxu0 0.0
      %402 = vmatpush1.msra.mxu0 0.0
      %403 = vmatprep.subr.mxu0 0.0
      %404 = vmatpush1.msra.mxu0 0.0
      %405 = vmatprep.subr.mxu0 0.0
      %406 = vmatpush1.msra.mxu0 0.0
      %407 = vmatprep.subr.mxu0 0.0
      %408 = vmatpush1.msra.mxu0 0.0
      %409 = vmatprep.subr.mxu0 0.0
      %410 = vmatpush1.msra.mxu0 0.0
      %411 = vmatprep.subr.mxu0 0.0
      %412 = vmatpush1.msra.mxu0 0.0
      %413 = vmatprep.subr.mxu0 0.0
      %414 = vmatpush1.msra.mxu0 0.0
      %415 = vmatprep.mubr.f32.mxu0 0.0
      %416 = vmatmul.mubr.f32.gmra.mrb[0].mxu0 %v252
      %v417 = vpop.f32.mrb[0].mxu0
      %v418 = vadd.f32 %v248, %v417
      %v419 = vpop.f32.mrb[0].mxu0
      %420 = vmatprep.mubr.f32.mxu0 0.0
      %421 = vmatmul.mubr.f32.gmra.mrb[0].mxu0 %v255
      %v422 = vpop.f32.mrb[0].mxu0
      %v423 = vadd.f32 %v248, %v422
      %v424 = vpop.f32.mrb[0].mxu0
      %425 = vmatprep.mubr.f32.mxu0 0.0
      %426 = vmatmul.mubr.f32.gmra.mrb[0].mxu0 %v258
      %v427 = vpop.f32.mrb[0].mxu0
      %v428 = vadd.f32 %v248, %v427
      %v429 = vpop.f32.mrb[0].mxu0
      %430 = vmatprep.mubr.f32.mxu0 0.0
      %431 = vmatmul.mubr.f32.gmra.mrb[0].mxu0 %v261
      %v432 = vpop.f32.mrb[0].mxu0
      %v433 = vadd.f32 %v248, %v432
      %v434 = vpop.f32.mrb[0].mxu0
      %435 = vmatprep.mubr.f32.mxu0 0.0
      %436 = vmatmul.mubr.f32.gmra.mrb[0].mxu0 %v264
      %v437 = vpop.f32.mrb[0].mxu0
      %v438 = vadd.f32 %v248, %v437
      %v439 = vpop.f32.mrb[0].mxu0
      %440 = vmatprep.mubr.f32.mxu0 0.0
      %441 = vmatmul.mubr.f32.gmra.mrb[0].mxu0 %v267
      %v442 = vpop.f32.mrb[0].mxu0
      %v443 = vadd.f32 %v248, %v442
      %v444 = vpop.f32.mrb[0].mxu0
      %445 = vmatprep.mubr.f32.mxu0 0.0
      %446 = vmatmul.mubr.f32.gmra.mrb[0].mxu0 %v270
      %v447 = vpop.f32.mrb[0].mxu0
      %v448 = vadd.f32 %v248, %v447
      %v449 = vpop.f32.mrb[0].mxu0
      %450 = vmatprep.mubr.f32.mxu0 0.0
      %451 = vmatmul.mubr.f32.gmra.mrb[0].mxu0 %v273
      %v452 = vpop.f32.mrb[0].mxu0
      %v453 = vadd.f32 %v248, %v452
      %v454 = vpop.f32.mrb[0].mxu0
      %455 = vmatprep.mubr.f32.mxu0 0.0
      %456 = vmatmul.mubr.f32.gmra.mrb[0].mxu0 %v276
      %v457 = vpop.f32.mrb[0].mxu0
      %v458 = vadd.f32 %v248, %v457
      %v459 = vpop.f32.mrb[0].mxu0
      %460 = vmatprep.mubr.f32.mxu0 0.0
      %461 = vmatmul.mubr.f32.gmra.mrb[0].mxu0 %v279
      %v462 = vpop.f32.mrb[0].mxu0
      %v463 = vadd.f32 %v248, %v462
      %v464 = vpop.f32.mrb[0].mxu0
      %465 = vmatprep.mubr.f32.mxu0 0.0
      %466 = vmatmul.mubr.f32.gmra.mrb[0].mxu0 %v282
      %v467 = vpop.f32.mrb[0].mxu0
      %v468 = vadd.f32 %v248, %v467
      %v469 = vpop.f32.mrb[0].mxu0
      %470 = vmatprep.mubr.f32.mxu0 0.0
      %471 = vmatmul.mubr.f32.gmra.mrb[0].mxu0 %v285
      %v472 = vpop.f32.mrb[0].mxu0
      %v473 = vadd.f32 %v248, %v472
      %v474 = vpop.f32.mrb[0].mxu0
      %475 = vmatprep.mubr.f32.mxu0 0.0
      %476 = vmatmul.mubr.f32.gmra.mrb[0].mxu0 %v288
      %v477 = vpop.f32.mrb[0].mxu0
      %v478 = vadd.f32 %v248, %v477
      %v479 = vpop.f32.mrb[0].mxu0
      %480 = vmatprep.mubr.f32.mxu0 0.0
      %481 = vmatmul.mubr.f32.gmra.mrb[0].mxu0 %v291
      %v482 = vpop.f32.mrb[0].mxu0
      %v483 = vadd.f32 %v248, %v482
      %v484 = vpop.f32.mrb[0].mxu0
      %485 = vmatprep.mubr.f32.mxu0 0.0
      %486 = vmatmul.mubr.f32.gmra.mrb[0].mxu0 %v294
      %v487 = vpop.f32.mrb[0].mxu0
      %v488 = vadd.f32 %v248, %v487
      %v489 = vpop.f32.mrb[0].mxu0
      %490 = vmatprep.mubr.f32.mxu0 0.0
      %491 = vmatmul.mubr.f32.gmra.mrb[0].mxu0 %v297
      %v492 = vpop.f32.mrb[0].mxu0
      %v493 = vadd.f32 %v248, %v492
      %v494 = vpop.f32.mrb[0].mxu0
      %495 = vmatprep.mubr.f32.mxu0 0.0
      %496 = vmatmul.mubr.f32.gmra.mrb[0].mxu0 %v300
      %v497 = vpop.f32.mrb[0].mxu0
      %v498 = vadd.f32 %v248, %v497
      %v499 = vpop.f32.mrb[0].mxu0
      %500 = vmatprep.mubr.f32.mxu0 0.0
      %501 = vmatmul.mubr.f32.gmra.mrb[0].mxu0 %v303
      %v502 = vpop.f32.mrb[0].mxu0
      %v503 = vadd.f32 %v248, %v502
      %v504 = vpop.f32.mrb[0].mxu0
      %505 = vmatprep.mubr.f32.mxu0 0.0
      %506 = vmatmul.mubr.f32.gmra.mrb[0].mxu0 %v306
      %v507 = vpop.f32.mrb[0].mxu0
      %v508 = vadd.f32 %v248, %v507
      %v509 = vpop.f32.mrb[0].mxu0
      %510 = vmatprep.mubr.f32.mxu0 0.0
      %511 = vmatmul.mubr.f32.gmra.mrb[0].mxu0 %v309
      %v512 = vpop.f32.mrb[0].mxu0
      %v513 = vadd.f32 %v248, %v512
      %v514 = vpop.f32.mrb[0].mxu0
      %515 = vmatprep.mubr.f32.mxu0 0.0
      %516 = vmatmul.mubr.f32.gmra.mrb[0].mxu0 %v312
      %v517 = vpop.f32.mrb[0].mxu0
      %v518 = vadd.f32 %v248, %v517
      %v519 = vpop.f32.mrb[0].mxu0
      %520 = vmatprep.mubr.f32.mxu0 0.0
      %521 = vmatmul.mubr.f32.gmra.mrb[0].mxu0 %v315
      %v522 = vpop.f32.mrb[0].mxu0
      %v523 = vadd.f32 %v248, %v522
      %v524 = vpop.f32.mrb[0].mxu0
      %525 = vmatprep.mubr.f32.mxu0 0.0
      %526 = vmatmul.mubr.f32.gmra.mrb[0].mxu0 %v318
      %v527 = vpop.f32.mrb[0].mxu0
      %v528 = vadd.f32 %v248, %v527
      %v529 = vpop.f32.mrb[0].mxu0
      %530 = vmatprep.mubr.f32.mxu0 0.0
      %531 = vmatmul.mubr.f32.gmra.mrb[0].mxu0 %v321
      %v532 = vpop.f32.mrb[0].mxu0
      %v533 = vadd.f32 %v248, %v532
      %v534 = vpop.f32.mrb[0].mxu0
      %535 = vmatprep.mubr.f32.mxu0 0.0
      %536 = vmatmul.mubr.f32.gmra.mrb[0].mxu0 %v324
      %v537 = vpop.f32.mrb[0].mxu0
      %v538 = vadd.f32 %v248, %v537
      %v539 = vpop.f32.mrb[0].mxu0
      %540 = vmatprep.mubr.f32.mxu0 0.0
      %541 = vmatmul.mubr.f32.gmra.mrb[0].mxu0 %v327
      %v542 = vpop.f32.mrb[0].mxu0
      %v543 = vadd.f32 %v248, %v542
      %v544 = vpop.f32.mrb[0].mxu0
      %545 = vmatprep.mubr.f32.mxu0 0.0
      %546 = vmatmul.mubr.f32.gmra.mrb[0].mxu0 %v330
      %v547 = vpop.f32.mrb[0].mxu0
      %v548 = vadd.f32 %v248, %v547
      %v549 = vpop.f32.mrb[0].mxu0
      %550 = vmatprep.mubr.f32.mxu0 0.0
      %551 = vmatmul.mubr.f32.gmra.mrb[0].mxu0 %v333
      %v552 = vpop.f32.mrb[0].mxu0
      %v553 = vadd.f32 %v248, %v552
      %v554 = vpop.f32.mrb[0].mxu0
      %555 = vmatprep.mubr.f32.mxu0 0.0
      %556 = vmatmul.mubr.f32.gmra.mrb[0].mxu0 %v336
      %v557 = vpop.f32.mrb[0].mxu0
      %v558 = vadd.f32 %v248, %v557
      %v559 = vpop.f32.mrb[0].mxu0
      %560 = vmatprep.mubr.f32.mxu0 0.0
      %561 = vmatmul.mubr.f32.gmra.mrb[0].mxu0 %v339
      %v562 = vpop.f32.mrb[0].mxu0
      %v563 = vadd.f32 %v248, %v562
      %v564 = vpop.f32.mrb[0].mxu0
      %565 = vmatprep.mubr.f32.mxu0 0.0
      %566 = vmatmul.mubr.f32.gmra.mrb[0].mxu0 %v342
      %v567 = vpop.f32.mrb[0].mxu0
      %v568 = vadd.f32 %v248, %v567
      %v569 = vpop.f32.mrb[0].mxu0
      %570 = vmatprep.mubr.f32.mxu0 0.0
      %571 = vmatmul.mubr.f32.gmra.mrb[0].mxu0 %v345
      %v572 = vpop.f32.mrb[0].mxu0
      %v573 = vadd.f32 %v248, %v572
      %v574 = vpop.f32.mrb[0].mxu0
      %575 = vdwg.mxu0
      %vm576 = vcmask 97280
      %577 = vst.msk [vmem:[%s208] sm:$0xff] %vm576, %v418
      %578 = vst.msk [vmem:[%s208 + $0x8] sm:$0xff] %vm576, %v423
      %579 = vst.msk [vmem:[%s208 + $0x10] sm:$0xff] %vm576, %v428
      %580 = vst.msk [vmem:[%s208 + $0x18] sm:$0xff] %vm576, %v433
      %581 = vst.msk [vmem:[%s208 + $0x20] sm:$0xff] %vm576, %v438
      %582 = vst.msk [vmem:[%s208 + $0x28] sm:$0xff] %vm576, %v443
      %583 = vst.msk [vmem:[%s208 + $0x30] sm:$0xff] %vm576, %v448
      %584 = vst.msk [vmem:[%s208 + $0x38] sm:$0xff] %vm576, %v453
      %585 = vst.msk [vmem:[%s208 + $0x40] sm:$0xff] %vm576, %v458
      %586 = vst.msk [vmem:[%s208 + $0x48] sm:$0xff] %vm576, %v463
      %587 = vst.msk [vmem:[%s208 + $0x50] sm:$0xff] %vm576, %v468
      %588 = vst.msk [vmem:[%s208 + $0x58] sm:$0xff] %vm576, %v473
      %589 = vst.msk [vmem:[%s208 + $0x60] sm:$0xff] %vm576, %v478
      %590 = vst.msk [vmem:[%s208 + $0x68] sm:$0xff] %vm576, %v483
      %591 = vst.msk [vmem:[%s208 + $0x70] sm:$0xff] %vm576, %v488
      %592 = vst.msk [vmem:[%s208 + $0x78] sm:$0xff] %vm576, %v493
      %593 = vst.msk [vmem:[%s208 + $0x80] sm:$0xff] %vm576, %v498
      %594 = vst.msk [vmem:[%s208 + $0x88] sm:$0xff] %vm576, %v503
      %595 = vst.msk [vmem:[%s208 + $0x90] sm:$0xff] %vm576, %v508
      %596 = vst.msk [vmem:[%s208 + $0x98] sm:$0xff] %vm576, %v513
      %597 = vst.msk [vmem:[%s208 + $0xa0] sm:$0xff] %vm576, %v518
      %598 = vst.msk [vmem:[%s208 + $0xa8] sm:$0xff] %vm576, %v523
      %599 = vst.msk [vmem:[%s208 + $0xb0] sm:$0xff] %vm576, %v528
      %600 = vst.msk [vmem:[%s208 + $0xb8] sm:$0xff] %vm576, %v533
      %601 = vst.msk [vmem:[%s208 + $0xc0] sm:$0xff] %vm576, %v538
      %602 = vst.msk [vmem:[%s208 + $0xc8] sm:$0xff] %vm576, %v543
      %603 = vst.msk [vmem:[%s208 + $0xd0] sm:$0xff] %vm576, %v548
      %604 = vst.msk [vmem:[%s208 + $0xd8] sm:$0xff] %vm576, %v553
      %605 = vst.msk [vmem:[%s208 + $0xe0] sm:$0xff] %vm576, %v558
      %606 = vst.msk [vmem:[%s208 + $0xe8] sm:$0xff] %vm576, %v563
      %607 = vst.msk [vmem:[%s208 + $0xf0] sm:$0xff] %vm576, %v568
      %608 = vst.msk [vmem:[%s208 + $0xf8] sm:$0xff] %vm576, %v573
      %s609 = smul.u32 32, %s19
      %p610 = scmp.lt.s32.totalorder %s18, 1
      %s611 = scalar_select %p610, %s18, 1
      %p612 = scmp.lt.s32.totalorder %s609, 31
      %s613 = scalar_select %p612, %s609, 31
      %s614 = smul.addr %s611, 32
      %s615 = sadd.s32 %s613, %s614
      %s616 = smul.addr %s615, 8
      %s617 = scalar_lea.vmem %s3, %s616
      // Predicated region
      $region33: #{mdta_attention.4} parent=31 // pred_check
        %p618 = pneg %p116
      $region34: #{mdta_attention.4} parent=31 // pred_check_branch
        %620 = sbr.rel (%p618) target = $region36
      $region35: #{mdta_attention.4} parent=31 // pred_region
        %s621 = smul.u32 32, %s19
      $region36: #{mdta_attention.4} parent=31 // pred_fallthru
        _
    $region32: #{mdta_attention.4} parent=5 // pred_fallthru
      _
    %p622 = scmp.le.s32.totalorder 2, %s9
    // Predicated region
    $region37: #{mdta_attention.4} parent=5 // pred_check
      %p623 = pneg %p622
    $region38: #{mdta_attention.4} parent=5 // pred_check_branch
      %625 = sbr.rel (%p623) target = $region40
    $region39: #{mdta_attention.4} parent=5 // pred_region
      %s626 = ssub.s32 %s9, 2
      // Predicated region
      $region41: #{mdta_attention.4} parent=39 // pred_check
        %p627 = pneg %p122
      $region42: #{mdta_attention.4} parent=39 // pred_check_branch
        %629 = sbr.rel (%p627) target = $region44
      $region43: #{mdta_attention.4} parent=39 // pred_region
        %s630 = smul.u32 32, %s21
        %p631 = scmp.lt.s32.totalorder %s20, 1
        %s632 = scalar_select %p631, %s20, 1
        %p633 = scmp.lt.s32.totalorder %s630, 31
        %s634 = scalar_select %p633, %s630, 31
        %s635 = smul.addr %s632, 32
        %s636 = sadd.s32 %s634, %s635
        %s637 = smul.addr %s636, 8
        %s638 = scalar_lea.vmem %s3, %s637
      $region44: #{mdta_attention.4} parent=39 // pred_fallthru
        _
    $region40: #{mdta_attention.4} parent=5 // pred_fallthru
      _
  $region6: #{mdta_attention.4} parent=0 // loop_footer
    %s13 = sadd.s32 1, %s9
  $region7: #{mdta_attention.4} parent=0 // loop_footer_branch
    %8 = sbr.rel target = $region3
  $region8: #{mdta_attention.4} parent=0 // loop_exit
    _

// kernel: mdta_attention.7
$region0: #{mdta_attention.7}
  #allocation0 [shape = 'u32[]', space=smem, size = 0x4, offset = 0x4, fixed_abs, tag = 'smem constant byte address 0x4 - core index']
  #allocation1 [shape = 'u32[144,128]{1,0:T(1,128)}', space=vmem, size = 0x12000, scoped, tag = 'internal scratch']
  %s0 = inlined_call_operand.vmem [shape: f32[2,4,256], index: 0, kind: input, shape index: {}]
  %s1 = inlined_call_operand.vmem [shape: f32[4,4], index: 1, kind: input, shape index: {}]
  %s2 = inlined_call_operand.vmem [shape: f32[4,1], index: 2, kind: input, shape index: {}]
  %s3 = inlined_call_operand.vmem [shape: f32[2,4,256], index: 3, kind: output, shape index: {}]
  %s4 = sld [smem:[#allocation0]]
  $region45: #{mdta_attention.7} parent=0
    _
  %s6 = ssub.s32 1, %s4
  %s7 = scalar_select 0, %s6, %s4
  loop: start=0, step=1, limit=4
  $region2: #{mdta_attention.7} parent=0 // loop_pre_header
    _
  $region3: #{mdta_attention.7} parent=0 // loop_header
    %s9 = sphi 0, %s13
    %p10 = scmp.ge.s32.totalorder %s9, 4
    %s16 = sphi 0, %s28
    %s17 = sphi 0, %s24
    %s18 = sphi 0, %s16
    %s19 = sphi 0, %s17
    %s20 = sphi 0, %s18
    %s21 = sphi 0, %s19
    %s33 = sphi 0, %s35
    %s36 = sphi 0, %s33
    %s37 = sphi 0, %s36
    %s53 = sphi 0, %s37
    %s57 = sphi 0, %s57
    %s59 = sphi 0, %s57
    %s60 = sphi 0, %s59
    %s74 = sphi 0, %s60
    %s78 = sphi 0, %s78
    %s80 = sphi 0, %s78
    %s81 = sphi 0, %s80
    %s95 = sphi 0, %s81
    %s103 = sphi 0, %s105
    %s106 = sphi 0, %s103
    %s107 = sphi 0, %s106
    %s123 = sphi 0, %s107
  $region4: #{mdta_attention.7} parent=0 // loop_header_branch
    %12 = sbr.rel (%p10) target = $region8
  $region5: #{mdta_attention.7} parent=0 // loop_body
    %s14 = ssub.s32 %s9, 1
    %s15 = ssub.s32 %s9, 2
    %s22 = sadd.s32 1, %s17
    %p23 = scmp.ge.s32.totalorder %s22, 1
    %s24 = scalar_select %p23, 0, %s22
    %s25 = sadd.s32 1, %s16
    %s26 = scalar_select %p23, %s25, %s16
    %p27 = scmp.ge.s32.totalorder %s26, 2
    %s28 = scalar_select %p27, 0, %s26
    %s29 = ssub.s32 %s16, %s28
    %s30 = ssub.s32 %s17, %s24
    %s31 = sor.u32 %s29, %s30
    %p32 = scmp.eq.s32.totalorder %s31, 0
    %s34 = sadd.s32 %s33, 1
    %s35 = scalar_select %p32, %s33, %s34
    %p38 = pneg %p32
    %p39 = scmp.eq.s32.totalorder %s9, 1
    %p40 = por %p38, %p39
    %p41 = scmp.ne.s32.totalorder %s33, %s36
    %p42 = scmp.eq.s32.totalorder %s9, 0
    %p43 = por %p41, %p42
    %p44 = scmp.ne.s32.totalorder %s33, %s36
    %p45 = scmp.eq.s32.totalorder %s14, 1
    %p46 = por %p44, %p45
    %p47 = scmp.ne.s32.totalorder %s36, %s37
    %p48 = scmp.eq.s32.totalorder %s14, 0
    %p49 = por %p47, %p48
    %p50 = scmp.ne.s32.totalorder %s36, %s37
    %p51 = scmp.eq.s32.totalorder %s15, 1
    %p52 = por %p50, %p51
    %p54 = scmp.ne.s32.totalorder %s37, %s53
    %p55 = scmp.eq.s32.totalorder %s15, 0
    %p56 = por %p54, %p55
    %s58 = sadd.s32 %s57, 1
    %p61 = scmp.eq.s32.totalorder %s9, 1
    %p62 = scmp.ne.s32.totalorder %s57, %s59
    %p63 = scmp.eq.s32.totalorder %s9, 0
    %p64 = por %p62, %p63
    %p65 = scmp.ne.s32.totalorder %s57, %s59
    %p66 = scmp.eq.s32.totalorder %s14, 1
    %p67 = por %p65, %p66
    %p68 = scmp.ne.s32.totalorder %s59, %s60
    %p69 = scmp.eq.s32.totalorder %s14, 0
    %p70 = por %p68, %p69
    %p71 = scmp.ne.s32.totalorder %s59, %s60
    %p72 = scmp.eq.s32.totalorder %s15, 1
    %p73 = por %p71, %p72
    %p75 = scmp.ne.s32.totalorder %s60, %s74
    %p76 = scmp.eq.s32.totalorder %s15, 0
    %p77 = por %p75, %p76
    %s79 = sadd.s32 %s78, 1
    %p82 = scmp.eq.s32.totalorder %s9, 1
    %p83 = scmp.ne.s32.totalorder %s78, %s80
    %p84 = scmp.eq.s32.totalorder %s9, 0
    %p85 = por %p83, %p84
    %p86 = scmp.ne.s32.totalorder %s78, %s80
    %p87 = scmp.eq.s32.totalorder %s14, 1
    %p88 = por %p86, %p87
    %p89 = scmp.ne.s32.totalorder %s80, %s81
    %p90 = scmp.eq.s32.totalorder %s14, 0
    %p91 = por %p89, %p90
    %p92 = scmp.ne.s32.totalorder %s80, %s81
    %p93 = scmp.eq.s32.totalorder %s15, 1
    %p94 = por %p92, %p93
    %p96 = scmp.ne.s32.totalorder %s81, %s95
    %p97 = scmp.eq.s32.totalorder %s15, 0
    %p98 = por %p96, %p97
    %s99 = ssub.s32 %s16, %s28
    %s100 = ssub.s32 %s17, %s24
    %s101 = sor.u32 %s99, %s100
    %p102 = scmp.eq.s32.totalorder %s101, 0
    %s104 = sadd.s32 %s103, 1
    %s105 = scalar_select %p102, %s103, %s104
    %p108 = pneg %p102
    %p109 = scmp.eq.s32.totalorder %s9, 1
    %p110 = por %p108, %p109
    %p111 = scmp.ne.s32.totalorder %s103, %s106
    %p112 = scmp.eq.s32.totalorder %s9, 0
    %p113 = por %p111, %p112
    %p114 = scmp.ne.s32.totalorder %s103, %s106
    %p115 = scmp.eq.s32.totalorder %s14, 1
    %p116 = por %p114, %p115
    %p117 = scmp.ne.s32.totalorder %s106, %s107
    %p118 = scmp.eq.s32.totalorder %s14, 0
    %p119 = por %p117, %p118
    %p120 = scmp.ne.s32.totalorder %s106, %s107
    %p121 = scmp.eq.s32.totalorder %s15, 1
    %p122 = por %p120, %p121
    %p124 = scmp.ne.s32.totalorder %s107, %s123
    %p125 = scmp.eq.s32.totalorder %s15, 0
    %p126 = por %p124, %p125
    %p127 = scmp.le.s32.totalorder 1, %s9
    %p128 = scmp.lt.s32.totalorder %s9, 3
    %p129 = pnand %p127, %p128
    %p130 = pneg %p129
    // Predicated region
    $region9: #{mdta_attention.7} parent=5 // pred_check
      _
    $region10: #{mdta_attention.7} parent=5 // pred_check_branch
      %132 = sbr.rel (%p129) target = $region12
    $region11: #{mdta_attention.7} parent=5 // pred_region
      %s133 = ssub.s32 %s9, 1
      // Predicated region
      $region13: #{mdta_attention.7} parent=11 // pred_check
        %p134 = pneg %p70
      $region14: #{mdta_attention.7} parent=11 // pred_check_branch
        %136 = sbr.rel (%p134) target = $region16
      $region15: #{mdta_attention.7} parent=11 // pred_region
        _
      $region16: #{mdta_attention.7} parent=11 // pred_fallthru
        _
      // Predicated region
      $region17: #{mdta_attention.7} parent=11 // pred_check
        %p137 = pneg %p91
      $region18: #{mdta_attention.7} parent=11 // pred_check_branch
        %139 = sbr.rel (%p137) target = $region20
      $region19: #{mdta_attention.7} parent=11 // pred_region
        _
      $region20: #{mdta_attention.7} parent=11 // pred_fallthru
        _
    $region12: #{mdta_attention.7} parent=5 // pred_fallthru
      _
    %p140 = scmp.lt.s32.totalorder %s9, 2
    // Predicated region
    $region21: #{mdta_attention.7} parent=5 // pred_check
      %p141 = pneg %p140
    $region22: #{mdta_attention.7} parent=5 // pred_check_branch
      %143 = sbr.rel (%p141) target = $region24
    $region23: #{mdta_attention.7} parent=5 // pred_region
      // Predicated region
      $region25: #{mdta_attention.7} parent=23 // pred_check
        %p144 = pneg %p43
      $region26: #{mdta_attention.7} parent=23 // pred_check_branch
        %146 = sbr.rel (%p144) target = $region28
      $region27: #{mdta_attention.7} parent=23 // pred_region
        %s147 = smul.u32 2, %s17
        %p148 = scmp.lt.s32.totalorder %s16, 1
        %s149 = scalar_select %p148, %s16, 1
        %p150 = scmp.lt.s32.totalorder %s147, 1
        %s151 = scalar_select %p150, %s147, 1
        %s152 = smul.addr %s149, 2
        %s153 = sadd.s32 %s151, %s152
        %s154 = smul.addr %s153, 4
        %s155 = scalar_lea.vmem %s0, %s154
        %s156 = smul.u32 2, %s17
      $region28: #{mdta_attention.7} parent=23 // pred_fallthru
        _
    $region24: #{mdta_attention.7} parent=5 // pred_fallthru
      _
    %p157 = scmp.le.s32.totalorder 1, %s9
    %p158 = scmp.lt.s32.totalorder %s9, 3
    %p159 = pnand %p157, %p158
    %p160 = pneg %p159
    // Predicated region
    $region29: #{mdta_attention.7} parent=5 // pred_check
      _
    $region30: #{mdta_attention.7} parent=5 // pred_check_branch
      %162 = sbr.rel (%p159) target = $region32
    $region31: #{mdta_attention.7} parent=5 // pred_region
      %s163 = ssub.s32 %s9, 1
      %s164 = smul.u32 2, %s19
      %p165 = scmp.lt.s32.totalorder %s18, 1
      %s166 = scalar_select %p165, %s18, 1
      %p167 = scmp.lt.s32.totalorder %s164, 1
      %s168 = scalar_select %p167, %s164, 1
      %s169 = smul.addr %s166, 2
      %s170 = sadd.s32 %s168, %s169
      %s171 = smul.addr %s170, 4
      %s172 = scalar_lea.vmem %s0, %s171
      %p173 = pneg %p49
      %p174 = pneg %p46
      %p175 = pneg %p70
      %p176 = pneg %p67
      %p177 = pneg %p91
      %p178 = pneg %p88
      %p179 = pneg %p119
      %p180 = pneg %p116
      %s181 = smul.u32 2, %s19
      %p182 = scmp.lt.s32.totalorder %s18, 1
      %s183 = scalar_select %p182, %s18, 1
      %p184 = scmp.lt.s32.totalorder %s181, 1
      %s185 = scalar_select %p184, %s181, 1
      %s186 = smul.addr %s183, 2
      %s187 = sadd.s32 %s185, %s186
      %s188 = smul.addr %s187, 4
      %s189 = scalar_lea.vmem %s3, %s188
      %s190 = smul.u32 2, %s19
      %p191 = scmp.lt.s32.totalorder %s18, 1
      %s192 = scalar_select %p191, %s18, 1
      %p193 = scmp.lt.s32.totalorder %s190, 1
      %s194 = scalar_select %p193, %s190, 1
      %s195 = smul.addr %s192, 2
      %s196 = sadd.s32 %s194, %s195
      %s197 = smul.addr %s196, 4
      %s198 = scalar_lea.vmem %s0, %s197
      %s199 = smul.u32 2, %s19
      %s200 = smul.u32 2, %s19
      %p201 = scmp.lt.s32.totalorder %s18, 1
      %s202 = scalar_select %p201, %s18, 1
      %p203 = scmp.lt.s32.totalorder %s200, 1
      %s204 = scalar_select %p203, %s200, 1
      %s205 = smul.addr %s202, 2
      %s206 = sadd.s32 %s204, %s205
      %s207 = smul.addr %s206, 4
      %s208 = scalar_lea.vmem %s3, %s207
      %s209 = smul.u32 2, %s19
      %v210 = vld [vmem:[%s198] sm:$0xff]
      %v211 = vld [vmem:[%s1] sm:$0xf]
      %v212 = vld [vmem:[%s2] sm:$0xf]
      %214 = vset.pattern.permute.xlu0 0
      %215 = vperm.xlu0 %214, %v212
      %v216 = vpop.permute.xlu0 %215
      %v219 = vcombine.high %v210, %v210
      %vm220 = vcmask 31744
      %v222 = vsel %vm220, %v211, 0
      %vm224 = vcmask 1043456
      %v225 = vsel %vm224, %v210, 0
      %v227 = vsel %vm224, %v219, 0
      %229 = vmatprep.subr.mxu0 %v227
      %230 = vmatpush1.msra.mxu0 %v225
      %231 = vmatprep.subr.mxu0 0.0
      %232 = vmatpush1.msra.mxu0 0.0
      %233 = vmatprep.subr.mxu0 0.0
      %234 = vmatpush1.msra.mxu0 0.0
      %235 = vmatprep.subr.mxu0 0.0
      %236 = vmatpush1.msra.mxu0 0.0
      %237 = vmatprep.subr.mxu0 0.0
      %238 = vmatpush1.msra.mxu0 0.0
      %239 = vmatprep.subr.mxu0 0.0
      %240 = vmatpush1.msra.mxu0 0.0
      %241 = vmatprep.subr.mxu0 0.0
      %242 = vmatpush1.msra.mxu0 0.0
      %243 = vmatprep.subr.mxu0 0.0
      %244 = vmatpush1.msra.mxu0 0.0
      %245 = vmatprep.subr.mxu0 0.0
      %246 = vmatpush1.msra.mxu0 0.0
      %247 = vmatprep.subr.mxu0 0.0
      %248 = vmatpush1.msra.mxu0 0.0
      %249 = vmatprep.subr.mxu0 0.0
      %250 = vmatpush1.msra.mxu0 0.0
      %251 = vmatprep.subr.mxu0 0.0
      %252 = vmatpush1.msra.mxu0 0.0
      %253 = vmatprep.subr.mxu0 0.0
      %254 = vmatpush1.msra.mxu0 0.0
      %255 = vmatprep.subr.mxu0 0.0
      %256 = vmatpush1.msra.mxu0 0.0
      %257 = vmatprep.subr.mxu0 0.0
      %258 = vmatpush1.msra.mxu0 0.0
      %259 = vmatprep.subr.mxu0 0.0
      %260 = vmatpush1.msra.mxu0 0.0
      %261 = vmatprep.subr.mxu0 0.0
      %262 = vmatpush1.msra.mxu0 0.0
      %263 = vmatprep.subr.mxu0 0.0
      %264 = vmatpush1.msra.mxu0 0.0
      %265 = vmatprep.subr.mxu0 0.0
      %266 = vmatpush1.msra.mxu0 0.0
      %267 = vmatprep.subr.mxu0 0.0
      %268 = vmatpush1.msra.mxu0 0.0
      %269 = vmatprep.subr.mxu0 0.0
      %270 = vmatpush1.msra.mxu0 0.0
      %271 = vmatprep.subr.mxu0 0.0
      %272 = vmatpush1.msra.mxu0 0.0
      %273 = vmatprep.subr.mxu0 0.0
      %274 = vmatpush1.msra.mxu0 0.0
      %275 = vmatprep.subr.mxu0 0.0
      %276 = vmatpush1.msra.mxu0 0.0
      %277 = vmatprep.subr.mxu0 0.0
      %278 = vmatpush1.msra.mxu0 0.0
      %279 = vmatprep.subr.mxu0 0.0
      %280 = vmatpush1.msra.mxu0 0.0
      %281 = vmatprep.subr.mxu0 0.0
      %282 = vmatpush1.msra.mxu0 0.0
      %283 = vmatprep.subr.mxu0 0.0
      %284 = vmatpush1.msra.mxu0 0.0
      %285 = vmatprep.subr.mxu0 0.0
      %286 = vmatpush1.msra.mxu0 0.0
      %287 = vmatprep.subr.mxu0 0.0
      %288 = vmatpush1.msra.mxu0 0.0
      %289 = vmatprep.subr.mxu0 0.0
      %290 = vmatpush1.msra.mxu0 0.0
      %291 = vmatprep.subr.mxu0 0.0
      %292 = vmatpush1.msra.mxu0 0.0
      %293 = vmatprep.mubr.f32.mxu0 0.0
      %294 = vmatmul.mubr.f32.gmra.mrb[0].mxu0 %v222
      %v295 = vpop.f32.mrb[0].mxu0
      %v296 = vadd.f32 %v216, %v295
      %v297 = vpop.f32.mrb[0].mxu0
      %v298 = vadd.f32 %v216, %v297
      %299 = vdwg.mxu0
      %v302 = vcombine.low %v296, %v298
      %304 = vst [vmem:[%s208] sm:$0xff] %v302
      %s305 = smul.u32 2, %s19
      %p306 = scmp.lt.s32.totalorder %s18, 1
      %s307 = scalar_select %p306, %s18, 1
      %p308 = scmp.lt.s32.totalorder %s305, 1
      %s309 = scalar_select %p308, %s305, 1
      %s310 = smul.addr %s307, 2
      %s311 = sadd.s32 %s309, %s310
      %s312 = smul.addr %s311, 4
      %s313 = scalar_lea.vmem %s3, %s312
      // Predicated region
      $region33: #{mdta_attention.7} parent=31 // pred_check
        %p314 = pneg %p116
      $region34: #{mdta_attention.7} parent=31 // pred_check_branch
        %316 = sbr.rel (%p314) target = $region36
      $region35: #{mdta_attention.7} parent=31 // pred_region
        %s317 = smul.u32 2, %s19
      $region36: #{mdta_attention.7} parent=31 // pred_fallthru
        _
    $region32: #{mdta_attention.7} parent=5 // pred_fallthru
      _
    %p318 = scmp.le.s32.totalorder 2, %s9
    // Predicated region
    $region37: #{mdta_attention.7} parent=5 // pred_check
      %p319 = pneg %p318
    $region38: #{mdta_attention.7} parent=5 // pred_check_branch
      %321 = sbr.rel (%p319) target = $region40
    $region39: #{mdta_attention.7} parent=5 // pred_region
      %s322 = ssub.s32 %s9, 2
      // Predicated region
      $region41: #{mdta_attention.7} parent=39 // pred_check
        %p323 = pneg %p122
      $region42: #{mdta_attention.7} parent=39 // pred_check_branch
        %325 = sbr.rel (%p323) target = $region44
      $region43: #{mdta_attention.7} parent=39 // pred_region
        %s326 = smul.u32 2, %s21
        %p327 = scmp.lt.s32.totalorder %s20, 1
        %s328 = scalar_select %p327, %s20, 1
        %p329 = scmp.lt.s32.totalorder %s326, 1
        %s330 = scalar_select %p329, %s326, 1
        %s331 = smul.addr %s328, 2
        %s332 = sadd.s32 %s330, %s331
        %s333 = smul.addr %s332, 4
        %s334 = scalar_lea.vmem %s3, %s333
      $region44: #{mdta_attention.7} parent=39 // pred_fallthru
        _
    $region40: #{mdta_attention.7} parent=5 // pred_fallthru
      _
  $region6: #{mdta_attention.7} parent=0 // loop_footer
    %s13 = sadd.s32 1, %s9
  $region7: #{mdta_attention.7} parent=0 // loop_footer_branch
    %8 = sbr.rel target = $region3
  $region8: #{mdta_attention.7} parent=0 // loop_exit
    _

// kernel: mdta_attention.6
$region0: #{mdta_attention.6}
  #allocation0 [shape = 'u32[]', space=smem, size = 0x4, offset = 0x4, fixed_abs, tag = 'smem constant byte address 0x4 - core index']
  #allocation1 [shape = 'u32[144,128]{1,0:T(1,128)}', space=vmem, size = 0x12000, scoped, tag = 'internal scratch']
  %s0 = inlined_call_operand.vmem [shape: f32[2], index: 0, kind: input, shape index: {}]
  %s1 = inlined_call_operand.vmem [shape: f32[2,2,2,256], index: 1, kind: input, shape index: {}]
  %s2 = inlined_call_operand.vmem [shape: f32[2,2,2,256], index: 2, kind: input, shape index: {}]
  %s3 = inlined_call_operand.vmem [shape: f32[2,2,2,256], index: 3, kind: input, shape index: {}]
  %s4 = inlined_call_operand.vmem [shape: f32[2,2,2,256], index: 4, kind: output, shape index: {}]
  %s5 = sld [smem:[#allocation0]]
  $region53: #{mdta_attention.6} parent=0
    _
  %s7 = ssub.s32 1, %s5
  %s8 = scalar_select 0, %s7, %s5
  $region1: #{mdta_attention.6} parent=0
    #allocation2 [shape = 'u8[512]{0}', space=smem, size = 0x200, scoped, tag = 'input window, operand 0, single buffered']
    #allocation3 [shape = 's32[2]{0}', space=sflag, size = 0x8, scoped, tag = 'scoped memory for mdta_attention.6']
    %9 = vsyncpa [#allocation3], 0
    loop: start=0, step=1, limit=6
    $region2: #{mdta_attention.6} parent=1 // loop_pre_header
      _
    $region3: #{mdta_attention.6} parent=1 // loop_header
      %s11 = sphi 0, %s15
      %p12 = scmp.ge.s32.totalorder %s11, 6
      %s18 = sphi 0, %s30
      %s19 = sphi 0, %s26
      %s20 = sphi 0, %s18
      %s21 = sphi 0, %s19
      %s22 = sphi 0, %s20
      %s23 = sphi 0, %s21
      %s31 = sphi 0, %s31
      %s33 = sphi 0, %s31
      %s34 = sphi 0, %s33
      %s48 = sphi 0, %s34
      %s56 = sphi 0, %s58
      %s59 = sphi 0, %s56
      %s60 = sphi 0, %s59
      %s76 = sphi 0, %s60
      %s84 = sphi 0, %s86
      %s87 = sphi 0, %s84
      %s88 = sphi 0, %s87
      %s104 = sphi 0, %s88
      %s112 = sphi 0, %s114
      %s115 = sphi 0, %s112
      %s116 = sphi 0, %s115
      %s132 = sphi 0, %s116
      %s140 = sphi 0, %s142
      %s143 = sphi 0, %s140
      %s144 = sphi 0, %s143
      %s160 = sphi 0, %s144
    $region4: #{mdta_attention.6} parent=1 // loop_header_branch
      %14 = sbr.rel (%p12) target = $region8
    $region5: #{mdta_attention.6} parent=1 // loop_body
      %s16 = ssub.s32 %s11, 1
      %s17 = ssub.s32 %s11, 2
      %s24 = sadd.s32 1, %s19
      %p25 = scmp.ge.s32.totalorder %s24, 2
      %s26 = scalar_select %p25, 0, %s24
      %s27 = sadd.s32 1, %s18
      %s28 = scalar_select %p25, %s27, %s18
      %p29 = scmp.ge.s32.totalorder %s28, 2
      %s30 = scalar_select %p29, 0, %s28
      %s32 = sadd.s32 %s31, 1
      %p35 = scmp.eq.s32.totalorder %s11, 3
      %p36 = scmp.ne.s32.totalorder %s31, %s33
      %p37 = scmp.eq.s32.totalorder %s11, 0
      %p38 = por %p36, %p37
      %p39 = scmp.ne.s32.totalorder %s31, %s33
      %p40 = scmp.eq.s32.totalorder %s16, 3
      %p41 = por %p39, %p40
      %p42 = scmp.ne.s32.totalorder %s33, %s34
      %p43 = scmp.eq.s32.totalorder %s16, 0
      %p44 = por %p42, %p43
      %p45 = scmp.ne.s32.totalorder %s33, %s34
      %p46 = scmp.eq.s32.totalorder %s17, 3
      %p47 = por %p45, %p46
      %p49 = scmp.ne.s32.totalorder %s34, %s48
      %p50 = scmp.eq.s32.totalorder %s17, 0
      %p51 = por %p49, %p50
      %s52 = ssub.s32 %s18, %s30
      %s53 = ssub.s32 %s19, %s26
      %s54 = sor.u32 %s52, %s53
      %p55 = scmp.eq.s32.totalorder %s54, 0
      %s57 = sadd.s32 %s56, 1
      %s58 = scalar_select %p55, %s56, %s57
      %p61 = pneg %p55
      %p62 = scmp.eq.s32.totalorder %s11, 3
      %p63 = por %p61, %p62
      %p64 = scmp.ne.s32.totalorder %s56, %s59
      %p65 = scmp.eq.s32.totalorder %s11, 0
      %p66 = por %p64, %p65
      %p67 = scmp.ne.s32.totalorder %s56, %s59
      %p68 = scmp.eq.s32.totalorder %s16, 3
      %p69 = por %p67, %p68
      %p70 = scmp.ne.s32.totalorder %s59, %s60
      %p71 = scmp.eq.s32.totalorder %s16, 0
      %p72 = por %p70, %p71
      %p73 = scmp.ne.s32.totalorder %s59, %s60
      %p74 = scmp.eq.s32.totalorder %s17, 3
      %p75 = por %p73, %p74
      %p77 = scmp.ne.s32.totalorder %s60, %s76
      %p78 = scmp.eq.s32.totalorder %s17, 0
      %p79 = por %p77, %p78
      %s80 = ssub.s32 %s18, %s30
      %s81 = ssub.s32 %s19, %s26
      %s82 = sor.u32 %s80, %s81
      %p83 = scmp.eq.s32.totalorder %s82, 0
      %s85 = sadd.s32 %s84, 1
      %s86 = scalar_select %p83, %s84, %s85
      %p89 = pneg %p83
      %p90 = scmp.eq.s32.totalorder %s11, 3
      %p91 = por %p89, %p90
      %p92 = scmp.ne.s32.totalorder %s84, %s87
      %p93 = scmp.eq.s32.totalorder %s11, 0
      %p94 = por %p92, %p93
      %p95 = scmp.ne.s32.totalorder %s84, %s87
      %p96 = scmp.eq.s32.totalorder %s16, 3
      %p97 = por %p95, %p96
      %p98 = scmp.ne.s32.totalorder %s87, %s88
      %p99 = scmp.eq.s32.totalorder %s16, 0
      %p100 = por %p98, %p99
      %p101 = scmp.ne.s32.totalorder %s87, %s88
      %p102 = scmp.eq.s32.totalorder %s17, 3
      %p103 = por %p101, %p102
      %p105 = scmp.ne.s32.totalorder %s88, %s104
      %p106 = scmp.eq.s32.totalorder %s17, 0
      %p107 = por %p105, %p106
      %s108 = ssub.s32 %s18, %s30
      %s109 = ssub.s32 %s19, %s26
      %s110 = sor.u32 %s108, %s109
      %p111 = scmp.eq.s32.totalorder %s110, 0
      %s113 = sadd.s32 %s112, 1
      %s114 = scalar_select %p111, %s112, %s113
      %p117 = pneg %p111
      %p118 = scmp.eq.s32.totalorder %s11, 3
      %p119 = por %p117, %p118
      %p120 = scmp.ne.s32.totalorder %s112, %s115
      %p121 = scmp.eq.s32.totalorder %s11, 0
      %p122 = por %p120, %p121
      %p123 = scmp.ne.s32.totalorder %s112, %s115
      %p124 = scmp.eq.s32.totalorder %s16, 3
      %p125 = por %p123, %p124
      %p126 = scmp.ne.s32.totalorder %s115, %s116
      %p127 = scmp.eq.s32.totalorder %s16, 0
      %p128 = por %p126, %p127
      %p129 = scmp.ne.s32.totalorder %s115, %s116
      %p130 = scmp.eq.s32.totalorder %s17, 3
      %p131 = por %p129, %p130
      %p133 = scmp.ne.s32.totalorder %s116, %s132
      %p134 = scmp.eq.s32.totalorder %s17, 0
      %p135 = por %p133, %p134
      %s136 = ssub.s32 %s18, %s30
      %s137 = ssub.s32 %s19, %s26
      %s138 = sor.u32 %s136, %s137
      %p139 = scmp.eq.s32.totalorder %s138, 0
      %s141 = sadd.s32 %s140, 1
      %s142 = scalar_select %p139, %s140, %s141
      %p145 = pneg %p139
      %p146 = scmp.eq.s32.totalorder %s11, 3
      %p147 = por %p145, %p146
      %p148 = scmp.ne.s32.totalorder %s140, %s143
      %p149 = scmp.eq.s32.totalorder %s11, 0
      %p150 = por %p148, %p149
      %p151 = scmp.ne.s32.totalorder %s140, %s143
      %p152 = scmp.eq.s32.totalorder %s16, 3
      %p153 = por %p151, %p152
      %p154 = scmp.ne.s32.totalorder %s143, %s144
      %p155 = scmp.eq.s32.totalorder %s16, 0
      %p156 = por %p154, %p155
      %p157 = scmp.ne.s32.totalorder %s143, %s144
      %p158 = scmp.eq.s32.totalorder %s17, 3
      %p159 = por %p157, %p158
      %p161 = scmp.ne.s32.totalorder %s144, %s160
      %p162 = scmp.eq.s32.totalorder %s17, 0
      %p163 = por %p161, %p162
      %p164 = scmp.le.s32.totalorder 1, %s11
      %p165 = scmp.lt.s32.totalorder %s11, 5
      %p166 = pnand %p164, %p165
      %p167 = pneg %p166
      // Predicated region
      $region9: #{mdta_attention.6} parent=5 // pred_check
        _
      $region10: #{mdta_attention.6} parent=5 // pred_check_branch
        %169 = sbr.rel (%p166) target = $region12
      $region11: #{mdta_attention.6} parent=5 // pred_region
        %s170 = ssub.s32 %s11, 1
        // Predicated region
        $region13: #{mdta_attention.6} parent=11 // pred_check
          %p171 = pneg %p44
        $region14: #{mdta_attention.6} parent=11 // pred_check_branch
          %173 = sbr.rel (%p171) target = $region16
        $region15: #{mdta_attention.6} parent=11 // pred_region
          %s175 = ssub.s32 16, 16
          %176 = vsyncadd [#allocation3], %s175
          %s178 = sshll.u32 %s0, 4
          %s179 = int_to_ptr.vmem [resolvable:$true] %s178
          %181 = dma.vmem_to_smem %s179, 16, [#allocation2], [#allocation3]
        $region16: #{mdta_attention.6} parent=11 // pred_fallthru
          _
      $region12: #{mdta_attention.6} parent=5 // pred_fallthru
        _
      %p182 = scmp.lt.s32.totalorder %s11, 4
      // Predicated region
      $region17: #{mdta_attention.6} parent=5 // pred_check
        %p183 = pneg %p182
      $region18: #{mdta_attention.6} parent=5 // pred_check_branch
        %185 = sbr.rel (%p183) target = $region20
      $region19: #{mdta_attention.6} parent=5 // pred_region
        // Predicated region
        $region21: #{mdta_attention.6} parent=19 // pred_check
          %p186 = pneg %p66
        $region22: #{mdta_attention.6} parent=19 // pred_check_branch
          %188 = sbr.rel (%p186) target = $region24
        $region23: #{mdta_attention.6} parent=19 // pred_region
          %p189 = scmp.lt.s32.totalorder %s18, 1
          %s190 = scalar_select %p189, %s18, 1
          %p191 = scmp.lt.s32.totalorder %s19, 1
          %s192 = scalar_select %p191, %s19, 1
          %s193 = smul.addr %s192, 2
          %s194 = smul.addr %s190, 4
          %s195 = sadd.s32 %s193, %s194
          %s196 = smul.addr %s195, 2
          %s197 = scalar_lea.vmem %s1, %s196
        $region24: #{mdta_attention.6} parent=19 // pred_fallthru
          _
        // Predicated region
        $region25: #{mdta_attention.6} parent=19 // pred_check
          %p198 = pneg %p94
        $region26: #{mdta_attention.6} parent=19 // pred_check_branch
          %200 = sbr.rel (%p198) target = $region28
        $region27: #{mdta_attention.6} parent=19 // pred_region
          %p201 = scmp.lt.s32.totalorder %s18, 1
          %s202 = scalar_select %p201, %s18, 1
          %p203 = scmp.lt.s32.totalorder %s19, 1
          %s204 = scalar_select %p203, %s19, 1
          %s205 = smul.addr %s204, 2
          %s206 = smul.addr %s202, 4
          %s207 = sadd.s32 %s205, %s206
          %s208 = smul.addr %s207, 2
          %s209 = scalar_lea.vmem %s2, %s208
        $region28: #{mdta_attention.6} parent=19 // pred_fallthru
          _
        // Predicated region
        $region29: #{mdta_attention.6} parent=19 // pred_check
          %p210 = pneg %p122
        $region30: #{mdta_attention.6} parent=19 // pred_check_branch
          %212 = sbr.rel (%p210) target = $region32
        $region31: #{mdta_attention.6} parent=19 // pred_region
          %p213 = scmp.lt.s32.totalorder %s18, 1
          %s214 = scalar_select %p213, %s18, 1
          %p215 = scmp.lt.s32.totalorder %s19, 1
          %s216 = scalar_select %p215, %s19, 1
          %s217 = smul.addr %s216, 2
          %s218 = smul.addr %s214, 4
          %s219 = sadd.s32 %s217, %s218
          %s220 = smul.addr %s219, 2
          %s221 = scalar_lea.vmem %s3, %s220
        $region32: #{mdta_attention.6} parent=19 // pred_fallthru
          _
      $region20: #{mdta_attention.6} parent=5 // pred_fallthru
        _
      %p222 = scmp.le.s32.totalorder 1, %s11
      %p223 = scmp.lt.s32.totalorder %s11, 5
      %p224 = pnand %p222, %p223
      %p225 = pneg %p224
      // Predicated region
      $region33: #{mdta_attention.6} parent=5 // pred_check
        _
      $region34: #{mdta_attention.6} parent=5 // pred_check_branch
        %227 = sbr.rel (%p224) target = $region36
      $region35: #{mdta_attention.6} parent=5 // pred_region
        %s228 = ssub.s32 %s11, 1
        // Predicated region
        $region37: #{mdta_attention.6} parent=35 // pred_check
          %p229 = pneg %p44
        $region38: #{mdta_attention.6} parent=35 // pred_check_branch
          %231 = sbr.rel (%p229) target = $region40
        $region39: #{mdta_attention.6} parent=35 // pred_region
          %232 = dma.done [#allocation3], 16
        $region40: #{mdta_attention.6} parent=35 // pred_fallthru
          _
        %233 = sfence
        %p234 = pneg %p44
        %p235 = pneg %p41
        %p236 = scmp.lt.s32.totalorder %s20, 1
        %s237 = scalar_select %p236, %s20, 1
        %p238 = scmp.lt.s32.totalorder %s21, 1
        %s239 = scalar_select %p238, %s21, 1
        %s240 = smul.addr %s239, 2
        %s241 = smul.addr %s237, 4
        %s242 = sadd.s32 %s240, %s241
        %s243 = smul.addr %s242, 2
        %s244 = scalar_lea.vmem %s1, %s243
        %p245 = pneg %p72
        %p246 = pneg %p69
        %p247 = scmp.lt.s32.totalorder %s20, 1
        %s248 = scalar_select %p247, %s20, 1
        %p249 = scmp.lt.s32.totalorder %s21, 1
        %s250 = scalar_select %p249, %s21, 1
        %s251 = smul.addr %s250, 2
        %s252 = smul.addr %s248, 4
        %s253 = sadd.s32 %s251, %s252
        %s254 = smul.addr %s253, 2
        %s255 = scalar_lea.vmem %s2, %s254
        %p256 = pneg %p100
        %p257 = pneg %p97
        %p258 = scmp.lt.s32.totalorder %s20, 1
        %s259 = scalar_select %p258, %s20, 1
        %p260 = scmp.lt.s32.totalorder %s21, 1
        %s261 = scalar_select %p260, %s21, 1
        %s262 = smul.addr %s261, 2
        %s263 = smul.addr %s259, 4
        %s264 = sadd.s32 %s262, %s263
        %s265 = smul.addr %s264, 2
        %s266 = scalar_lea.vmem %s3, %s265
        %p267 = pneg %p128
        %p268 = pneg %p125
        %p269 = pneg %p156
        %p270 = pneg %p153
        %p271 = scmp.lt.s32.totalorder %s20, 1
        %s272 = scalar_select %p271, %s20, 1
        %p273 = scmp.lt.s32.totalorder %s21, 1
        %s274 = scalar_select %p273, %s21, 1
        %s275 = smul.addr %s274, 2
        %s276 = smul.addr %s272, 4
        %s277 = sadd.s32 %s275, %s276
        %s278 = smul.addr %s277, 2
        %s279 = scalar_lea.vmem %s4, %s278
        %p280 = scmp.lt.s32.totalorder %s20, 1
        %s281 = scalar_select %p280, %s20, 1
        %p282 = scmp.lt.s32.totalorder %s21, 1
        %s283 = scalar_select %p282, %s21, 1
        %s284 = smul.addr %s283, 2
        %s285 = smul.addr %s281, 4
        %s286 = sadd.s32 %s284, %s285
        %s287 = smul.addr %s286, 2
        %s288 = scalar_lea.vmem %s1, %s287
        %p289 = scmp.lt.s32.totalorder %s20, 1
        %s290 = scalar_select %p289, %s20, 1
        %p291 = scmp.lt.s32.totalorder %s21, 1
        %s292 = scalar_select %p291, %s21, 1
        %s293 = smul.addr %s292, 2
        %s294 = smul.addr %s290, 4
        %s295 = sadd.s32 %s293, %s294
        %s296 = smul.addr %s295, 2
        %s297 = scalar_lea.vmem %s2, %s296
        %p298 = scmp.lt.s32.totalorder %s20, 1
        %s299 = scalar_select %p298, %s20, 1
        %p300 = scmp.lt.s32.totalorder %s21, 1
        %s301 = scalar_select %p300, %s21, 1
        %s302 = smul.addr %s301, 2
        %s303 = smul.addr %s299, 4
        %s304 = sadd.s32 %s302, %s303
        %s305 = smul.addr %s304, 2
        %s306 = scalar_lea.vmem %s3, %s305
        %p307 = scmp.lt.s32.totalorder %s20, 1
        %s308 = scalar_select %p307, %s20, 1
        %p309 = scmp.lt.s32.totalorder %s21, 1
        %s310 = scalar_select %p309, %s21, 1
        %s311 = smul.addr %s310, 2
        %s312 = smul.addr %s308, 4
        %s313 = sadd.s32 %s311, %s312
        %s314 = smul.addr %s313, 2
        %s315 = scalar_lea.vmem %s4, %s314
        %v316 = vld [vmem:[%s288] sm:$0xf]
        %v317 = vld [vmem:[%s297] sm:$0xf]
        %v318 = vld [vmem:[%s306] sm:$0xf]
        %v319 = vmul.f32 %v316, %v316
        %v322 = vunpack.c.l.s4 1983009808
        %v323 = vunpack.c.0.s8 %v322
        %v324 = vlaneseq
        %v325 = vshrl.u32 %v324, 7
        %v326 = vsub.s32 %v323, %v325
        %v327 = vrot.slane %v319, %v326
        %v328 = vcombine.high %v327, %v327
        %vm331 = vcmask 1041408
        %v332 = vsel %vm331, %v327, 0.0
        %v333 = vsel %vm331, %v328, 0.0
        %v334 = vadd.f32 %v332, %v333
        %335 = vadd.xlane.f32.xlu0 %v334
        %v336 = vpop.xlane.xlu0 %335
        %v337 = vrsqrt.pop %v336
        %v338 = vmul.f32 %v336, %v337
        %vm339 = vcmp.eq.f32.partialorder %v336, inf
        %v340 = vsel %vm339, %v336, %v338
        %vm341 = vcmp.eq.f32.partialorder %v336, 0.0
        %v342 = vand.u32 %v336, 2147483648
        %v343 = vsel %vm341, %v342, %v340
        %v344 = vmax.f32 %v343, 1e-12
        %v347 = vunpack.c.l.s4 269488144
        %v348 = vunpack.c.0.s8 %v347
        %v349 = vlaneseq
        %v350 = vshrl.u32 %v349, 7
        %v351 = vsub.s32 %v348, %v350
        %v352 = vrot.slane %v344, %v351
        %v354 = vrcp.pop %v352
        %v355 = vmul.f32 %v316, %v354
        %v356 = vmul.f32 %v317, %v317
        %v359 = vunpack.c.l.s4 1983009808
        %v360 = vunpack.c.0.s8 %v359
        %v361 = vlaneseq
        %v362 = vshrl.u32 %v361, 7
        %v363 = vsub.s32 %v360, %v362
        %v364 = vrot.slane %v356, %v363
        %v365 = vcombine.high %v364, %v364
        %v368 = vsel %vm331, %v364, 0.0
        %v369 = vsel %vm331, %v365, 0.0
        %v370 = vadd.f32 %v368, %v369
        %371 = vadd.xlane.f32.xlu0 %v370
        %v372 = vpop.xlane.xlu0 %371
        %v373 = vrsqrt.pop %v372
        %v374 = vmul.f32 %v372, %v373
        %vm375 = vcmp.eq.f32.partialorder %v372, inf
        %v376 = vsel %vm375, %v372, %v374
        %vm377 = vcmp.eq.f32.partialorder %v372, 0.0
        %v378 = vand.u32 %v372, 2147483648
        %v379 = vsel %vm377, %v378, %v376
        %v380 = vmax.f32 %v379, 1e-12
        %v383 = vunpack.c.l.s4 269488144
        %v384 = vunpack.c.0.s8 %v383
        %v385 = vlaneseq
        %v386 = vshrl.u32 %v385, 7
        %v387 = vsub.s32 %v384, %v386
        %v388 = vrot.slane %v380, %v387
        %v390 = vrcp.pop %v388
        %v391 = vmul.f32 %v317, %v390
        %v394 = vunpack.c.l.s4 1983009808
        %v395 = vunpack.c.0.s8 %v394
        %v396 = vlaneseq
        %v397 = vshrl.u32 %v396, 7
        %v398 = vsub.s32 %v395, %v397
        %v399 = vrot.slane %v355, %v398
        %v400 = vcombine.high %v399, %v399
        %v405 = vunpack.c.l.s4 1983009808
        %v406 = vunpack.c.0.s8 %v405
        %v407 = vlaneseq
        %v408 = vshrl.u32 %v407, 7
        %v409 = vsub.s32 %v406, %v408
        %v410 = vrot.slane %v391, %v409
        %v411 = vcombine.high %v410, %v410
        %414 = vmatprep.subr.mxu0 %v411
        %415 = vmatpush1.xpose.msra.mxu0 %v410
        %416 = vmatprep.subr.mxu0 0.0
        %417 = vmatpush1.xpose.msra.mxu0 0.0
        %418 = vmatprep.subr.mxu0 0.0
        %419 = vmatpush1.xpose.msra.mxu0 0.0
        %420 = vmatprep.subr.mxu0 0.0
        %421 = vmatpush1.xpose.msra.mxu0 0.0
        %422 = vmatprep.subr.mxu0 0.0
        %423 = vmatpush1.xpose.msra.mxu0 0.0
        %424 = vmatprep.subr.mxu0 0.0
        %425 = vmatpush1.xpose.msra.mxu0 0.0
        %426 = vmatprep.subr.mxu0 0.0
        %427 = vmatpush1.xpose.msra.mxu0 0.0
        %428 = vmatprep.subr.mxu0 0.0
        %429 = vmatpush1.xpose.msra.mxu0 0.0
        %430 = vmatprep.subr.mxu0 0.0
        %431 = vmatpush1.xpose.msra.mxu0 0.0
        %432 = vmatprep.subr.mxu0 0.0
        %433 = vmatpush1.xpose.msra.mxu0 0.0
        %434 = vmatprep.subr.mxu0 0.0
        %435 = vmatpush1.xpose.msra.mxu0 0.0
        %436 = vmatprep.subr.mxu0 0.0
        %437 = vmatpush1.xpose.msra.mxu0 0.0
        %438 = vmatprep.subr.mxu0 0.0
        %439 = vmatpush1.xpose.msra.mxu0 0.0
        %440 = vmatprep.subr.mxu0 0.0
        %441 = vmatpush1.xpose.msra.mxu0 0.0
        %442 = vmatprep.subr.mxu0 0.0
        %443 = vmatpush1.xpose.msra.mxu0 0.0
        %444 = vmatprep.subr.mxu0 0.0
        %445 = vmatpush1.xpose.msra.mxu0 0.0
        %446 = vmatprep.subr.mxu0 0.0
        %447 = vmatpush1.xpose.msra.mxu0 0.0
        %448 = vmatprep.subr.mxu0 0.0
        %449 = vmatpush1.xpose.msra.mxu0 0.0
        %450 = vmatprep.subr.mxu0 0.0
        %451 = vmatpush1.xpose.msra.mxu0 0.0
        %452 = vmatprep.subr.mxu0 0.0
        %453 = vmatpush1.xpose.msra.mxu0 0.0
        %454 = vmatprep.subr.mxu0 0.0
        %455 = vmatpush1.xpose.msra.mxu0 0.0
        %456 = vmatprep.subr.mxu0 0.0
        %457 = vmatpush1.xpose.msra.mxu0 0.0
        %458 = vmatprep.subr.mxu0 0.0
        %459 = vmatpush1.xpose.msra.mxu0 0.0
        %460 = vmatprep.subr.mxu0 0.0
        %461 = vmatpush1.xpose.msra.mxu0 0.0
        %462 = vmatprep.subr.mxu0 0.0
        %463 = vmatpush1.xpose.msra.mxu0 0.0
        %464 = vmatprep.subr.mxu0 0.0
        %465 = vmatpush1.xpose.msra.mxu0 0.0
        %466 = vmatprep.subr.mxu0 0.0
        %467 = vmatpush1.xpose.msra.mxu0 0.0
        %468 = vmatprep.subr.mxu0 0.0
        %469 = vmatpush1.xpose.msra.mxu0 0.0
        %470 = vmatprep.subr.mxu0 0.0
        %471 = vmatpush1.xpose.msra.mxu0 0.0
        %472 = vmatprep.subr.mxu0 0.0
        %473 = vmatpush1.xpose.msra.mxu0 0.0
        %474 = vmatprep.subr.mxu0 0.0
        %475 = vmatpush1.xpose.msra.mxu0 0.0
        %476 = vmatprep.subr.mxu0 0.0
        %477 = vmatpush1.xpose.msra.mxu0 0.0
        %478 = vmatprep.mubr.f32.mxu0 %v400
        %479 = vmatmul.mubr.f32.gmra.mrb[0].mxu0 %v399
        %v480 = vpop.f32.mrb[0].mxu0
        %v481 = vadd.f32 0.0, %v480
        %v482 = vpop.f32.mrb[0].mxu0
        %483 = vdwg.mxu0
        %s484 = sld [smem:[#allocation2 + %s21]]
        %v485 = vstv %s484
        %v486 = vmul.f32 %v481, %v485
        %vm487 = vcmask 9216
        %v488 = vsel %vm487, %v486, -inf
        %489 = vmax.xlane.f32.xlu0 %v488
        %v490 = vpop.xlane.xlu0 %489
        %v491 = vsub.f32 %v486, %v490
        %v492 = vmul.f32 %v491, 1.442695
        %v493 = vpow.pop %v492
        %v494 = vsel %vm487, %v493, 0.0
        %495 = vadd.xlane.f32.xlu0 %v494
        %v496 = vpop.xlane.xlu0 %495
        %v497 = vrcp.pop %v496
        %v498 = vmul.f32 %v493, %v497
        %v501 = vunpack.c.l.s4 1983009808
        %v502 = vunpack.c.0.s8 %v501
        %v503 = vlaneseq
        %v504 = vshrl.u32 %v503, 7
        %v505 = vsub.s32 %v502, %v504
        %v506 = vrot.slane %v318, %v505
        %v507 = vcombine.high %v506, %v506
        %vm508 = vcmask 15360
        %v510 = vsel %vm508, %v498, 0
        %v512 = vsel %vm331, %v506, 0
        %v514 = vsel %vm331, %v507, 0
        %516 = vmatprep.subr.mxu0 %v514
        %517 = vmatpush1.msra.mxu0 %v512
        %518 = vmatprep.subr.mxu0 0.0
        %519 = vmatpush1.msra.mxu0 0.0
        %520 = vmatprep.subr.mxu0 0.0
        %521 = vmatpush1.msra.mxu0 0.0
        %522 = vmatprep.subr.mxu0 0.0
        %523 = vmatpush1.msra.mxu0 0.0
        %524 = vmatprep.subr.mxu0 0.0
        %525 = vmatpush1.msra.mxu0 0.0
        %526 = vmatprep.subr.mxu0 0.0
        %527 = vmatpush1.msra.mxu0 0.0
        %528 = vmatprep.subr.mxu0 0.0
        %529 = vmatpush1.msra.mxu0 0.0
        %530 = vmatprep.subr.mxu0 0.0
        %531 = vmatpush1.msra.mxu0 0.0
        %532 = vmatprep.subr.mxu0 0.0
        %533 = vmatpush1.msra.mxu0 0.0
        %534 = vmatprep.subr.mxu0 0.0
        %535 = vmatpush1.msra.mxu0 0.0
        %536 = vmatprep.subr.mxu0 0.0
        %537 = vmatpush1.msra.mxu0 0.0
        %538 = vmatprep.subr.mxu0 0.0
        %539 = vmatpush1.msra.mxu0 0.0
        %540 = vmatprep.subr.mxu0 0.0
        %541 = vmatpush1.msra.mxu0 0.0
        %542 = vmatprep.subr.mxu0 0.0
        %543 = vmatpush1.msra.mxu0 0.0
        %544 = vmatprep.subr.mxu0 0.0
        %545 = vmatpush1.msra.mxu0 0.0
        %546 = vmatprep.subr.mxu0 0.0
        %547 = vmatpush1.msra.mxu0 0.0
        %548 = vmatprep.subr.mxu0 0.0
        %549 = vmatpush1.msra.mxu0 0.0
        %550 = vmatprep.subr.mxu0 0.0
        %551 = vmatpush1.msra.mxu0 0.0
        %552 = vmatprep.subr.mxu0 0.0
        %553 = vmatpush1.msra.mxu0 0.0
        %554 = vmatprep.subr.mxu0 0.0
        %555 = vmatpush1.msra.mxu0 0.0
        %556 = vmatprep.subr.mxu0 0.0
        %557 = vmatpush1.msra.mxu0 0.0
        %558 = vmatprep.subr.mxu0 0.0
        %559 = vmatpush1.msra.mxu0 0.0
        %560 = vmatprep.subr.mxu0 0.0
        %561 = vmatpush1.msra.mxu0 0.0
        %562 = vmatprep.subr.mxu0 0.0
        %563 = vmatpush1.msra.mxu0 0.0
        %564 = vmatprep.subr.mxu0 0.0
        %565 = vmatpush1.msra.mxu0 0.0
        %566 = vmatprep.subr.mxu0 0.0
        %567 = vmatpush1.msra.mxu0 0.0
        %568 = vmatprep.subr.mxu0 0.0
        %569 = vmatpush1.msra.mxu0 0.0
        %570 = vmatprep.subr.mxu0 0.0
        %571 = vmatpush1.msra.mxu0 0.0
        %572 = vmatprep.subr.mxu0 0.0
        %573 = vmatpush1.msra.mxu0 0.0
        %574 = vmatprep.subr.mxu0 0.0
        %575 = vmatpush1.msra.mxu0 0.0
        %576 = vmatprep.subr.mxu0 0.0
        %577 = vmatpush1.msra.mxu0 0.0
        %578 = vmatprep.subr.mxu0 0.0
        %579 = vmatpush1.msra.mxu0 0.0
        %580 = vmatprep.mubr.f32.mxu0 0.0
        %581 = vmatmul.mubr.f32.gmra.mrb[0].mxu0 %v510
        %v582 = vpop.f32.mrb[0].mxu0
        %v583 = vadd.f32 0.0, %v582
        %v584 = vpop.f32.mrb[0].mxu0
        %v585 = vadd.f32 0.0, %v584
        %586 = vdwg.mxu0
        %v589 = vcombine.low %v583, %v585
        %v591 = vunpack.c.l.s4 1983009808
        %v592 = vunpack.c.0.s8 %v591
        %v593 = vlaneseq
        %v594 = vshrl.u32 %v593, 7
        %v595 = vsub.s32 %v592, %v594
        %v596 = vrot.slane %v589, %v595
        %598 = vst [vmem:[%s315] sm:$0xf] %v596
        %p599 = scmp.lt.s32.totalorder %s20, 1
        %s600 = scalar_select %p599, %s20, 1
        %p601 = scmp.lt.s32.totalorder %s21, 1
        %s602 = scalar_select %p601, %s21, 1
        %s603 = smul.addr %s602, 2
        %s604 = smul.addr %s600, 4
        %s605 = sadd.s32 %s603, %s604
        %s606 = smul.addr %s605, 2
        %s607 = scalar_lea.vmem %s4, %s606
        // Predicated region
        $region41: #{mdta_attention.6} parent=35 // pred_check
          %p608 = pneg %p153
        $region42: #{mdta_attention.6} parent=35 // pred_check_branch
          %610 = sbr.rel (%p608) target = $region44
        $region43: #{mdta_attention.6} parent=35 // pred_region
          _
        $region44: #{mdta_attention.6} parent=35 // pred_fallthru
          _
      $region36: #{mdta_attention.6} parent=5 // pred_fallthru
        _
      %p611 = scmp.le.s32.totalorder 2, %s11
      // Predicated region
      $region45: #{mdta_attention.6} parent=5 // pred_check
        %p612 = pneg %p611
      $region46: #{mdta_attention.6} parent=5 // pred_check_branch
        %614 = sbr.rel (%p612) target = $region48
      $region47: #{mdta_attention.6} parent=5 // pred_region
        %s615 = ssub.s32 %s11, 2
        // Predicated region
        $region49: #{mdta_attention.6} parent=47 // pred_check
          %p616 = pneg %p159
        $region50: #{mdta_attention.6} parent=47 // pred_check_branch
          %618 = sbr.rel (%p616) target = $region52
        $region51: #{mdta_attention.6} parent=47 // pred_region
          %p619 = scmp.lt.s32.totalorder %s22, 1
          %s620 = scalar_select %p619, %s22, 1
          %p621 = scmp.lt.s32.totalorder %s23, 1
          %s622 = scalar_select %p621, %s23, 1
          %s623 = smul.addr %s622, 2
          %s624 = smul.addr %s620, 4
          %s625 = sadd.s32 %s623, %s624
          %s626 = smul.addr %s625, 2
          %s627 = scalar_lea.vmem %s4, %s626
        $region52: #{mdta_attention.6} parent=47 // pred_fallthru
          _
      $region48: #{mdta_attention.6} parent=5 // pred_fallthru
        _
    $region6: #{mdta_attention.6} parent=1 // loop_footer
      %s15 = sadd.s32 1, %s11
    $region7: #{mdta_attention.6} parent=1 // loop_footer_branch
      %10 = sbr.rel target = $region3
    $region8: #{mdta_attention.6} parent=1 // loop_exit
      _
    %628 = vsyncpa [#allocation3], 1
    %s629 = scalar_lea.sflag [#allocation3], 1
    %630 = vsyncpa %s629, 1

// kernel: mdta_attention.5
$region0: #{mdta_attention.5}
  #allocation0 [shape = 'u32[]', space=smem, size = 0x4, offset = 0x4, fixed_abs, tag = 'smem constant byte address 0x4 - core index']
  #allocation1 [shape = 'u32[144,128]{1,0:T(1,128)}', space=vmem, size = 0x12000, scoped, tag = 'internal scratch']
  %s0 = inlined_call_operand.vmem [shape: f32[2,18,18,12], index: 0, kind: input, shape index: {}]
  %s1 = inlined_call_operand.vmem [shape: f32[9,12], index: 1, kind: input, shape index: {}]
  %s2 = inlined_call_operand.vmem [shape: f32[1,12], index: 2, kind: input, shape index: {}]
  %s3 = inlined_call_operand.vmem [shape: f32[2,16,16,12], index: 3, kind: output, shape index: {}]
  %s4 = sld [smem:[#allocation0]]
  $region45: #{mdta_attention.5} parent=0
    _
  %s6 = ssub.s32 1, %s4
  %s7 = scalar_select 0, %s6, %s4
  loop: start=0, step=1, limit=4
  $region2: #{mdta_attention.5} parent=0 // loop_pre_header
    _
  $region3: #{mdta_attention.5} parent=0 // loop_header
    %s9 = sphi 0, %s13
    %p10 = scmp.ge.s32.totalorder %s9, 4
    %s19 = sphi 0, %s21
    %s22 = sphi 0, %s19
    %s23 = sphi 0, %s22
    %s39 = sphi 0, %s23
    %s43 = sphi 0, %s43
    %s45 = sphi 0, %s43
    %s46 = sphi 0, %s45
    %s60 = sphi 0, %s46
    %s64 = sphi 0, %s64
    %s66 = sphi 0, %s64
    %s67 = sphi 0, %s66
    %s81 = sphi 0, %s67
    %s87 = sphi 0, %s89
    %s90 = sphi 0, %s87
    %s91 = sphi 0, %s90
    %s107 = sphi 0, %s91
  $region4: #{mdta_attention.5} parent=0 // loop_header_branch
    %12 = sbr.rel (%p10) target = $region8
  $region5: #{mdta_attention.5} parent=0 // loop_body
    %s14 = ssub.s32 %s9, 1
    %s15 = ssub.s32 %s9, 2
    %s16 = sadd.s32 %s9, 1
    %s17 = ssub.s32 %s9, %s16
    %p18 = scmp.eq.s32.totalorder %s17, 0
    %s20 = sadd.s32 %s19, 1
    %s21 = scalar_select %p18, %s19, %s20
    %p24 = pneg %p18
    %p25 = scmp.eq.s32.totalorder %s9, 1
    %p26 = por %p24, %p25
    %p27 = scmp.ne.s32.totalorder %s19, %s22
    %p28 = scmp.eq.s32.totalorder %s9, 0
    %p29 = por %p27, %p28
    %p30 = scmp.ne.s32.totalorder %s19, %s22
    %p31 = scmp.eq.s32.totalorder %s14, 1
    %p32 = por %p30, %p31
    %p33 = scmp.ne.s32.totalorder %s22, %s23
    %p34 = scmp.eq.s32.totalorder %s14, 0
    %p35 = por %p33, %p34
    %p36 = scmp.ne.s32.totalorder %s22, %s23
    %p37 = scmp.eq.s32.totalorder %s15, 1
    %p38 = por %p36, %p37
    %p40 = scmp.ne.s32.totalorder %s23, %s39
    %p41 = scmp.eq.s32.totalorder %s15, 0
    %p42 = por %p40, %p41
    %s44 = sadd.s32 %s43, 1
    %p47 = scmp.eq.s32.totalorder %s9, 1
    %p48 = scmp.ne.s32.totalorder %s43, %s45
    %p49 = scmp.eq.s32.totalorder %s9, 0
    %p50 = por %p48, %p49
    %p51 = scmp.ne.s32.totalorder %s43, %s45
    %p52 = scmp.eq.s32.totalorder %s14, 1
    %p53 = por %p51, %p52
    %p54 = scmp.ne.s32.totalorder %s45, %s46
    %p55 = scmp.eq.s32.totalorder %s14, 0
    %p56 = por %p54, %p55
    %p57 = scmp.ne.s32.totalorder %s45, %s46
    %p58 = scmp.eq.s32.totalorder %s15, 1
    %p59 = por %p57, %p58
    %p61 = scmp.ne.s32.totalorder %s46, %s60
    %p62 = scmp.eq.s32.totalorder %s15, 0
    %p63 = por %p61, %p62
    %s65 = sadd.s32 %s64, 1
    %p68 = scmp.eq.s32.totalorder %s9, 1
    %p69 = scmp.ne.s32.totalorder %s64, %s66
    %p70 = scmp.eq.s32.totalorder %s9, 0
    %p71 = por %p69, %p70
    %p72 = scmp.ne.s32.totalorder %s64, %s66
    %p73 = scmp.eq.s32.totalorder %s14, 1
    %p74 = por %p72, %p73
    %p75 = scmp.ne.s32.totalorder %s66, %s67
    %p76 = scmp.eq.s32.totalorder %s14, 0
    %p77 = por %p75, %p76
    %p78 = scmp.ne.s32.totalorder %s66, %s67
    %p79 = scmp.eq.s32.totalorder %s15, 1
    %p80 = por %p78, %p79
    %p82 = scmp.ne.s32.totalorder %s67, %s81
    %p83 = scmp.eq.s32.totalorder %s15, 0
    %p84 = por %p82, %p83
    %s85 = ssub.s32 %s9, %s16
    %p86 = scmp.eq.s32.totalorder %s85, 0
    %s88 = sadd.s32 %s87, 1
    %s89 = scalar_select %p86, %s87, %s88
    %p92 = pneg %p86
    %p93 = scmp.eq.s32.totalorder %s9, 1
    %p94 = por %p92, %p93
    %p95 = scmp.ne.s32.totalorder %s87, %s90
    %p96 = scmp.eq.s32.totalorder %s9, 0
    %p97 = por %p95, %p96
    %p98 = scmp.ne.s32.totalorder %s87, %s90
    %p99 = scmp.eq.s32.totalorder %s14, 1
    %p100 = por %p98, %p99
    %p101 = scmp.ne.s32.totalorder %s90, %s91
    %p102 = scmp.eq.s32.totalorder %s14, 0
    %p103 = por %p101, %p102
    %p104 = scmp.ne.s32.totalorder %s90, %s91
    %p105 = scmp.eq.s32.totalorder %s15, 1
    %p106 = por %p104, %p105
    %p108 = scmp.ne.s32.totalorder %s91, %s107
    %p109 = scmp.eq.s32.totalorder %s15, 0
    %p110 = por %p108, %p109
    %p111 = scmp.le.s32.totalorder 1, %s9
    %p112 = scmp.lt.s32.totalorder %s9, 3
    %p113 = pnand %p111, %p112
    %p114 = pneg %p113
    // Predicated region
    $region9: #{mdta_attention.5} parent=5 // pred_check
      _
    $region10: #{mdta_attention.5} parent=5 // pred_check_branch
      %116 = sbr.rel (%p113) target = $region12
    $region11: #{mdta_attention.5} parent=5 // pred_region
      %s117 = ssub.s32 %s9, 1
      // Predicated region
      $region13: #{mdta_attention.5} parent=11 // pred_check
        %p118 = pneg %p56
      $region14: #{mdta_attention.5} parent=11 // pred_check_branch
        %120 = sbr.rel (%p118) target = $region16
      $region15: #{mdta_attention.5} parent=11 // pred_region
        _
      $region16: #{mdta_attention.5} parent=11 // pred_fallthru
        _
      // Predicated region
      $region17: #{mdta_attention.5} parent=11 // pred_check
        %p121 = pneg %p77
      $region18: #{mdta_attention.5} parent=11 // pred_check_branch
        %123 = sbr.rel (%p121) target = $region20
      $region19: #{mdta_attention.5} parent=11 // pred_region
        _
      $region20: #{mdta_attention.5} parent=11 // pred_fallthru
        _
    $region12: #{mdta_attention.5} parent=5 // pred_fallthru
      _
    %p124 = scmp.lt.s32.totalorder %s9, 2
    // Predicated region
    $region21: #{mdta_attention.5} parent=5 // pred_check
      %p125 = pneg %p124
    $region22: #{mdta_attention.5} parent=5 // pred_check_branch
      %127 = sbr.rel (%p125) target = $region24
    $region23: #{mdta_attention.5} parent=5 // pred_region
      // Predicated region
      $region25: #{mdta_attention.5} parent=23 // pred_check
        %p128 = pneg %p29
      $region26: #{mdta_attention.5} parent=23 // pred_check_branch
        %130 = sbr.rel (%p128) target = $region28
      $region27: #{mdta_attention.5} parent=23 // pred_region
        %p131 = scmp.lt.s32.totalorder %s9, 1
        %s132 = scalar_select %p131, %s9, 1
        %s133 = smul.addr %s132, 54
        %s134 = smul.addr %s133, 8
        %s135 = scalar_lea.vmem %s0, %s134
      $region28: #{mdta_attention.5} parent=23 // pred_fallthru
        _
    $region24: #{mdta_attention.5} parent=5 // pred_fallthru
      _
    %p136 = scmp.le.s32.totalorder 1, %s9
    %p137 = scmp.lt.s32.totalorder %s9, 3
    %p138 = pnand %p136, %p137
    %p139 = pneg %p138
    // Predicated region
    $region29: #{mdta_attention.5} parent=5 // pred_check
      _
    $region30: #{mdta_attention.5} parent=5 // pred_check_branch
      %141 = sbr.rel (%p138) target = $region32
    $region31: #{mdta_attention.5} parent=5 // pred_region
      %s142 = ssub.s32 %s9, 1
      %p143 = scmp.lt.s32.totalorder %s14, 1
      %s144 = scalar_select %p143, %s14, 1
      %s145 = smul.addr %s144, 54
      %s146 = smul.addr %s145, 8
      %s147 = scalar_lea.vmem %s0, %s146
      %p148 = pneg %p35
      %p149 = pneg %p32
      %p150 = pneg %p56
      %p151 = pneg %p53
      %p152 = pneg %p77
      %p153 = pneg %p74
      %p154 = pneg %p103
      %p155 = pneg %p100
      %p156 = scmp.lt.s32.totalorder %s14, 1
      %s157 = scalar_select %p156, %s14, 1
      %s158 = smul.addr %s157, 32
      %s159 = smul.addr %s158, 8
      %s160 = scalar_lea.vmem %s3, %s159
      %p161 = scmp.lt.s32.totalorder %s14, 1
      %s162 = scalar_select %p161, %s14, 1
      %s163 = smul.addr %s162, 54
      %s164 = smul.addr %s163, 8
      %s165 = scalar_lea.vmem %s0, %s164
      %p166 = scmp.lt.s32.totalorder %s14, 1
      %s167 = scalar_select %p166, %s14, 1
      %s168 = smul.addr %s167, 32
      %s169 = smul.addr %s168, 8
      %s170 = scalar_lea.vmem %s3, %s169
      %v171 = vld [vmem:[%s165] sm:$0xff]
      %v172 = vld [vmem:[%s165 + $0x8] sm:$0xff]
      %v173 = vld [vmem:[%s165 + $0x18] sm:$0xff]
      %v174 = vld [vmem:[%s165 + $0x20] sm:$0xff]
      %v175 = vld [vmem:[%s165 + $0x30] sm:$0xff]
      %v176 = vld [vmem:[%s165 + $0x38] sm:$0xff]
      %v177 = vld [vmem:[%s165 + $0x48] sm:$0xff]
      %v178 = vld [vmem:[%s165 + $0x50] sm:$0xff]
      %v179 = vld [vmem:[%s165 + $0x60] sm:$0xff]
      %v180 = vld [vmem:[%s165 + $0x68] sm:$0xff]
      %v181 = vld [vmem:[%s165 + $0x78] sm:$0xff]
      %v182 = vld [vmem:[%s165 + $0x80] sm:$0xff]
      %v183 = vld [vmem:[%s165 + $0x90] sm:$0xff]
      %v184 = vld [vmem:[%s165 + $0x98] sm:$0xff]
      %v185 = vld [vmem:[%s165 + $0xa8] sm:$0xff]
      %v186 = vld [vmem:[%s165 + $0xb0] sm:$0xff]
      %v187 = vld [vmem:[%s165 + $0xc0] sm:$0xff]
      %v188 = vld [vmem:[%s165 + $0xc8] sm:$0xff]
      %v189 = vld [vmem:[%s165 + $0xd8] sm:$0xff]
      %v190 = vld [vmem:[%s165 + $0xe0] sm:$0xff]
      %v191 = vld [vmem:[%s165 + $0xf0] sm:$0xff]
      %v192 = vld [vmem:[%s165 + $0xf8] sm:$0xff]
      %v193 = vld [vmem:[%s165 + $0x108] sm:$0xff]
      %v194 = vld [vmem:[%s165 + $0x110] sm:$0xff]
      %v195 = vld [vmem:[%s165 + $0x120] sm:$0xff]
      %v196 = vld [vmem:[%s165 + $0x128] sm:$0xff]
      %v197 = vld [vmem:[%s165 + $0x138] sm:$0xff]
      %v198 = vld [vmem:[%s165 + $0x140] sm:$0xff]
      %v199 = vld [vmem:[%s165 + $0x150] sm:$0xff]
      %v200 = vld [vmem:[%s165 + $0x158] sm:$0xff]
      %v201 = vld [vmem:[%s165 + $0x168] sm:$0xff]
      %v202 = vld [vmem:[%s165 + $0x170] sm:$0xff]
      %v203 = vld [vmem:[%s1] sm:$0x1]
      %v204 = vlaneseq
      %v205 = vshrl.u32 %v204, 7
      %v206 = vsub.s32 0, %v205
      %v207 = vrot.slane %v203, %v206
      %v208 = vmul.f32 %v171, %v207
      %v209 = vmul.f32 %v172, %v207
      %v210 = vmul.f32 %v173, %v207
      %v211 = vmul.f32 %v174, %v207
      %v212 = vmul.f32 %v175, %v207
      %v213 = vmul.f32 %v176, %v207
      %v214 = vmul.f32 %v177, %v207
      %v215 = vmul.f32 %v178, %v207
      %v216 = vmul.f32 %v179, %v207
      %v217 = vmul.f32 %v180, %v207
      %v218 = vmul.f32 %v181, %v207
      %v219 = vmul.f32 %v182, %v207
      %v220 = vmul.f32 %v183, %v207
      %v221 = vmul.f32 %v184, %v207
      %v222 = vmul.f32 %v185, %v207
      %v223 = vmul.f32 %v186, %v207
      %v224 = vmul.f32 %v187, %v207
      %v225 = vmul.f32 %v188, %v207
      %v226 = vmul.f32 %v189, %v207
      %v227 = vmul.f32 %v190, %v207
      %v228 = vmul.f32 %v191, %v207
      %v229 = vmul.f32 %v192, %v207
      %v230 = vmul.f32 %v193, %v207
      %v231 = vmul.f32 %v194, %v207
      %v232 = vmul.f32 %v195, %v207
      %v233 = vmul.f32 %v196, %v207
      %v234 = vmul.f32 %v197, %v207
      %v235 = vmul.f32 %v198, %v207
      %v236 = vmul.f32 %v199, %v207
      %v237 = vmul.f32 %v200, %v207
      %v238 = vmul.f32 %v201, %v207
      %v239 = vmul.f32 %v202, %v207
      %v240 = vadd.f32 %v208, 0.0
      %v241 = vadd.f32 %v209, 0.0
      %v242 = vadd.f32 %v210, 0.0
      %v243 = vadd.f32 %v211, 0.0
      %v244 = vadd.f32 %v212, 0.0
      %v245 = vadd.f32 %v213, 0.0
      %v246 = vadd.f32 %v214, 0.0
      %v247 = vadd.f32 %v215, 0.0
      %v248 = vadd.f32 %v216, 0.0
      %v249 = vadd.f32 %v217, 0.0
      %v250 = vadd.f32 %v218, 0.0
      %v251 = vadd.f32 %v219, 0.0
      %v252 = vadd.f32 %v220, 0.0
      %v253 = vadd.f32 %v221, 0.0
      %v254 = vadd.f32 %v222, 0.0
      %v255 = vadd.f32 %v223, 0.0
      %v256 = vadd.f32 %v224, 0.0
      %v257 = vadd.f32 %v225, 0.0
      %v258 = vadd.f32 %v226, 0.0
      %v259 = vadd.f32 %v227, 0.0
      %v260 = vadd.f32 %v228, 0.0
      %v261 = vadd.f32 %v229, 0.0
      %v262 = vadd.f32 %v230, 0.0
      %v263 = vadd.f32 %v231, 0.0
      %v264 = vadd.f32 %v232, 0.0
      %v265 = vadd.f32 %v233, 0.0
      %v266 = vadd.f32 %v234, 0.0
      %v267 = vadd.f32 %v235, 0.0
      %v268 = vadd.f32 %v236, 0.0
      %v269 = vadd.f32 %v237, 0.0
      %v270 = vadd.f32 %v238, 0.0
      %v271 = vadd.f32 %v239, 0.0
      %v272 = vld [vmem:[%s165 + $0x1] sm:$0xff]
      %v273 = vld [vmem:[%s165 + $0x9] sm:$0xff]
      %v274 = vld [vmem:[%s165 + $0x19] sm:$0xff]
      %v275 = vld [vmem:[%s165 + $0x21] sm:$0xff]
      %v276 = vld [vmem:[%s165 + $0x31] sm:$0xff]
      %v277 = vld [vmem:[%s165 + $0x39] sm:$0xff]
      %v278 = vld [vmem:[%s165 + $0x49] sm:$0xff]
      %v279 = vld [vmem:[%s165 + $0x51] sm:$0xff]
      %v280 = vld [vmem:[%s165 + $0x61] sm:$0xff]
      %v281 = vld [vmem:[%s165 + $0x69] sm:$0xff]
      %v282 = vld [vmem:[%s165 + $0x79] sm:$0xff]
      %v283 = vld [vmem:[%s165 + $0x81] sm:$0xff]
      %v284 = vld [vmem:[%s165 + $0x91] sm:$0xff]
      %v285 = vld [vmem:[%s165 + $0x99] sm:$0xff]
      %v286 = vld [vmem:[%s165 + $0xa9] sm:$0xff]
      %v287 = vld [vmem:[%s165 + $0xb1] sm:$0xff]
      %v288 = vld [vmem:[%s165 + $0xc1] sm:$0xff]
      %v289 = vld [vmem:[%s165 + $0xc9] sm:$0xff]
      %v290 = vld [vmem:[%s165 + $0xd9] sm:$0xff]
      %v291 = vld [vmem:[%s165 + $0xe1] sm:$0xff]
      %v292 = vld [vmem:[%s165 + $0xf1] sm:$0xff]
      %v293 = vld [vmem:[%s165 + $0xf9] sm:$0xff]
      %v294 = vld [vmem:[%s165 + $0x109] sm:$0xff]
      %v295 = vld [vmem:[%s165 + $0x111] sm:$0xff]
      %v296 = vld [vmem:[%s165 + $0x121] sm:$0xff]
      %v297 = vld [vmem:[%s165 + $0x129] sm:$0xff]
      %v298 = vld [vmem:[%s165 + $0x139] sm:$0xff]
      %v299 = vld [vmem:[%s165 + $0x141] sm:$0xff]
      %v300 = vld [vmem:[%s165 + $0x151] sm:$0xff]
      %v301 = vld [vmem:[%s165 + $0x159] sm:$0xff]
      %v302 = vld [vmem:[%s165 + $0x169] sm:$0xff]
      %v303 = vld [vmem:[%s165 + $0x171] sm:$0xff]
      %v304 = vld [vmem:[%s1 + $0x1] sm:$0x1]
      %v305 = vlaneseq
      %v306 = vshrl.u32 %v305, 7
      %v307 = vsub.s32 0, %v306
      %v308 = vrot.slane %v304, %v307
      %v309 = vmul.f32 %v272, %v308
      %v310 = vmul.f32 %v273, %v308
      %v311 = vmul.f32 %v274, %v308
      %v312 = vmul.f32 %v275, %v308
      %v313 = vmul.f32 %v276, %v308
      %v314 = vmul.f32 %v277, %v308
      %v315 = vmul.f32 %v278, %v308
      %v316 = vmul.f32 %v279, %v308
      %v317 = vmul.f32 %v280, %v308
      %v318 = vmul.f32 %v281, %v308
      %v319 = vmul.f32 %v282, %v308
      %v320 = vmul.f32 %v283, %v308
      %v321 = vmul.f32 %v284, %v308
      %v322 = vmul.f32 %v285, %v308
      %v323 = vmul.f32 %v286, %v308
      %v324 = vmul.f32 %v287, %v308
      %v325 = vmul.f32 %v288, %v308
      %v326 = vmul.f32 %v289, %v308
      %v327 = vmul.f32 %v290, %v308
      %v328 = vmul.f32 %v291, %v308
      %v329 = vmul.f32 %v292, %v308
      %v330 = vmul.f32 %v293, %v308
      %v331 = vmul.f32 %v294, %v308
      %v332 = vmul.f32 %v295, %v308
      %v333 = vmul.f32 %v296, %v308
      %v334 = vmul.f32 %v297, %v308
      %v335 = vmul.f32 %v298, %v308
      %v336 = vmul.f32 %v299, %v308
      %v337 = vmul.f32 %v300, %v308
      %v338 = vmul.f32 %v301, %v308
      %v339 = vmul.f32 %v302, %v308
      %v340 = vmul.f32 %v303, %v308
      %v341 = vadd.f32 %v240, %v309
      %v342 = vadd.f32 %v241, %v310
      %v343 = vadd.f32 %v242, %v311
      %v344 = vadd.f32 %v243, %v312
      %v345 = vadd.f32 %v244, %v313
      %v346 = vadd.f32 %v245, %v314
      %v347 = vadd.f32 %v246, %v315
      %v348 = vadd.f32 %v247, %v316
      %v349 = vadd.f32 %v248, %v317
      %v350 = vadd.f32 %v249, %v318
      %v351 = vadd.f32 %v250, %v319
      %v352 = vadd.f32 %v251, %v320
      %v353 = vadd.f32 %v252, %v321
      %v354 = vadd.f32 %v253, %v322
      %v355 = vadd.f32 %v254, %v323
      %v356 = vadd.f32 %v255, %v324
      %v357 = vadd.f32 %v256, %v325
      %v358 = vadd.f32 %v257, %v326
      %v359 = vadd.f32 %v258, %v327
      %v360 = vadd.f32 %v259, %v328
      %v361 = vadd.f32 %v260, %v329
      %v362 = vadd.f32 %v261, %v330
      %v363 = vadd.f32 %v262, %v331
      %v364 = vadd.f32 %v263, %v332
      %v365 = vadd.f32 %v264, %v333
      %v366 = vadd.f32 %v265, %v334
      %v367 = vadd.f32 %v266, %v335
      %v368 = vadd.f32 %v267, %v336
      %v369 = vadd.f32 %v268, %v337
      %v370 = vadd.f32 %v269, %v338
      %v371 = vadd.f32 %v270, %v339
      %v372 = vadd.f32 %v271, %v340
      %v373 = vld [vmem:[%s165 + $0x2] sm:$0xff]
      %v374 = vld [vmem:[%s165 + $0xa] sm:$0xff]
      %v375 = vld [vmem:[%s165 + $0x1a] sm:$0xff]
      %v376 = vld [vmem:[%s165 + $0x22] sm:$0xff]
      %v377 = vld [vmem:[%s165 + $0x32] sm:$0xff]
      %v378 = vld [vmem:[%s165 + $0x3a] sm:$0xff]
      %v379 = vld [vmem:[%s165 + $0x4a] sm:$0xff]
      %v380 = vld [vmem:[%s165 + $0x52] sm:$0xff]
      %v381 = vld [vmem:[%s165 + $0x62] sm:$0xff]
      %v382 = vld [vmem:[%s165 + $0x6a] sm:$0xff]
      %v383 = vld [vmem:[%s165 + $0x7a] sm:$0xff]
      %v384 = vld [vmem:[%s165 + $0x82] sm:$0xff]
      %v385 = vld [vmem:[%s165 + $0x92] sm:$0xff]
      %v386 = vld [vmem:[%s165 + $0x9a] sm:$0xff]
      %v387 = vld [vmem:[%s165 + $0xaa] sm:$0xff]
      %v388 = vld [vmem:[%s165 + $0xb2] sm:$0xff]
      %v389 = vld [vmem:[%s165 + $0xc2] sm:$0xff]
      %v390 = vld [vmem:[%s165 + $0xca] sm:$0xff]
      %v391 = vld [vmem:[%s165 + $0xda] sm:$0xff]
      %v392 = vld [vmem:[%s165 + $0xe2] sm:$0xff]
      %v393 = vld [vmem:[%s165 + $0xf2] sm:$0xff]
      %v394 = vld [vmem:[%s165 + $0xfa] sm:$0xff]
      %v395 = vld [vmem:[%s165 + $0x10a] sm:$0xff]
      %v396 = vld [vmem:[%s165 + $0x112] sm:$0xff]
      %v397 = vld [vmem:[%s165 + $0x122] sm:$0xff]
      %v398 = vld [vmem:[%s165 + $0x12a] sm:$0xff]
      %v399 = vld [vmem:[%s165 + $0x13a] sm:$0xff]
      %v400 = vld [vmem:[%s165 + $0x142] sm:$0xff]
      %v401 = vld [vmem:[%s165 + $0x152] sm:$0xff]
      %v402 = vld [vmem:[%s165 + $0x15a] sm:$0xff]
      %v403 = vld [vmem:[%s165 + $0x16a] sm:$0xff]
      %v404 = vld [vmem:[%s165 + $0x172] sm:$0xff]
      %v405 = vld [vmem:[%s1 + $0x2] sm:$0x1]
      %v406 = vlaneseq
      %v407 = vshrl.u32 %v406, 7
      %v408 = vsub.s32 0, %v407
      %v409 = vrot.slane %v405, %v408
      %v410 = vmul.f32 %v373, %v409
      %v411 = vmul.f32 %v374, %v409
      %v412 = vmul.f32 %v375, %v409
      %v413 = vmul.f32 %v376, %v409
      %v414 = vmul.f32 %v377, %v409
      %v415 = vmul.f32 %v378, %v409
      %v416 = vmul.f32 %v379, %v409
      %v417 = vmul.f32 %v380, %v409
      %v418 = vmul.f32 %v381, %v409
      %v419 = vmul.f32 %v382, %v409
      %v420 = vmul.f32 %v383, %v409
      %v421 = vmul.f32 %v384, %v409
      %v422 = vmul.f32 %v385, %v409
      %v423 = vmul.f32 %v386, %v409
      %v424 = vmul.f32 %v387, %v409
      %v425 = vmul.f32 %v388, %v409
      %v426 = vmul.f32 %v389, %v409
      %v427 = vmul.f32 %v390, %v409
      %v428 = vmul.f32 %v391, %v409
      %v429 = vmul.f32 %v392, %v409
      %v430 = vmul.f32 %v393, %v409
      %v431 = vmul.f32 %v394, %v409
      %v432 = vmul.f32 %v395, %v409
      %v433 = vmul.f32 %v396, %v409
      %v434 = vmul.f32 %v397, %v409
      %v435 = vmul.f32 %v398, %v409
      %v436 = vmul.f32 %v399, %v409
      %v437 = vmul.f32 %v400, %v409
      %v438 = vmul.f32 %v401, %v409
      %v439 = vmul.f32 %v402, %v409
      %v440 = vmul.f32 %v403, %v409
      %v441 = vmul.f32 %v404, %v409
      %v442 = vadd.f32 %v341, %v410
      %v443 = vadd.f32 %v342, %v411
      %v444 = vadd.f32 %v343, %v412
      %v445 = vadd.f32 %v344, %v413
      %v446 = vadd.f32 %v345, %v414
      %v447 = vadd.f32 %v346, %v415
      %v448 = vadd.f32 %v347, %v416
      %v449 = vadd.f32 %v348, %v417
      %v450 = vadd.f32 %v349, %v418
      %v451 = vadd.f32 %v350, %v419
      %v452 = vadd.f32 %v351, %v420
      %v453 = vadd.f32 %v352, %v421
      %v454 = vadd.f32 %v353, %v422
      %v455 = vadd.f32 %v354, %v423
      %v456 = vadd.f32 %v355, %v424
      %v457 = vadd.f32 %v356, %v425
      %v458 = vadd.f32 %v357, %v426
      %v459 = vadd.f32 %v358, %v427
      %v460 = vadd.f32 %v359, %v428
      %v461 = vadd.f32 %v360, %v429
      %v462 = vadd.f32 %v361, %v430
      %v463 = vadd.f32 %v362, %v431
      %v464 = vadd.f32 %v363, %v432
      %v465 = vadd.f32 %v364, %v433
      %v466 = vadd.f32 %v365, %v434
      %v467 = vadd.f32 %v366, %v435
      %v468 = vadd.f32 %v367, %v436
      %v469 = vadd.f32 %v368, %v437
      %v470 = vadd.f32 %v369, %v438
      %v471 = vadd.f32 %v370, %v439
      %v472 = vadd.f32 %v371, %v440
      %v473 = vadd.f32 %v372, %v441
      %s474 = scalar_lea.vmem %s165, 24
      %v475 = vld [vmem:[%s474] sm:$0xff]
      %v476 = vld [vmem:[%s474 + $0x8] sm:$0xff]
      %v477 = vld [vmem:[%s474 + $0x18] sm:$0xff]
      %v478 = vld [vmem:[%s474 + $0x20] sm:$0xff]
      %v479 = vld [vmem:[%s474 + $0x30] sm:$0xff]
      %v480 = vld [vmem:[%s474 + $0x38] sm:$0xff]
      %v481 = vld [vmem:[%s474 + $0x48] sm:$0xff]
      %v482 = vld [vmem:[%s474 + $0x50] sm:$0xff]
      %v483 = vld [vmem:[%s474 + $0x60] sm:$0xff]
      %v484 = vld [vmem:[%s474 + $0x68] sm:$0xff]
      %v485 = vld [vmem:[%s474 + $0x78] sm:$0xff]
      %v486 = vld [vmem:[%s474 + $0x80] sm:$0xff]
      %v487 = vld [vmem:[%s474 + $0x90] sm:$0xff]
      %v488 = vld [vmem:[%s474 + $0x98] sm:$0xff]
      %v489 = vld [vmem:[%s474 + $0xa8] sm:$0xff]
      %v490 = vld [vmem:[%s474 + $0xb0] sm:$0xff]
      %v491 = vld [vmem:[%s474 + $0xc0] sm:$0xff]
      %v492 = vld [vmem:[%s474 + $0xc8] sm:$0xff]
      %v493 = vld [vmem:[%s474 + $0xd8] sm:$0xff]
      %v494 = vld [vmem:[%s474 + $0xe0] sm:$0xff]
      %v495 = vld [vmem:[%s474 + $0xf0] sm:$0xff]
      %v496 = vld [vmem:[%s474 + $0xf8] sm:$0xff]
      %v497 = vld [vmem:[%s474 + $0x108] sm:$0xff]
      %v498 = vld [vmem:[%s474 + $0x110] sm:$0xff]
      %v499 = vld [vmem:[%s474 + $0x120] sm:$0xff]
      %v500 = vld [vmem:[%s474 + $0x128] sm:$0xff]
      %v501 = vld [vmem:[%s474 + $0x138] sm:$0xff]
      %v502 = vld [vmem:[%s474 + $0x140] sm:$0xff]
      %v503 = vld [vmem:[%s474 + $0x150] sm:$0xff]
      %v504 = vld [vmem:[%s474 + $0x158] sm:$0xff]
      %v505 = vld [vmem:[%s474 + $0x168] sm:$0xff]
      %v506 = vld [vmem:[%s474 + $0x170] sm:$0xff]
      %v507 = vld [vmem:[%s1 + $0x3] sm:$0x1]
      %v508 = vlaneseq
      %v509 = vshrl.u32 %v508, 7
      %v510 = vsub.s32 0, %v509
      %v511 = vrot.slane %v507, %v510
      %v512 = vmul.f32 %v475, %v511
      %v513 = vmul.f32 %v476, %v511
      %v514 = vmul.f32 %v477, %v511
      %v515 = vmul.f32 %v478, %v511
      %v516 = vmul.f32 %v479, %v511
      %v517 = vmul.f32 %v480, %v511
      %v518 = vmul.f32 %v481, %v511
      %v519 = vmul.f32 %v482, %v511
      %v520 = vmul.f32 %v483, %v511
      %v521 = vmul.f32 %v484, %v511
      %v522 = vmul.f32 %v485, %v511
      %v523 = vmul.f32 %v486, %v511
      %v524 = vmul.f32 %v487, %v511
      %v525 = vmul.f32 %v488, %v511
      %v526 = vmul.f32 %v489, %v511
      %v527 = vmul.f32 %v490, %v511
      %v528 = vmul.f32 %v491, %v511
      %v529 = vmul.f32 %v492, %v511
      %v530 = vmul.f32 %v493, %v511
      %v531 = vmul.f32 %v494, %v511
      %v532 = vmul.f32 %v495, %v511
      %v533 = vmul.f32 %v496, %v511
      %v534 = vmul.f32 %v497, %v511
      %v535 = vmul.f32 %v498, %v511
      %v536 = vmul.f32 %v499, %v511
      %v537 = vmul.f32 %v500, %v511
      %v538 = vmul.f32 %v501, %v511
      %v539 = vmul.f32 %v502, %v511
      %v540 = vmul.f32 %v503, %v511
      %v541 = vmul.f32 %v504, %v511
      %v542 = vmul.f32 %v505, %v511
      %v543 = vmul.f32 %v506, %v511
      %v544 = vadd.f32 %v442, %v512
      %v545 = vadd.f32 %v443, %v513
      %v546 = vadd.f32 %v444, %v514
      %v547 = vadd.f32 %v445, %v515
      %v548 = vadd.f32 %v446, %v516
      %v549 = vadd.f32 %v447, %v517
      %v550 = vadd.f32 %v448, %v518
      %v551 = vadd.f32 %v449, %v519
      %v552 = vadd.f32 %v450, %v520
      %v553 = vadd.f32 %v451, %v521
      %v554 = vadd.f32 %v452, %v522
      %v555 = vadd.f32 %v453, %v523
      %v556 = vadd.f32 %v454, %v524
      %v557 = vadd.f32 %v455, %v525
      %v558 = vadd.f32 %v456, %v526
      %v559 = vadd.f32 %v457, %v527
      %v560 = vadd.f32 %v458, %v528
      %v561 = vadd.f32 %v459, %v529
      %v562 = vadd.f32 %v460, %v530
      %v563 = vadd.f32 %v461, %v531
      %v564 = vadd.f32 %v462, %v532
      %v565 = vadd.f32 %v463, %v533
      %v566 = vadd.f32 %v464, %v534
      %v567 = vadd.f32 %v465, %v535
      %v568 = vadd.f32 %v466, %v536
      %v569 = vadd.f32 %v467, %v537
      %v570 = vadd.f32 %v468, %v538
      %v571 = vadd.f32 %v469, %v539
      %v572 = vadd.f32 %v470, %v540
      %v573 = vadd.f32 %v471, %v541
      %v574 = vadd.f32 %v472, %v542
      %v575 = vadd.f32 %v473, %v543
      %v576 = vld [vmem:[%s474 + $0x1] sm:$0xff]
      %v577 = vld [vmem:[%s474 + $0x9] sm:$0xff]
      %v578 = vld [vmem:[%s474 + $0x19] sm:$0xff]
      %v579 = vld [vmem:[%s474 + $0x21] sm:$0xff]
      %v580 = vld [vmem:[%s474 + $0x31] sm:$0xff]
      %v581 = vld [vmem:[%s474 + $0x39] sm:$0xff]
      %v582 = vld [vmem:[%s474 + $0x49] sm:$0xff]
      %v583 = vld [vmem:[%s474 + $0x51] sm:$0xff]
      %v584 = vld [vmem:[%s474 + $0x61] sm:$0xff]
      %v585 = vld [vmem:[%s474 + $0x69] sm:$0xff]
      %v586 = vld [vmem:[%s474 + $0x79] sm:$0xff]
      %v587 = vld [vmem:[%s474 + $0x81] sm:$0xff]
      %v588 = vld [vmem:[%s474 + $0x91] sm:$0xff]
      %v589 = vld [vmem:[%s474 + $0x99] sm:$0xff]
      %v590 = vld [vmem:[%s474 + $0xa9] sm:$0xff]
      %v591 = vld [vmem:[%s474 + $0xb1] sm:$0xff]
      %v592 = vld [vmem:[%s474 + $0xc1] sm:$0xff]
      %v593 = vld [vmem:[%s474 + $0xc9] sm:$0xff]
      %v594 = vld [vmem:[%s474 + $0xd9] sm:$0xff]
      %v595 = vld [vmem:[%s474 + $0xe1] sm:$0xff]
      %v596 = vld [vmem:[%s474 + $0xf1] sm:$0xff]
      %v597 = vld [vmem:[%s474 + $0xf9] sm:$0xff]
      %v598 = vld [vmem:[%s474 + $0x109] sm:$0xff]
      %v599 = vld [vmem:[%s474 + $0x111] sm:$0xff]
      %v600 = vld [vmem:[%s474 + $0x121] sm:$0xff]
      %v601 = vld [vmem:[%s474 + $0x129] sm:$0xff]
      %v602 = vld [vmem:[%s474 + $0x139] sm:$0xff]
      %v603 = vld [vmem:[%s474 + $0x141] sm:$0xff]
      %v604 = vld [vmem:[%s474 + $0x151] sm:$0xff]
      %v605 = vld [vmem:[%s474 + $0x159] sm:$0xff]
      %v606 = vld [vmem:[%s474 + $0x169] sm:$0xff]
      %v607 = vld [vmem:[%s474 + $0x171] sm:$0xff]
      %v608 = vld [vmem:[%s1 + $0x4] sm:$0x1]
      %v609 = vlaneseq
      %v610 = vshrl.u32 %v609, 7
      %v611 = vsub.s32 0, %v610
      %v612 = vrot.slane %v608, %v611
      %v613 = vmul.f32 %v576, %v612
      %v614 = vmul.f32 %v577, %v612
      %v615 = vmul.f32 %v578, %v612
      %v616 = vmul.f32 %v579, %v612
      %v617 = vmul.f32 %v580, %v612
      %v618 = vmul.f32 %v581, %v612
      %v619 = vmul.f32 %v582, %v612
      %v620 = vmul.f32 %v583, %v612
      %v621 = vmul.f32 %v584, %v612
      %v622 = vmul.f32 %v585, %v612
      %v623 = vmul.f32 %v586, %v612
      %v624 = vmul.f32 %v587, %v612
      %v625 = vmul.f32 %v588, %v612
      %v626 = vmul.f32 %v589, %v612
      %v627 = vmul.f32 %v590, %v612
      %v628 = vmul.f32 %v591, %v612
      %v629 = vmul.f32 %v592, %v612
      %v630 = vmul.f32 %v593, %v612
      %v631 = vmul.f32 %v594, %v612
      %v632 = vmul.f32 %v595, %v612
      %v633 = vmul.f32 %v596, %v612
      %v634 = vmul.f32 %v597, %v612
      %v635 = vmul.f32 %v598, %v612
      %v636 = vmul.f32 %v599, %v612
      %v637 = vmul.f32 %v600, %v612
      %v638 = vmul.f32 %v601, %v612
      %v639 = vmul.f32 %v602, %v612
      %v640 = vmul.f32 %v603, %v612
      %v641 = vmul.f32 %v604, %v612
      %v642 = vmul.f32 %v605, %v612
      %v643 = vmul.f32 %v606, %v612
      %v644 = vmul.f32 %v607, %v612
      %v645 = vadd.f32 %v544, %v613
      %v646 = vadd.f32 %v545, %v614
      %v647 = vadd.f32 %v546, %v615
      %v648 = vadd.f32 %v547, %v616
      %v649 = vadd.f32 %v548, %v617
      %v650 = vadd.f32 %v549, %v618
      %v651 = vadd.f32 %v550, %v619
      %v652 = vadd.f32 %v551, %v620
      %v653 = vadd.f32 %v552, %v621
      %v654 = vadd.f32 %v553, %v622
      %v655 = vadd.f32 %v554, %v623
      %v656 = vadd.f32 %v555, %v624
      %v657 = vadd.f32 %v556, %v625
      %v658 = vadd.f32 %v557, %v626
      %v659 = vadd.f32 %v558, %v627
      %v660 = vadd.f32 %v559, %v628
      %v661 = vadd.f32 %v560, %v629
      %v662 = vadd.f32 %v561, %v630
      %v663 = vadd.f32 %v562, %v631
      %v664 = vadd.f32 %v563, %v632
      %v665 = vadd.f32 %v564, %v633
      %v666 = vadd.f32 %v565, %v634
      %v667 = vadd.f32 %v566, %v635
      %v668 = vadd.f32 %v567, %v636
      %v669 = vadd.f32 %v568, %v637
      %v670 = vadd.f32 %v569, %v638
      %v671 = vadd.f32 %v570, %v639
      %v672 = vadd.f32 %v571, %v640
      %v673 = vadd.f32 %v572, %v641
      %v674 = vadd.f32 %v573, %v642
      %v675 = vadd.f32 %v574, %v643
      %v676 = vadd.f32 %v575, %v644
      %v677 = vld [vmem:[%s474 + $0x2] sm:$0xff]
      %v678 = vld [vmem:[%s474 + $0xa] sm:$0xff]
      %v679 = vld [vmem:[%s474 + $0x1a] sm:$0xff]
      %v680 = vld [vmem:[%s474 + $0x22] sm:$0xff]
      %v681 = vld [vmem:[%s474 + $0x32] sm:$0xff]
      %v682 = vld [vmem:[%s474 + $0x3a] sm:$0xff]
      %v683 = vld [vmem:[%s474 + $0x4a] sm:$0xff]
      %v684 = vld [vmem:[%s474 + $0x52] sm:$0xff]
      %v685 = vld [vmem:[%s474 + $0x62] sm:$0xff]
      %v686 = vld [vmem:[%s474 + $0x6a] sm:$0xff]
      %v687 = vld [vmem:[%s474 + $0x7a] sm:$0xff]
      %v688 = vld [vmem:[%s474 + $0x82] sm:$0xff]
      %v689 = vld [vmem:[%s474 + $0x92] sm:$0xff]
      %v690 = vld [vmem:[%s474 + $0x9a] sm:$0xff]
      %v691 = vld [vmem:[%s474 + $0xaa] sm:$0xff]
      %v692 = vld [vmem:[%s474 + $0xb2] sm:$0xff]
      %v693 = vld [vmem:[%s474 + $0xc2] sm:$0xff]
      %v694 = vld [vmem:[%s474 + $0xca] sm:$0xff]
      %v695 = vld [vmem:[%s474 + $0xda] sm:$0xff]
      %v696 = vld [vmem:[%s474 + $0xe2] sm:$0xff]
      %v697 = vld [vmem:[%s474 + $0xf2] sm:$0xff]
      %v698 = vld [vmem:[%s474 + $0xfa] sm:$0xff]
      %v699 = vld [vmem:[%s474 + $0x10a] sm:$0xff]
      %v700 = vld [vmem:[%s474 + $0x112] sm:$0xff]
      %v701 = vld [vmem:[%s474 + $0x122] sm:$0xff]
      %v702 = vld [vmem:[%s474 + $0x12a] sm:$0xff]
      %v703 = vld [vmem:[%s474 + $0x13a] sm:$0xff]
      %v704 = vld [vmem:[%s474 + $0x142] sm:$0xff]
      %v705 = vld [vmem:[%s474 + $0x152] sm:$0xff]
      %v706 = vld [vmem:[%s474 + $0x15a] sm:$0xff]
      %v707 = vld [vmem:[%s474 + $0x16a] sm:$0xff]
      %v708 = vld [vmem:[%s474 + $0x172] sm:$0xff]
      %v709 = vld [vmem:[%s1 + $0x5] sm:$0x1]
      %v710 = vlaneseq
      %v711 = vshrl.u32 %v710, 7
      %v712 = vsub.s32 0, %v711
      %v713 = vrot.slane %v709, %v712
      %v714 = vmul.f32 %v677, %v713
      %v715 = vmul.f32 %v678, %v713
      %v716 = vmul.f32 %v679, %v713
      %v717 = vmul.f32 %v680, %v713
      %v718 = vmul.f32 %v681, %v713
      %v719 = vmul.f32 %v682, %v713
      %v720 = vmul.f32 %v683, %v713
      %v721 = vmul.f32 %v684, %v713
      %v722 = vmul.f32 %v685, %v713
      %v723 = vmul.f32 %v686, %v713
      %v724 = vmul.f32 %v687, %v713
      %v725 = vmul.f32 %v688, %v713
      %v726 = vmul.f32 %v689, %v713
      %v727 = vmul.f32 %v690, %v713
      %v728 = vmul.f32 %v691, %v713
      %v729 = vmul.f32 %v692, %v713
      %v730 = vmul.f32 %v693, %v713
      %v731 = vmul.f32 %v694, %v713
      %v732 = vmul.f32 %v695, %v713
      %v733 = vmul.f32 %v696, %v713
      %v734 = vmul.f32 %v697, %v713
      %v735 = vmul.f32 %v698, %v713
      %v736 = vmul.f32 %v699, %v713
      %v737 = vmul.f32 %v700, %v713
      %v738 = vmul.f32 %v701, %v713
      %v739 = vmul.f32 %v702, %v713
      %v740 = vmul.f32 %v703, %v713
      %v741 = vmul.f32 %v704, %v713
      %v742 = vmul.f32 %v705, %v713
      %v743 = vmul.f32 %v706, %v713
      %v744 = vmul.f32 %v707, %v713
      %v745 = vmul.f32 %v708, %v713
      %v746 = vadd.f32 %v645, %v714
      %v747 = vadd.f32 %v646, %v715
      %v748 = vadd.f32 %v647, %v716
      %v749 = vadd.f32 %v648, %v717
      %v750 = vadd.f32 %v649, %v718
      %v751 = vadd.f32 %v650, %v719
      %v752 = vadd.f32 %v651, %v720
      %v753 = vadd.f32 %v652, %v721
      %v754 = vadd.f32 %v653, %v722
      %v755 = vadd.f32 %v654, %v723
      %v756 = vadd.f32 %v655, %v724
      %v757 = vadd.f32 %v656, %v725
      %v758 = vadd.f32 %v657, %v726
      %v759 = vadd.f32 %v658, %v727
      %v760 = vadd.f32 %v659, %v728
      %v761 = vadd.f32 %v660, %v729
      %v762 = vadd.f32 %v661, %v730
      %v763 = vadd.f32 %v662, %v731
      %v764 = vadd.f32 %v663, %v732
      %v765 = vadd.f32 %v664, %v733
      %v766 = vadd.f32 %v665, %v734
      %v767 = vadd.f32 %v666, %v735
      %v768 = vadd.f32 %v667, %v736
      %v769 = vadd.f32 %v668, %v737
      %v770 = vadd.f32 %v669, %v738
      %v771 = vadd.f32 %v670, %v739
      %v772 = vadd.f32 %v671, %v740
      %v773 = vadd.f32 %v672, %v741
      %v774 = vadd.f32 %v673, %v742
      %v775 = vadd.f32 %v674, %v743
      %v776 = vadd.f32 %v675, %v744
      %v777 = vadd.f32 %v676, %v745
      %s778 = scalar_lea.vmem %s165, 48
      %v779 = vld [vmem:[%s778] sm:$0xff]
      %v780 = vld [vmem:[%s778 + $0x8] sm:$0xff]
      %v781 = vld [vmem:[%s778 + $0x18] sm:$0xff]
      %v782 = vld [vmem:[%s778 + $0x20] sm:$0xff]
      %v783 = vld [vmem:[%s778 + $0x30] sm:$0xff]
      %v784 = vld [vmem:[%s778 + $0x38] sm:$0xff]
      %v785 = vld [vmem:[%s778 + $0x48] sm:$0xff]
      %v786 = vld [vmem:[%s778 + $0x50] sm:$0xff]
      %v787 = vld [vmem:[%s778 + $0x60] sm:$0xff]
      %v788 = vld [vmem:[%s778 + $0x68] sm:$0xff]
      %v789 = vld [vmem:[%s778 + $0x78] sm:$0xff]
      %v790 = vld [vmem:[%s778 + $0x80] sm:$0xff]
      %v791 = vld [vmem:[%s778 + $0x90] sm:$0xff]
      %v792 = vld [vmem:[%s778 + $0x98] sm:$0xff]
      %v793 = vld [vmem:[%s778 + $0xa8] sm:$0xff]
      %v794 = vld [vmem:[%s778 + $0xb0] sm:$0xff]
      %v795 = vld [vmem:[%s778 + $0xc0] sm:$0xff]
      %v796 = vld [vmem:[%s778 + $0xc8] sm:$0xff]
      %v797 = vld [vmem:[%s778 + $0xd8] sm:$0xff]
      %v798 = vld [vmem:[%s778 + $0xe0] sm:$0xff]
      %v799 = vld [vmem:[%s778 + $0xf0] sm:$0xff]
      %v800 = vld [vmem:[%s778 + $0xf8] sm:$0xff]
      %v801 = vld [vmem:[%s778 + $0x108] sm:$0xff]
      %v802 = vld [vmem:[%s778 + $0x110] sm:$0xff]
      %v803 = vld [vmem:[%s778 + $0x120] sm:$0xff]
      %v804 = vld [vmem:[%s778 + $0x128] sm:$0xff]
      %v805 = vld [vmem:[%s778 + $0x138] sm:$0xff]
      %v806 = vld [vmem:[%s778 + $0x140] sm:$0xff]
      %v807 = vld [vmem:[%s778 + $0x150] sm:$0xff]
      %v808 = vld [vmem:[%s778 + $0x158] sm:$0xff]
      %v809 = vld [vmem:[%s778 + $0x168] sm:$0xff]
      %v810 = vld [vmem:[%s778 + $0x170] sm:$0xff]
      %v811 = vld [vmem:[%s1 + $0x6] sm:$0x1]
      %v812 = vlaneseq
      %v813 = vshrl.u32 %v812, 7
      %v814 = vsub.s32 0, %v813
      %v815 = vrot.slane %v811, %v814
      %v816 = vmul.f32 %v779, %v815
      %v817 = vmul.f32 %v780, %v815
      %v818 = vmul.f32 %v781, %v815
      %v819 = vmul.f32 %v782, %v815
      %v820 = vmul.f32 %v783, %v815
      %v821 = vmul.f32 %v784, %v815
      %v822 = vmul.f32 %v785, %v815
      %v823 = vmul.f32 %v786, %v815
      %v824 = vmul.f32 %v787, %v815
      %v825 = vmul.f32 %v788, %v815
      %v826 = vmul.f32 %v789, %v815
      %v827 = vmul.f32 %v790, %v815
      %v828 = vmul.f32 %v791, %v815
      %v829 = vmul.f32 %v792, %v815
      %v830 = vmul.f32 %v793, %v815
      %v831 = vmul.f32 %v794, %v815
      %v832 = vmul.f32 %v795, %v815
      %v833 = vmul.f32 %v796, %v815
      %v834 = vmul.f32 %v797, %v815
      %v835 = vmul.f32 %v798, %v815
      %v836 = vmul.f32 %v799, %v815
      %v837 = vmul.f32 %v800, %v815
      %v838 = vmul.f32 %v801, %v815
      %v839 = vmul.f32 %v802, %v815
      %v840 = vmul.f32 %v803, %v815
      %v841 = vmul.f32 %v804, %v815
      %v842 = vmul.f32 %v805, %v815
      %v843 = vmul.f32 %v806, %v815
      %v844 = vmul.f32 %v807, %v815
      %v845 = vmul.f32 %v808, %v815
      %v846 = vmul.f32 %v809, %v815
      %v847 = vmul.f32 %v810, %v815
      %v848 = vadd.f32 %v746, %v816
      %v849 = vadd.f32 %v747, %v817
      %v850 = vadd.f32 %v748, %v818
      %v851 = vadd.f32 %v749, %v819
      %v852 = vadd.f32 %v750, %v820
      %v853 = vadd.f32 %v751, %v821
      %v854 = vadd.f32 %v752, %v822
      %v855 = vadd.f32 %v753, %v823
      %v856 = vadd.f32 %v754, %v824
      %v857 = vadd.f32 %v755, %v825
      %v858 = vadd.f32 %v756, %v826
      %v859 = vadd.f32 %v757, %v827
      %v860 = vadd.f32 %v758, %v828
      %v861 = vadd.f32 %v759, %v829
      %v862 = vadd.f32 %v760, %v830
      %v863 = vadd.f32 %v761, %v831
      %v864 = vadd.f32 %v762, %v832
      %v865 = vadd.f32 %v763, %v833
      %v866 = vadd.f32 %v764, %v834
      %v867 = vadd.f32 %v765, %v835
      %v868 = vadd.f32 %v766, %v836
      %v869 = vadd.f32 %v767, %v837
      %v870 = vadd.f32 %v768, %v838
      %v871 = vadd.f32 %v769, %v839
      %v872 = vadd.f32 %v770, %v840
      %v873 = vadd.f32 %v771, %v841
      %v874 = vadd.f32 %v772, %v842
      %v875 = vadd.f32 %v773, %v843
      %v876 = vadd.f32 %v774, %v844
      %v877 = vadd.f32 %v775, %v845
      %v878 = vadd.f32 %v776, %v846
      %v879 = vadd.f32 %v777, %v847
      %v880 = vld [vmem:[%s778 + $0x1] sm:$0xff]
      %v881 = vld [vmem:[%s778 + $0x9] sm:$0xff]
      %v882 = vld [vmem:[%s778 + $0x19] sm:$0xff]
      %v883 = vld [vmem:[%s778 + $0x21] sm:$0xff]
      %v884 = vld [vmem:[%s778 + $0x31] sm:$0xff]
      %v885 = vld [vmem:[%s778 + $0x39] sm:$0xff]
      %v886 = vld [vmem:[%s778 + $0x49] sm:$0xff]
      %v887 = vld [vmem:[%s778 + $0x51] sm:$0xff]
      %v888 = vld [vmem:[%s778 + $0x61] sm:$0xff]
      %v889 = vld [vmem:[%s778 + $0x69] sm:$0xff]
      %v890 = vld [vmem:[%s778 + $0x79] sm:$0xff]
      %v891 = vld [vmem:[%s778 + $0x81] sm:$0xff]
      %v892 = vld [vmem:[%s778 + $0x91] sm:$0xff]
      %v893 = vld [vmem:[%s778 + $0x99] sm:$0xff]
      %v894 = vld [vmem:[%s778 + $0xa9] sm:$0xff]
      %v895 = vld [vmem:[%s778 + $0xb1] sm:$0xff]
      %v896 = vld [vmem:[%s778 + $0xc1] sm:$0xff]
      %v897 = vld [vmem:[%s778 + $0xc9] sm:$0xff]
      %v898 = vld [vmem:[%s778 + $0xd9] sm:$0xff]
      %v899 = vld [vmem:[%s778 + $0xe1] sm:$0xff]
      %v900 = vld [vmem:[%s778 + $0xf1] sm:$0xff]
      %v901 = vld [vmem:[%s778 + $0xf9] sm:$0xff]
      %v902 = vld [vmem:[%s778 + $0x109] sm:$0xff]
      %v903 = vld [vmem:[%s778 + $0x111] sm:$0xff]
      %v904 = vld [vmem:[%s778 + $0x121] sm:$0xff]
      %v905 = vld [vmem:[%s778 + $0x129] sm:$0xff]
      %v906 = vld [vmem:[%s778 + $0x139] sm:$0xff]
      %v907 = vld [vmem:[%s778 + $0x141] sm:$0xff]
      %v908 = vld [vmem:[%s778 + $0x151] sm:$0xff]
      %v909 = vld [vmem:[%s778 + $0x159] sm:$0xff]
      %v910 = vld [vmem:[%s778 + $0x169] sm:$0xff]
      %v911 = vld [vmem:[%s778 + $0x171] sm:$0xff]
      %v912 = vld [vmem:[%s1 + $0x7] sm:$0x1]
      %v913 = vlaneseq
      %v914 = vshrl.u32 %v913, 7
      %v915 = vsub.s32 0, %v914
      %v916 = vrot.slane %v912, %v915
      %v917 = vmul.f32 %v880, %v916
      %v918 = vmul.f32 %v881, %v916
      %v919 = vmul.f32 %v882, %v916
      %v920 = vmul.f32 %v883, %v916
      %v921 = vmul.f32 %v884, %v916
      %v922 = vmul.f32 %v885, %v916
      %v923 = vmul.f32 %v886, %v916
      %v924 = vmul.f32 %v887, %v916
      %v925 = vmul.f32 %v888, %v916
      %v926 = vmul.f32 %v889, %v916
      %v927 = vmul.f32 %v890, %v916
      %v928 = vmul.f32 %v891, %v916
      %v929 = vmul.f32 %v892, %v916
      %v930 = vmul.f32 %v893, %v916
      %v931 = vmul.f32 %v894, %v916
      %v932 = vmul.f32 %v895, %v916
      %v933 = vmul.f32 %v896, %v916
      %v934 = vmul.f32 %v897, %v916
      %v935 = vmul.f32 %v898, %v916
      %v936 = vmul.f32 %v899, %v916
      %v937 = vmul.f32 %v900, %v916
      %v938 = vmul.f32 %v901, %v916
      %v939 = vmul.f32 %v902, %v916
      %v940 = vmul.f32 %v903, %v916
      %v941 = vmul.f32 %v904, %v916
      %v942 = vmul.f32 %v905, %v916
      %v943 = vmul.f32 %v906, %v916
      %v944 = vmul.f32 %v907, %v916
      %v945 = vmul.f32 %v908, %v916
      %v946 = vmul.f32 %v909, %v916
      %v947 = vmul.f32 %v910, %v916
      %v948 = vmul.f32 %v911, %v916
      %v949 = vadd.f32 %v848, %v917
      %v950 = vadd.f32 %v849, %v918
      %v951 = vadd.f32 %v850, %v919
      %v952 = vadd.f32 %v851, %v920
      %v953 = vadd.f32 %v852, %v921
      %v954 = vadd.f32 %v853, %v922
      %v955 = vadd.f32 %v854, %v923
      %v956 = vadd.f32 %v855, %v924
      %v957 = vadd.f32 %v856, %v925
      %v958 = vadd.f32 %v857, %v926
      %v959 = vadd.f32 %v858, %v927
      %v960 = vadd.f32 %v859, %v928
      %v961 = vadd.f32 %v860, %v929
      %v962 = vadd.f32 %v861, %v930
      %v963 = vadd.f32 %v862, %v931
      %v964 = vadd.f32 %v863, %v932
      %v965 = vadd.f32 %v864, %v933
      %v966 = vadd.f32 %v865, %v934
      %v967 = vadd.f32 %v866, %v935
      %v968 = vadd.f32 %v867, %v936
      %v969 = vadd.f32 %v868, %v937
      %v970 = vadd.f32 %v869, %v938
      %v971 = vadd.f32 %v870, %v939
      %v972 = vadd.f32 %v871, %v940
      %v973 = vadd.f32 %v872, %v941
      %v974 = vadd.f32 %v873, %v942
      %v975 = vadd.f32 %v874, %v943
      %v976 = vadd.f32 %v875, %v944
      %v977 = vadd.f32 %v876, %v945
      %v978 = vadd.f32 %v877, %v946
      %v979 = vadd.f32 %v878, %v947
      %v980 = vadd.f32 %v879, %v948
      %v981 = vld [vmem:[%s778 + $0x2] sm:$0xff]
      %v982 = vld [vmem:[%s778 + $0xa] sm:$0xff]
      %v983 = vld [vmem:[%s778 + $0x1a] sm:$0xff]
      %v984 = vld [vmem:[%s778 + $0x22] sm:$0xff]
      %v985 = vld [vmem:[%s778 + $0x32] sm:$0xff]
      %v986 = vld [vmem:[%s778 + $0x3a] sm:$0xff]
      %v987 = vld [vmem:[%s778 + $0x4a] sm:$0xff]
      %v988 = vld [vmem:[%s778 + $0x52] sm:$0xff]
      %v989 = vld [vmem:[%s778 + $0x62] sm:$0xff]
      %v990 = vld [vmem:[%s778 + $0x6a] sm:$0xff]
      %v991 = vld [vmem:[%s778 + $0x7a] sm:$0xff]
      %v992 = vld [vmem:[%s778 + $0x82] sm:$0xff]
      %v993 = vld [vmem:[%s778 + $0x92] sm:$0xff]
      %v994 = vld [vmem:[%s778 + $0x9a] sm:$0xff]
      %v995 = vld [vmem:[%s778 + $0xaa] sm:$0xff]
      %v996 = vld [vmem:[%s778 + $0xb2] sm:$0xff]
      %v997 = vld [vmem:[%s778 + $0xc2] sm:$0xff]
      %v998 = vld [vmem:[%s778 + $0xca] sm:$0xff]
      %v999 = vld [vmem:[%s778 + $0xda] sm:$0xff]
      %v1000 = vld [vmem:[%s778 + $0xe2] sm:$0xff]
      %v1001 = vld [vmem:[%s778 + $0xf2] sm:$0xff]
      %v1002 = vld [vmem:[%s778 + $0xfa] sm:$0xff]
      %v1003 = vld [vmem:[%s778 + $0x10a] sm:$0xff]
      %v1004 = vld [vmem:[%s778 + $0x112] sm:$0xff]
      %v1005 = vld [vmem:[%s778 + $0x122] sm:$0xff]
      %v1006 = vld [vmem:[%s778 + $0x12a] sm:$0xff]
      %v1007 = vld [vmem:[%s778 + $0x13a] sm:$0xff]
      %v1008 = vld [vmem:[%s778 + $0x142] sm:$0xff]
      %v1009 = vld [vmem:[%s778 + $0x152] sm:$0xff]
      %v1010 = vld [vmem:[%s778 + $0x15a] sm:$0xff]
      %v1011 = vld [vmem:[%s778 + $0x16a] sm:$0xff]
      %v1012 = vld [vmem:[%s778 + $0x172] sm:$0xff]
      %v1013 = vld [vmem:[%s1 + $0x8] sm:$0x1]
      %v1014 = vlaneseq
      %v1015 = vshrl.u32 %v1014, 7
      %v1016 = vsub.s32 0, %v1015
      %v1017 = vrot.slane %v1013, %v1016
      %v1018 = vmul.f32 %v981, %v1017
      %v1019 = vmul.f32 %v982, %v1017
      %v1020 = vmul.f32 %v983, %v1017
      %v1021 = vmul.f32 %v984, %v1017
      %v1022 = vmul.f32 %v985, %v1017
      %v1023 = vmul.f32 %v986, %v1017
      %v1024 = vmul.f32 %v987, %v1017
      %v1025 = vmul.f32 %v988, %v1017
      %v1026 = vmul.f32 %v989, %v1017
      %v1027 = vmul.f32 %v990, %v1017
      %v1028 = vmul.f32 %v991, %v1017
      %v1029 = vmul.f32 %v992, %v1017
      %v1030 = vmul.f32 %v993, %v1017
      %v1031 = vmul.f32 %v994, %v1017
      %v1032 = vmul.f32 %v995, %v1017
      %v1033 = vmul.f32 %v996, %v1017
      %v1034 = vmul.f32 %v997, %v1017
      %v1035 = vmul.f32 %v998, %v1017
      %v1036 = vmul.f32 %v999, %v1017
      %v1037 = vmul.f32 %v1000, %v1017
      %v1038 = vmul.f32 %v1001, %v1017
      %v1039 = vmul.f32 %v1002, %v1017
      %v1040 = vmul.f32 %v1003, %v1017
      %v1041 = vmul.f32 %v1004, %v1017
      %v1042 = vmul.f32 %v1005, %v1017
      %v1043 = vmul.f32 %v1006, %v1017
      %v1044 = vmul.f32 %v1007, %v1017
      %v1045 = vmul.f32 %v1008, %v1017
      %v1046 = vmul.f32 %v1009, %v1017
      %v1047 = vmul.f32 %v1010, %v1017
      %v1048 = vmul.f32 %v1011, %v1017
      %v1049 = vmul.f32 %v1012, %v1017
      %v1050 = vadd.f32 %v949, %v1018
      %v1051 = vadd.f32 %v950, %v1019
      %v1052 = vadd.f32 %v951, %v1020
      %v1053 = vadd.f32 %v952, %v1021
      %v1054 = vadd.f32 %v953, %v1022
      %v1055 = vadd.f32 %v954, %v1023
      %v1056 = vadd.f32 %v955, %v1024
      %v1057 = vadd.f32 %v956, %v1025
      %v1058 = vadd.f32 %v957, %v1026
      %v1059 = vadd.f32 %v958, %v1027
      %v1060 = vadd.f32 %v959, %v1028
      %v1061 = vadd.f32 %v960, %v1029
      %v1062 = vadd.f32 %v961, %v1030
      %v1063 = vadd.f32 %v962, %v1031
      %v1064 = vadd.f32 %v963, %v1032
      %v1065 = vadd.f32 %v964, %v1033
      %v1066 = vadd.f32 %v965, %v1034
      %v1067 = vadd.f32 %v966, %v1035
      %v1068 = vadd.f32 %v967, %v1036
      %v1069 = vadd.f32 %v968, %v1037
      %v1070 = vadd.f32 %v969, %v1038
      %v1071 = vadd.f32 %v970, %v1039
      %v1072 = vadd.f32 %v971, %v1040
      %v1073 = vadd.f32 %v972, %v1041
      %v1074 = vadd.f32 %v973, %v1042
      %v1075 = vadd.f32 %v974, %v1043
      %v1076 = vadd.f32 %v975, %v1044
      %v1077 = vadd.f32 %v976, %v1045
      %v1078 = vadd.f32 %v977, %v1046
      %v1079 = vadd.f32 %v978, %v1047
      %v1080 = vadd.f32 %v979, %v1048
      %v1081 = vadd.f32 %v980, %v1049
      %v1082 = vld [vmem:[%s2] sm:$0x1]
      %v1084 = vlaneseq
      %v1085 = vshrl.u32 %v1084, 7
      %v1086 = vsub.s32 0, %v1085
      %v1087 = vrot.slane %v1082, %v1086
      %v1089 = vadd.f32 %v1050, %v1087
      %v1090 = vadd.f32 %v1051, %v1087
      %v1091 = vadd.f32 %v1052, %v1087
      %v1092 = vadd.f32 %v1053, %v1087
      %v1093 = vadd.f32 %v1054, %v1087
      %v1094 = vadd.f32 %v1055, %v1087
      %v1095 = vadd.f32 %v1056, %v1087
      %v1096 = vadd.f32 %v1057, %v1087
      %v1097 = vadd.f32 %v1058, %v1087
      %v1098 = vadd.f32 %v1059, %v1087
      %v1099 = vadd.f32 %v1060, %v1087
      %v1100 = vadd.f32 %v1061, %v1087
      %v1101 = vadd.f32 %v1062, %v1087
      %v1102 = vadd.f32 %v1063, %v1087
      %v1103 = vadd.f32 %v1064, %v1087
      %v1104 = vadd.f32 %v1065, %v1087
      %v1105 = vadd.f32 %v1066, %v1087
      %v1106 = vadd.f32 %v1067, %v1087
      %v1107 = vadd.f32 %v1068, %v1087
      %v1108 = vadd.f32 %v1069, %v1087
      %v1109 = vadd.f32 %v1070, %v1087
      %v1110 = vadd.f32 %v1071, %v1087
      %v1111 = vadd.f32 %v1072, %v1087
      %v1112 = vadd.f32 %v1073, %v1087
      %v1113 = vadd.f32 %v1074, %v1087
      %v1114 = vadd.f32 %v1075, %v1087
      %v1115 = vadd.f32 %v1076, %v1087
      %v1116 = vadd.f32 %v1077, %v1087
      %v1117 = vadd.f32 %v1078, %v1087
      %v1118 = vadd.f32 %v1079, %v1087
      %v1119 = vadd.f32 %v1080, %v1087
      %v1120 = vadd.f32 %v1081, %v1087
      %vm1121 = vcmask 97280
      %1122 = vst.msk [vmem:[%s170] sm:$0xff] %vm1121, %v1089
      %1123 = vst.msk [vmem:[%s170 + $0x8] sm:$0xff] %vm1121, %v1090
      %1124 = vst.msk [vmem:[%s170 + $0x10] sm:$0xff] %vm1121, %v1091
      %1125 = vst.msk [vmem:[%s170 + $0x18] sm:$0xff] %vm1121, %v1092
      %1126 = vst.msk [vmem:[%s170 + $0x20] sm:$0xff] %vm1121, %v1093
      %1127 = vst.msk [vmem:[%s170 + $0x28] sm:$0xff] %vm1121, %v1094
      %1128 = vst.msk [vmem:[%s170 + $0x30] sm:$0xff] %vm1121, %v1095
      %1129 = vst.msk [vmem:[%s170 + $0x38] sm:$0xff] %vm1121, %v1096
      %1130 = vst.msk [vmem:[%s170 + $0x40] sm:$0xff] %vm1121, %v1097
      %1131 = vst.msk [vmem:[%s170 + $0x48] sm:$0xff] %vm1121, %v1098
      %1132 = vst.msk [vmem:[%s170 + $0x50] sm:$0xff] %vm1121, %v1099
      %1133 = vst.msk [vmem:[%s170 + $0x58] sm:$0xff] %vm1121, %v1100
      %1134 = vst.msk [vmem:[%s170 + $0x60] sm:$0xff] %vm1121, %v1101
      %1135 = vst.msk [vmem:[%s170 + $0x68] sm:$0xff] %vm1121, %v1102
      %1136 = vst.msk [vmem:[%s170 + $0x70] sm:$0xff] %vm1121, %v1103
      %1137 = vst.msk [vmem:[%s170 + $0x78] sm:$0xff] %vm1121, %v1104
      %1138 = vst.msk [vmem:[%s170 + $0x80] sm:$0xff] %vm1121, %v1105
      %1139 = vst.msk [vmem:[%s170 + $0x88] sm:$0xff] %vm1121, %v1106
      %1140 = vst.msk [vmem:[%s170 + $0x90] sm:$0xff] %vm1121, %v1107
      %1141 = vst.msk [vmem:[%s170 + $0x98] sm:$0xff] %vm1121, %v1108
      %1142 = vst.msk [vmem:[%s170 + $0xa0] sm:$0xff] %vm1121, %v1109
      %1143 = vst.msk [vmem:[%s170 + $0xa8] sm:$0xff] %vm1121, %v1110
      %1144 = vst.msk [vmem:[%s170 + $0xb0] sm:$0xff] %vm1121, %v1111
      %1145 = vst.msk [vmem:[%s170 + $0xb8] sm:$0xff] %vm1121, %v1112
      %1146 = vst.msk [vmem:[%s170 + $0xc0] sm:$0xff] %vm1121, %v1113
      %1147 = vst.msk [vmem:[%s170 + $0xc8] sm:$0xff] %vm1121, %v1114
      %1148 = vst.msk [vmem:[%s170 + $0xd0] sm:$0xff] %vm1121, %v1115
      %1149 = vst.msk [vmem:[%s170 + $0xd8] sm:$0xff] %vm1121, %v1116
      %1150 = vst.msk [vmem:[%s170 + $0xe0] sm:$0xff] %vm1121, %v1117
      %1151 = vst.msk [vmem:[%s170 + $0xe8] sm:$0xff] %vm1121, %v1118
      %1152 = vst.msk [vmem:[%s170 + $0xf0] sm:$0xff] %vm1121, %v1119
      %1153 = vst.msk [vmem:[%s170 + $0xf8] sm:$0xff] %vm1121, %v1120
      %p1154 = scmp.lt.s32.totalorder %s14, 1
      %s1155 = scalar_select %p1154, %s14, 1
      %s1156 = smul.addr %s1155, 32
      %s1157 = smul.addr %s1156, 8
      %s1158 = scalar_lea.vmem %s3, %s1157
      // Predicated region
      $region33: #{mdta_attention.5} parent=31 // pred_check
        %p1159 = pneg %p100
      $region34: #{mdta_attention.5} parent=31 // pred_check_branch
        %1161 = sbr.rel (%p1159) target = $region36
      $region35: #{mdta_attention.5} parent=31 // pred_region
        _
      $region36: #{mdta_attention.5} parent=31 // pred_fallthru
        _
    $region32: #{mdta_attention.5} parent=5 // pred_fallthru
      _
    %p1162 = scmp.le.s32.totalorder 2, %s9
    // Predicated region
    $region37: #{mdta_attention.5} parent=5 // pred_check
      %p1163 = pneg %p1162
    $region38: #{mdta_attention.5} parent=5 // pred_check_branch
      %1165 = sbr.rel (%p1163) target = $region40
    $region39: #{mdta_attention.5} parent=5 // pred_region
      %s1166 = ssub.s32 %s9, 2
      // Predicated region
      $region41: #{mdta_attention.5} parent=39 // pred_check
        %p1167 = pneg %p106
      $region42: #{mdta_attention.5} parent=39 // pred_check_branch
        %1169 = sbr.rel (%p1167) target = $region44
      $region43: #{mdta_attention.5} parent=39 // pred_region
        %p1170 = scmp.lt.s32.totalorder %s15, 1
        %s1171 = scalar_select %p1170, %s15, 1
        %s1172 = smul.addr %s1171, 32
        %s1173 = smul.addr %s1172, 8
        %s1174 = scalar_lea.vmem %s3, %s1173
      $region44: #{mdta_attention.5} parent=39 // pred_fallthru
        _
    $region40: #{mdta_attention.5} parent=5 // pred_fallthru
      _
  $region6: #{mdta_attention.5} parent=0 // loop_footer
    %s13 = sadd.s32 1, %s9
  $region7: #{mdta_attention.5} parent=0 // loop_footer_branch
    %8 = sbr.rel target = $region3
  $region8: #{mdta_attention.5} parent=0 // loop_exit
    _

</llo_original>
